<compile_context>
chip_gen: v7x
topology: tpu7x:2x2x1
jax: 0.10.0
libtpu: 0.0.40
codegen_flags: <defaults>
</compile_context>

<pallas_src>
import functools

import jax
import jax.numpy as jnp
from jax.experimental import pallas as pl
from jax.experimental.pallas import tpu as pltpu


# ---------------------------------------------------------------------------
# In-kernel helper: 3x3 "same" conv in (Cin, pixels) layout via masked rolls.
# ---------------------------------------------------------------------------
def _conv3x3(x, w_taps, tap_masks, *, img_w, n_lanes):
    """3x3 conv, stride 1, zero padding 1, pixels-on-lanes layout.

    x:         (Cin, BP)      f32   pixel q = b*H*W + h*W + w
    w_taps:    (9, Cout, Cin) bf16  tap t = 3*dy + dx
    tap_masks: (9, BP)        f32   0 where tap (dy,dx) reads outside its image
    returns    (Cout, BP)     f32
    """
    acc = None
    for dy in range(3):
        for dx in range(3):
            t = 3 * dy + dx
            s = (dy - 1) * img_w + (dx - 1)       # flat pixel offset of this tap
            if s == 0:
                xs = x                            # centre tap: no shift, mask==1
            else:
                xs = pltpu.roll(x, shift=(-s) % n_lanes, axis=1)  # xs[q]=x[q+s]
                xs = xs * tap_masks[t:t + 1, :]   # zero out-of-image / wrapped reads
            contrib = jnp.dot(w_taps[t], xs.astype(jnp.bfloat16),
                              preferred_element_type=jnp.float32)
            acc = contrib if acc is None else acc + contrib
    return acc


# ---------------------------------------------------------------------------
# Fused VONet kernel: one grid step == B_TILE images
# ---------------------------------------------------------------------------
def _vonet_kernel(x_ref, cmask_ref, tmask_ref,
                  wflow_ref, bflow_ref,
                  w1_ref, b1_ref, w2_ref, b2_ref,
                  wfus_ref, bfus_ref,
                  wpose_ref, bpose_ref,
                  o_ref, *, H, W, B):
    P = H * W
    BP = B * P
    tap_masks = tmask_ref[...]                                       # (9, BP)

    # ---- flowNet: 3x3 conv (6 -> 2) on concat(img0, img1).
    # TODO(synk): FlowNet is not defined in the reference module; a minimal
    # 3x3-conv flow head stands in.
    flow = _conv3x3(x_ref[...], wflow_ref[...], tap_masks,
                    img_w=W, n_lanes=BP) + bflow_ref[...]            # (2, BP)

    # ---- corner branch: corner map proxy restricted to the central box.
    # TODO(synk): cv2.goodFeaturesToTrack has no Pallas/JAX equivalent; an
    # all-ones corner map * central 10%..90% box mask stands in.
    corner_flow = flow * cmask_ref[...]                              # (2, BP)

    # ---- FlowFeatureExtractor (1x1 conv 2->16 ReLU, 1x1 conv 16->32 ReLU),
    # both branches stacked along the lane/pixel axis -> one matmul per layer.
    stacked = jnp.concatenate([flow, corner_flow], axis=1).astype(jnp.bfloat16)
    h = jnp.dot(w1_ref[...], stacked,
                preferred_element_type=jnp.float32) + b1_ref[...]
    h = jnp.maximum(h, 0.0)                                          # (16, 2*BP)
    h = jnp.dot(w2_ref[...], h.astype(jnp.bfloat16),
                preferred_element_type=jnp.float32) + b2_ref[...]
    h = jnp.maximum(h, 0.0)                                          # (32, 2*BP)
    feat = h[:, :BP] + h[:, BP:]                 # FFE(flow) + FFE(corner_flow)

    # ---- fusionFlowCorner: 3x3 conv (32 -> 64) + ReLU.
    fused = jnp.maximum(
        _conv3x3(feat, wfus_ref[...], tap_masks, img_w=W, n_lanes=BP)
        + bfus_ref[...], 0.0)                                        # (64, BP)

    # ---- pose head: per-image GAP FIRST (mean(X)@W == mean(X@W)), then a tiny
    # (8,64)@(64,128) matmul; result stored as one lane-dense (8,128) block.
    # TODO(synk): FlowPoseNet is not defined in the reference module; GAP +
    # linear(64 -> 6) stands in (weights lane-padded to 128 for a dense store).
    cols = [jnp.mean(fused[:, b * P:(b + 1) * P], axis=1, keepdims=True)
            for b in range(B)]                                       # B x (64, 1)
    gap = jnp.concatenate(cols + [jnp.zeros((64, 128 - B), jnp.float32)], axis=1)
    gap = jnp.concatenate([gap, jnp.zeros((64, 128), jnp.float32)], axis=0)
    gap_t = jnp.transpose(gap)[:8, :64]           # (8, 64); rows >= B are zero
    o_ref[...] = (jnp.dot(gap_t, wpose_ref[...],
                          preferred_element_type=jnp.float32) + bpose_ref[...])


# ---------------------------------------------------------------------------
# Parameters, masks & wrapper
# ---------------------------------------------------------------------------
def init_params(key):
    ks = jax.random.split(key, 8)
    scale = 0.1
    return {
        # flowNet stand-in: 3x3 conv, concat(img0,img1) (6ch) -> flow (2ch), HWIO
        "flownet_w": scale * jax.random.normal(ks[0], (3, 3, 6, 2), jnp.float32),
        "flownet_b": jnp.zeros((2,), jnp.float32),
        # FlowFeatureExtractor: Conv2d(2,16,1)+ReLU, Conv2d(16,32,1)+ReLU
        "ffe_w1": scale * jax.random.normal(ks[1], (2, 16), jnp.float32),
        "ffe_b1": 0.01 * jnp.ones((16,), jnp.float32),
        "ffe_w2": scale * jax.random.normal(ks[2], (16, 32), jnp.float32),
        "ffe_b2": 0.01 * jnp.ones((32,), jnp.float32),
        # fusionFlowCorner: Conv2d(32,64,3,1,1)+ReLU, HWIO
        "fusion_w": scale * jax.random.normal(ks[3], (3, 3, 32, 64), jnp.float32),
        "fusion_b": 0.01 * jnp.ones((64,), jnp.float32),
        # pose head stand-in: GAP + linear(64 -> 6)
        "pose_w": scale * jax.random.normal(ks[4], (64, 6), jnp.float32),
        "pose_b": jnp.zeros((6,), jnp.float32),
    }


def _prep_weights(p):
    """Glue-only reshapes/casts into the (Cout, Cin) pixels-on-lanes layout."""
    wflow = jnp.transpose(p["flownet_w"], (0, 1, 3, 2)).reshape(9, 2, 6)
    w1 = jnp.transpose(p["ffe_w1"])                                   # (16, 2)
    w2 = jnp.transpose(p["ffe_w2"])                                   # (32, 16)
    wfus = jnp.transpose(p["fusion_w"], (0, 1, 3, 2)).reshape(9, 64, 32)
    wpose = jnp.zeros((64, 128), jnp.float32).at[:, :6].set(p["pose_w"])
    bpose = jnp.zeros((1, 128), jnp.float32).at[:, :6].set(p["pose_b"][None, :])
    return (wflow.astype(jnp.bfloat16), p["flownet_b"].reshape(2, 1),
            w1.astype(jnp.bfloat16), p["ffe_b1"].reshape(16, 1),
            w2.astype(jnp.bfloat16), p["ffe_b2"].reshape(32, 1),
            wfus.astype(jnp.bfloat16), p["fusion_b"].reshape(64, 1),
            wpose, bpose)


def _make_masks(H, W, B):
    """Static per-pixel masks (depend only on H, W, B) -- computed once."""
    P = H * W
    h_idx = jnp.arange(P, dtype=jnp.int32) // W
    w_idx = jnp.arange(P, dtype=jnp.int32) % W
    # corner-box mask: central 10%..90% region, same for every image
    uh, dh = int(0.1 * H), int(0.9 * H)
    lw, rw = int(0.1 * W), int(0.9 * W)
    box = ((h_idx >= uh) & (h_idx < dh) & (w_idx >= lw) & (w_idx < rw))
    cmask = jnp.tile(box.astype(jnp.float32), (B,)).reshape(1, B * P)
    # per-tap validity masks for the roll-based 3x3 convs
    rows = []
    for dy in range(3):
        for dx in range(3):
            hh = h_idx + dy - 1
            ww = w_idx + dx - 1
            rows.append(((hh >= 0) & (hh < H) &
                         (ww >= 0) & (ww < W)).astype(jnp.float32))
    tmask = jnp.tile(jnp.stack(rows, axis=0), (1, B))                 # (9, B*P)
    return cmask, tmask


def _const_spec(shape):
    return pl.BlockSpec(shape, lambda n, _r=len(shape): (0,) * _r)


def vonet_forward(x0_nchw, x1_nchw, params, b_tile=2):
    N, C, H, W = x0_nchw.shape
    assert C == 3, "expects RGB image pairs"
    assert N % b_tile == 0 and 1 <= b_tile <= 8
    P = H * W
    BP = b_tile * P
    assert BP % 128 == 0, "pixels per grid step must be lane aligned"
    S = N // b_tile

    # Layout plumbing only: NCHW -> (steps, 6, B_TILE*H*W), pixels on lanes.
    x = jnp.concatenate(
        [x0_nchw.reshape(N, C, P), x1_nchw.reshape(N, C, P)], axis=1)  # (N, 6, P)
    x = x.reshape(S, b_tile, 2 * C, P).transpose(0, 2, 1, 3).reshape(S, 2 * C, BP)

    cmask, tmask = _make_masks(H, W, b_tile)
    weights = _prep_weights(params)

    grid_spec = pltpu.PrefetchScalarGridSpec(
        num_scalar_prefetch=0,
        grid=(S,),
        in_specs=[
            pl.BlockSpec((None, 2 * C, BP), lambda n: (n, 0, 0)),      # images
            _const_spec((1, BP)),                                      # corner mask
            _const_spec((9, BP)),                                      # tap masks
            _const_spec((9, 2, 6)), _const_spec((2, 1)),               # flowNet
            _const_spec((16, 2)), _const_spec((16, 1)),                # FFE layer 1
            _const_spec((32, 16)), _const_spec((32, 1)),               # FFE layer 2
            _const_spec((9, 64, 32)), _const_spec((64, 1)),            # fusion conv
            _const_spec((64, 128)), _const_spec((1, 128)),             # pose head
        ],
        out_specs=pl.BlockSpec((None, 8, 128), lambda n: (n, 0, 0)),
    )

    pose_pad = pl.pallas_call(
        functools.partial(_vonet_kernel, H=H, W=W, B=b_tile),
        out_shape=jax.ShapeDtypeStruct((S, 8, 128), jnp.float32),
        grid_spec=grid_spec,
        compiler_params=pltpu.CompilerParams(
            dimension_semantics=("parallel",)),
    )(x, cmask, tmask, *weights)

    # glue: pick the B_TILE real pose rows / 6 real lanes out of each step block
    return pose_pad[:, :b_tile, :6].reshape(N, 6)


if __name__ == "__main__":
    key = jax.random.PRNGKey(0)
    kp, k0, k1 = jax.random.split(key, 3)
    params = init_params(kp)

    N, C, H, W = 4, 3, 16, 16          # 2 grid steps of B_TILE=2 (keeps v7x's 2 TCs busy)
    img0 = jax.random.uniform(k0, (N, C, H, W), jnp.float32)   # x[0]
    img1 = jax.random.uniform(k1, (N, C, H, W), jnp.float32)   # x[1]

    pose = jax.jit(vonet_forward)(img0, img1, params)
    pose = jax.block_until_ready(pose)
    assert pose.shape == (N, 6) and pose.dtype == jnp.float32
    print("KERNEL_OK")
</pallas_src>

<mosaic_0001>
module attributes {stable_mosaic.version = 11 : i64} {
  func.func @_vonet_kernel(%arg0: i32, %arg1: memref<1x6x512xf32, #tpu.memory_space<vmem>>, %arg2: memref<1x512xf32, #tpu.memory_space<vmem>>, %arg3: memref<9x512xf32, #tpu.memory_space<vmem>>, %arg4: memref<9x2x6xbf16, #tpu.memory_space<vmem>>, %arg5: memref<2x1xf32, #tpu.memory_space<vmem>>, %arg6: memref<16x2xbf16, #tpu.memory_space<vmem>>, %arg7: memref<16x1xf32, #tpu.memory_space<vmem>>, %arg8: memref<32x16xbf16, #tpu.memory_space<vmem>>, %arg9: memref<32x1xf32, #tpu.memory_space<vmem>>, %arg10: memref<9x64x32xbf16, #tpu.memory_space<vmem>>, %arg11: memref<64x1xf32, #tpu.memory_space<vmem>>, %arg12: memref<64x128xf32, #tpu.memory_space<vmem>>, %arg13: memref<1x128xf32, #tpu.memory_space<vmem>>, %arg14: memref<1x8x128xf32, #tpu.memory_space<vmem>>) attributes {dimension_semantics = [#tpu.dimension_semantics<parallel>], iteration_bounds = array<i64: 2>, scalar_prefetch = 0 : i64, scratch_operands = 0 : i64, tpu.core_type = #tpu.core_type<tc>, window_params = [{transform_indices = @transform_0, window_bounds = array<i64: 1, 6, 512>}, {pipeline_mode = #tpu.pipeline_mode<synchronous>, transform_indices = @transform_1, window_bounds = array<i64: 1, 512>}, {pipeline_mode = #tpu.pipeline_mode<synchronous>, transform_indices = @transform_2, window_bounds = array<i64: 9, 512>}, {pipeline_mode = #tpu.pipeline_mode<synchronous>, transform_indices = @transform_3, window_bounds = array<i64: 9, 2, 6>}, {pipeline_mode = #tpu.pipeline_mode<synchronous>, transform_indices = @transform_4, window_bounds = array<i64: 2, 1>}, {pipeline_mode = #tpu.pipeline_mode<synchronous>, transform_indices = @transform_5, window_bounds = array<i64: 16, 2>}, {pipeline_mode = #tpu.pipeline_mode<synchronous>, transform_indices = @transform_6, window_bounds = array<i64: 16, 1>}, {pipeline_mode = #tpu.pipeline_mode<synchronous>, transform_indices = @transform_7, window_bounds = array<i64: 32, 16>}, {pipeline_mode = #tpu.pipeline_mode<synchronous>, transform_indices = @transform_8, window_bounds = array<i64: 32, 1>}, {pipeline_mode = #tpu.pipeline_mode<synchronous>, transform_indices = @transform_9, window_bounds = array<i64: 9, 64, 32>}, {pipeline_mode = #tpu.pipeline_mode<synchronous>, transform_indices = @transform_10, window_bounds = array<i64: 64, 1>}, {pipeline_mode = #tpu.pipeline_mode<synchronous>, transform_indices = @transform_11, window_bounds = array<i64: 64, 128>}, {pipeline_mode = #tpu.pipeline_mode<synchronous>, transform_indices = @transform_12, window_bounds = array<i64: 1, 128>}, {transform_indices = @transform_13, window_bounds = array<i64: 1, 8, 128>}]} {
    %c0 = arith.constant 0 : index
    %c0_0 = arith.constant 0 : index
    %0 = vector.load %arg3[%c0, %c0_0] : memref<9x512xf32, #tpu.memory_space<vmem>>, vector<9x512xf32>
    %c0_1 = arith.constant 0 : index
    %c0_2 = arith.constant 0 : index
    %c0_3 = arith.constant 0 : index
    %1 = vector.load %arg1[%c0_1, %c0_2, %c0_3] : memref<1x6x512xf32, #tpu.memory_space<vmem>>, vector<1x6x512xf32>
    %2 = vector.shape_cast %1 : vector<1x6x512xf32> to vector<6x512xf32>
    %c0_4 = arith.constant 0 : index
    %c0_5 = arith.constant 0 : index
    %c0_6 = arith.constant 0 : index
    %3 = vector.load %arg4[%c0_4, %c0_5, %c0_6] : memref<9x2x6xbf16, #tpu.memory_space<vmem>>, vector<9x2x6xbf16>
    %c17_i32 = arith.constant 17 : i32
    %4 = tpu.dynamic_rotate %2 by %c17_i32 dim 1 : vector<6x512xf32>, i32 -> vector<6x512xf32>
    %5 = vector.extract_strided_slice %0 {offsets = [0, 0], sizes = [1, 512], strides = [1, 1]} : vector<9x512xf32> to vector<1x512xf32>
    %6 = vector.broadcast %5 : vector<1x512xf32> to vector<6x512xf32>
    %7 = arith.mulf %4, %6 : vector<6x512xf32>
    %8 = vector.extract_strided_slice %3 {offsets = [0, 0, 0], sizes = [1, 2, 6], strides = [1, 1, 1]} : vector<9x2x6xbf16> to vector<1x2x6xbf16>
    %9 = vector.shape_cast %8 : vector<1x2x6xbf16> to vector<2x6xbf16>
    %10 = arith.truncf %7 : vector<6x512xf32> to vector<6x512xbf16>
    %cst = arith.constant dense<0.000000e+00> : vector<2x512xf32>
    %11 = tpu.matmul %9, %10, %cst {dimension_numbers = #tpu.dot_dimension_numbers<[1], [0], [0], [1], [0, 0, 1, 1], [], []>} : vector<2x6xbf16>, vector<6x512xbf16>, vector<2x512xf32> -> vector<2x512xf32>
    %c16_i32 = arith.constant 16 : i32
    %12 = tpu.dynamic_rotate %2 by %c16_i32 dim 1 : vector<6x512xf32>, i32 -> vector<6x512xf32>
    %13 = vector.extract_strided_slice %0 {offsets = [1, 0], sizes = [1, 512], strides = [1, 1]} : vector<9x512xf32> to vector<1x512xf32>
    %14 = vector.broadcast %13 : vector<1x512xf32> to vector<6x512xf32>
    %15 = arith.mulf %12, %14 : vector<6x512xf32>
    %16 = vector.extract_strided_slice %3 {offsets = [1, 0, 0], sizes = [1, 2, 6], strides = [1, 1, 1]} : vector<9x2x6xbf16> to vector<1x2x6xbf16>
    %17 = vector.shape_cast %16 : vector<1x2x6xbf16> to vector<2x6xbf16>
    %18 = arith.truncf %15 : vector<6x512xf32> to vector<6x512xbf16>
    %cst_7 = arith.constant dense<0.000000e+00> : vector<2x512xf32>
    %19 = tpu.matmul %17, %18, %cst_7 {dimension_numbers = #tpu.dot_dimension_numbers<[1], [0], [0], [1], [0, 0, 1, 1], [], []>} : vector<2x6xbf16>, vector<6x512xbf16>, vector<2x512xf32> -> vector<2x512xf32>
    %20 = arith.addf %11, %19 : vector<2x512xf32>
    %c15_i32 = arith.constant 15 : i32
    %21 = tpu.dynamic_rotate %2 by %c15_i32 dim 1 : vector<6x512xf32>, i32 -> vector<6x512xf32>
    %22 = vector.extract_strided_slice %0 {offsets = [2, 0], sizes = [1, 512], strides = [1, 1]} : vector<9x512xf32> to vector<1x512xf32>
    %23 = vector.broadcast %22 : vector<1x512xf32> to vector<6x512xf32>
    %24 = arith.mulf %21, %23 : vector<6x512xf32>
    %25 = vector.extract_strided_slice %3 {offsets = [2, 0, 0], sizes = [1, 2, 6], strides = [1, 1, 1]} : vector<9x2x6xbf16> to vector<1x2x6xbf16>
    %26 = vector.shape_cast %25 : vector<1x2x6xbf16> to vector<2x6xbf16>
    %27 = arith.truncf %24 : vector<6x512xf32> to vector<6x512xbf16>
    %cst_8 = arith.constant dense<0.000000e+00> : vector<2x512xf32>
    %28 = tpu.matmul %26, %27, %cst_8 {dimension_numbers = #tpu.dot_dimension_numbers<[1], [0], [0], [1], [0, 0, 1, 1], [], []>} : vector<2x6xbf16>, vector<6x512xbf16>, vector<2x512xf32> -> vector<2x512xf32>
    %29 = arith.addf %20, %28 : vector<2x512xf32>
    %c1_i32 = arith.constant 1 : i32
    %30 = tpu.dynamic_rotate %2 by %c1_i32 dim 1 : vector<6x512xf32>, i32 -> vector<6x512xf32>
    %31 = vector.extract_strided_slice %0 {offsets = [3, 0], sizes = [1, 512], strides = [1, 1]} : vector<9x512xf32> to vector<1x512xf32>
    %32 = vector.broadcast %31 : vector<1x512xf32> to vector<6x512xf32>
    %33 = arith.mulf %30, %32 : vector<6x512xf32>
    %34 = vector.extract_strided_slice %3 {offsets = [3, 0, 0], sizes = [1, 2, 6], strides = [1, 1, 1]} : vector<9x2x6xbf16> to vector<1x2x6xbf16>
    %35 = vector.shape_cast %34 : vector<1x2x6xbf16> to vector<2x6xbf16>
    %36 = arith.truncf %33 : vector<6x512xf32> to vector<6x512xbf16>
    %cst_9 = arith.constant dense<0.000000e+00> : vector<2x512xf32>
    %37 = tpu.matmul %35, %36, %cst_9 {dimension_numbers = #tpu.dot_dimension_numbers<[1], [0], [0], [1], [0, 0, 1, 1], [], []>} : vector<2x6xbf16>, vector<6x512xbf16>, vector<2x512xf32> -> vector<2x512xf32>
    %38 = arith.addf %29, %37 : vector<2x512xf32>
    %39 = vector.extract_strided_slice %3 {offsets = [4, 0, 0], sizes = [1, 2, 6], strides = [1, 1, 1]} : vector<9x2x6xbf16> to vector<1x2x6xbf16>
    %40 = vector.shape_cast %39 : vector<1x2x6xbf16> to vector<2x6xbf16>
    %41 = arith.truncf %2 : vector<6x512xf32> to vector<6x512xbf16>
    %cst_10 = arith.constant dense<0.000000e+00> : vector<2x512xf32>
    %42 = tpu.matmul %40, %41, %cst_10 {dimension_numbers = #tpu.dot_dimension_numbers<[1], [0], [0], [1], [0, 0, 1, 1], [], []>} : vector<2x6xbf16>, vector<6x512xbf16>, vector<2x512xf32> -> vector<2x512xf32>
    %43 = arith.addf %38, %42 : vector<2x512xf32>
    %c511_i32 = arith.constant 511 : i32
    %44 = tpu.dynamic_rotate %2 by %c511_i32 dim 1 : vector<6x512xf32>, i32 -> vector<6x512xf32>
    %45 = vector.extract_strided_slice %0 {offsets = [5, 0], sizes = [1, 512], strides = [1, 1]} : vector<9x512xf32> to vector<1x512xf32>
    %46 = vector.broadcast %45 : vector<1x512xf32> to vector<6x512xf32>
    %47 = arith.mulf %44, %46 : vector<6x512xf32>
    %48 = vector.extract_strided_slice %3 {offsets = [5, 0, 0], sizes = [1, 2, 6], strides = [1, 1, 1]} : vector<9x2x6xbf16> to vector<1x2x6xbf16>
    %49 = vector.shape_cast %48 : vector<1x2x6xbf16> to vector<2x6xbf16>
    %50 = arith.truncf %47 : vector<6x512xf32> to vector<6x512xbf16>
    %cst_11 = arith.constant dense<0.000000e+00> : vector<2x512xf32>
    %51 = tpu.matmul %49, %50, %cst_11 {dimension_numbers = #tpu.dot_dimension_numbers<[1], [0], [0], [1], [0, 0, 1, 1], [], []>} : vector<2x6xbf16>, vector<6x512xbf16>, vector<2x512xf32> -> vector<2x512xf32>
    %52 = arith.addf %43, %51 : vector<2x512xf32>
    %c497_i32 = arith.constant 497 : i32
    %53 = tpu.dynamic_rotate %2 by %c497_i32 dim 1 : vector<6x512xf32>, i32 -> vector<6x512xf32>
    %54 = vector.extract_strided_slice %0 {offsets = [6, 0], sizes = [1, 512], strides = [1, 1]} : vector<9x512xf32> to vector<1x512xf32>
    %55 = vector.broadcast %54 : vector<1x512xf32> to vector<6x512xf32>
    %56 = arith.mulf %53, %55 : vector<6x512xf32>
    %57 = vector.extract_strided_slice %3 {offsets = [6, 0, 0], sizes = [1, 2, 6], strides = [1, 1, 1]} : vector<9x2x6xbf16> to vector<1x2x6xbf16>
    %58 = vector.shape_cast %57 : vector<1x2x6xbf16> to vector<2x6xbf16>
    %59 = arith.truncf %56 : vector<6x512xf32> to vector<6x512xbf16>
    %cst_12 = arith.constant dense<0.000000e+00> : vector<2x512xf32>
    %60 = tpu.matmul %58, %59, %cst_12 {dimension_numbers = #tpu.dot_dimension_numbers<[1], [0], [0], [1], [0, 0, 1, 1], [], []>} : vector<2x6xbf16>, vector<6x512xbf16>, vector<2x512xf32> -> vector<2x512xf32>
    %61 = arith.addf %52, %60 : vector<2x512xf32>
    %c496_i32 = arith.constant 496 : i32
    %62 = tpu.dynamic_rotate %2 by %c496_i32 dim 1 : vector<6x512xf32>, i32 -> vector<6x512xf32>
    %63 = vector.extract_strided_slice %0 {offsets = [7, 0], sizes = [1, 512], strides = [1, 1]} : vector<9x512xf32> to vector<1x512xf32>
    %64 = vector.broadcast %63 : vector<1x512xf32> to vector<6x512xf32>
    %65 = arith.mulf %62, %64 : vector<6x512xf32>
    %66 = vector.extract_strided_slice %3 {offsets = [7, 0, 0], sizes = [1, 2, 6], strides = [1, 1, 1]} : vector<9x2x6xbf16> to vector<1x2x6xbf16>
    %67 = vector.shape_cast %66 : vector<1x2x6xbf16> to vector<2x6xbf16>
    %68 = arith.truncf %65 : vector<6x512xf32> to vector<6x512xbf16>
    %cst_13 = arith.constant dense<0.000000e+00> : vector<2x512xf32>
    %69 = tpu.matmul %67, %68, %cst_13 {dimension_numbers = #tpu.dot_dimension_numbers<[1], [0], [0], [1], [0, 0, 1, 1], [], []>} : vector<2x6xbf16>, vector<6x512xbf16>, vector<2x512xf32> -> vector<2x512xf32>
    %70 = arith.addf %61, %69 : vector<2x512xf32>
    %c495_i32 = arith.constant 495 : i32
    %71 = tpu.dynamic_rotate %2 by %c495_i32 dim 1 : vector<6x512xf32>, i32 -> vector<6x512xf32>
    %72 = vector.extract_strided_slice %0 {offsets = [8, 0], sizes = [1, 512], strides = [1, 1]} : vector<9x512xf32> to vector<1x512xf32>
    %73 = vector.broadcast %72 : vector<1x512xf32> to vector<6x512xf32>
    %74 = arith.mulf %71, %73 : vector<6x512xf32>
    %75 = vector.extract_strided_slice %3 {offsets = [8, 0, 0], sizes = [1, 2, 6], strides = [1, 1, 1]} : vector<9x2x6xbf16> to vector<1x2x6xbf16>
    %76 = vector.shape_cast %75 : vector<1x2x6xbf16> to vector<2x6xbf16>
    %77 = arith.truncf %74 : vector<6x512xf32> to vector<6x512xbf16>
    %cst_14 = arith.constant dense<0.000000e+00> : vector<2x512xf32>
    %78 = tpu.matmul %76, %77, %cst_14 {dimension_numbers = #tpu.dot_dimension_numbers<[1], [0], [0], [1], [0, 0, 1, 1], [], []>} : vector<2x6xbf16>, vector<6x512xbf16>, vector<2x512xf32> -> vector<2x512xf32>
    %79 = arith.addf %70, %78 : vector<2x512xf32>
    %c0_15 = arith.constant 0 : index
    %c0_16 = arith.constant 0 : index
    %80 = vector.load %arg5[%c0_15, %c0_16] : memref<2x1xf32, #tpu.memory_space<vmem>>, vector<2x1xf32>
    %81 = vector.broadcast %80 : vector<2x1xf32> to vector<2x512xf32>
    %82 = arith.addf %79, %81 : vector<2x512xf32>
    %c0_17 = arith.constant 0 : index
    %c0_18 = arith.constant 0 : index
    %83 = vector.load %arg2[%c0_17, %c0_18] : memref<1x512xf32, #tpu.memory_space<vmem>>, vector<1x512xf32>
    %84 = vector.broadcast %83 : vector<1x512xf32> to vector<2x512xf32>
    %85 = arith.mulf %82, %84 : vector<2x512xf32>
    %86 = tpu.concatenate %82, %85 in 1 : vector<2x512xf32>, vector<2x512xf32> -> vector<2x1024xf32>
    %87 = arith.truncf %86 : vector<2x1024xf32> to vector<2x1024xbf16>
    %c0_19 = arith.constant 0 : index
    %c0_20 = arith.constant 0 : index
    %88 = vector.load %arg6[%c0_19, %c0_20] : memref<16x2xbf16, #tpu.memory_space<vmem>>, vector<16x2xbf16>
    %cst_21 = arith.constant dense<0.000000e+00> : vector<16x1024xf32>
    %89 = tpu.matmul %88, %87, %cst_21 {dimension_numbers = #tpu.dot_dimension_numbers<[1], [0], [0], [1], [0, 0, 1, 1], [], []>} : vector<16x2xbf16>, vector<2x1024xbf16>, vector<16x1024xf32> -> vector<16x1024xf32>
    %c0_22 = arith.constant 0 : index
    %c0_23 = arith.constant 0 : index
    %90 = vector.load %arg7[%c0_22, %c0_23] : memref<16x1xf32, #tpu.memory_space<vmem>>, vector<16x1xf32>
    %91 = vector.broadcast %90 : vector<16x1xf32> to vector<16x1024xf32>
    %92 = arith.addf %89, %91 : vector<16x1024xf32>
    %cst_24 = arith.constant 0.000000e+00 : f32
    %93 = vector.broadcast %cst_24 : f32 to vector<16x1024xf32>
    %94 = arith.maximumf %92, %93 : vector<16x1024xf32>
    %c0_25 = arith.constant 0 : index
    %c0_26 = arith.constant 0 : index
    %95 = vector.load %arg8[%c0_25, %c0_26] : memref<32x16xbf16, #tpu.memory_space<vmem>>, vector<32x16xbf16>
    %96 = arith.truncf %94 : vector<16x1024xf32> to vector<16x1024xbf16>
    %cst_27 = arith.constant dense<0.000000e+00> : vector<32x1024xf32>
    %97 = tpu.matmul %95, %96, %cst_27 {dimension_numbers = #tpu.dot_dimension_numbers<[1], [0], [0], [1], [0, 0, 1, 1], [], []>} : vector<32x16xbf16>, vector<16x1024xbf16>, vector<32x1024xf32> -> vector<32x1024xf32>
    %c0_28 = arith.constant 0 : index
    %c0_29 = arith.constant 0 : index
    %98 = vector.load %arg9[%c0_28, %c0_29] : memref<32x1xf32, #tpu.memory_space<vmem>>, vector<32x1xf32>
    %99 = vector.broadcast %98 : vector<32x1xf32> to vector<32x1024xf32>
    %100 = arith.addf %97, %99 : vector<32x1024xf32>
    %cst_30 = arith.constant 0.000000e+00 : f32
    %101 = vector.broadcast %cst_30 : f32 to vector<32x1024xf32>
    %102 = arith.maximumf %100, %101 : vector<32x1024xf32>
    %103 = vector.extract_strided_slice %102 {offsets = [0, 0], sizes = [32, 512], strides = [1, 1]} : vector<32x1024xf32> to vector<32x512xf32>
    %104 = vector.extract_strided_slice %102 {offsets = [0, 512], sizes = [32, 512], strides = [1, 1]} : vector<32x1024xf32> to vector<32x512xf32>
    %105 = arith.addf %103, %104 : vector<32x512xf32>
    %c0_31 = arith.constant 0 : index
    %c0_32 = arith.constant 0 : index
    %c0_33 = arith.constant 0 : index
    %106 = vector.load %arg10[%c0_31, %c0_32, %c0_33] : memref<9x64x32xbf16, #tpu.memory_space<vmem>>, vector<9x64x32xbf16>
    %c17_i32_34 = arith.constant 17 : i32
    %107 = tpu.dynamic_rotate %105 by %c17_i32_34 dim 1 : vector<32x512xf32>, i32 -> vector<32x512xf32>
    %108 = vector.extract_strided_slice %0 {offsets = [0, 0], sizes = [1, 512], strides = [1, 1]} : vector<9x512xf32> to vector<1x512xf32>
    %109 = vector.broadcast %108 : vector<1x512xf32> to vector<32x512xf32>
    %110 = arith.mulf %107, %109 : vector<32x512xf32>
    %111 = vector.extract_strided_slice %106 {offsets = [0, 0, 0], sizes = [1, 64, 32], strides = [1, 1, 1]} : vector<9x64x32xbf16> to vector<1x64x32xbf16>
    %112 = vector.shape_cast %111 : vector<1x64x32xbf16> to vector<64x32xbf16>
    %113 = arith.truncf %110 : vector<32x512xf32> to vector<32x512xbf16>
    %cst_35 = arith.constant dense<0.000000e+00> : vector<64x512xf32>
    %114 = tpu.matmul %112, %113, %cst_35 {dimension_numbers = #tpu.dot_dimension_numbers<[1], [0], [0], [1], [0, 0, 1, 1], [], []>} : vector<64x32xbf16>, vector<32x512xbf16>, vector<64x512xf32> -> vector<64x512xf32>
    %c16_i32_36 = arith.constant 16 : i32
    %115 = tpu.dynamic_rotate %105 by %c16_i32_36 dim 1 : vector<32x512xf32>, i32 -> vector<32x512xf32>
    %116 = vector.extract_strided_slice %0 {offsets = [1, 0], sizes = [1, 512], strides = [1, 1]} : vector<9x512xf32> to vector<1x512xf32>
    %117 = vector.broadcast %116 : vector<1x512xf32> to vector<32x512xf32>
    %118 = arith.mulf %115, %117 : vector<32x512xf32>
    %119 = vector.extract_strided_slice %106 {offsets = [1, 0, 0], sizes = [1, 64, 32], strides = [1, 1, 1]} : vector<9x64x32xbf16> to vector<1x64x32xbf16>
    %120 = vector.shape_cast %119 : vector<1x64x32xbf16> to vector<64x32xbf16>
    %121 = arith.truncf %118 : vector<32x512xf32> to vector<32x512xbf16>
    %cst_37 = arith.constant dense<0.000000e+00> : vector<64x512xf32>
    %122 = tpu.matmul %120, %121, %cst_37 {dimension_numbers = #tpu.dot_dimension_numbers<[1], [0], [0], [1], [0, 0, 1, 1], [], []>} : vector<64x32xbf16>, vector<32x512xbf16>, vector<64x512xf32> -> vector<64x512xf32>
    %123 = arith.addf %114, %122 : vector<64x512xf32>
    %c15_i32_38 = arith.constant 15 : i32
    %124 = tpu.dynamic_rotate %105 by %c15_i32_38 dim 1 : vector<32x512xf32>, i32 -> vector<32x512xf32>
    %125 = vector.extract_strided_slice %0 {offsets = [2, 0], sizes = [1, 512], strides = [1, 1]} : vector<9x512xf32> to vector<1x512xf32>
    %126 = vector.broadcast %125 : vector<1x512xf32> to vector<32x512xf32>
    %127 = arith.mulf %124, %126 : vector<32x512xf32>
    %128 = vector.extract_strided_slice %106 {offsets = [2, 0, 0], sizes = [1, 64, 32], strides = [1, 1, 1]} : vector<9x64x32xbf16> to vector<1x64x32xbf16>
    %129 = vector.shape_cast %128 : vector<1x64x32xbf16> to vector<64x32xbf16>
    %130 = arith.truncf %127 : vector<32x512xf32> to vector<32x512xbf16>
    %cst_39 = arith.constant dense<0.000000e+00> : vector<64x512xf32>
    %131 = tpu.matmul %129, %130, %cst_39 {dimension_numbers = #tpu.dot_dimension_numbers<[1], [0], [0], [1], [0, 0, 1, 1], [], []>} : vector<64x32xbf16>, vector<32x512xbf16>, vector<64x512xf32> -> vector<64x512xf32>
    %132 = arith.addf %123, %131 : vector<64x512xf32>
    %c1_i32_40 = arith.constant 1 : i32
    %133 = tpu.dynamic_rotate %105 by %c1_i32_40 dim 1 : vector<32x512xf32>, i32 -> vector<32x512xf32>
    %134 = vector.extract_strided_slice %0 {offsets = [3, 0], sizes = [1, 512], strides = [1, 1]} : vector<9x512xf32> to vector<1x512xf32>
    %135 = vector.broadcast %134 : vector<1x512xf32> to vector<32x512xf32>
    %136 = arith.mulf %133, %135 : vector<32x512xf32>
    %137 = vector.extract_strided_slice %106 {offsets = [3, 0, 0], sizes = [1, 64, 32], strides = [1, 1, 1]} : vector<9x64x32xbf16> to vector<1x64x32xbf16>
    %138 = vector.shape_cast %137 : vector<1x64x32xbf16> to vector<64x32xbf16>
    %139 = arith.truncf %136 : vector<32x512xf32> to vector<32x512xbf16>
    %cst_41 = arith.constant dense<0.000000e+00> : vector<64x512xf32>
    %140 = tpu.matmul %138, %139, %cst_41 {dimension_numbers = #tpu.dot_dimension_numbers<[1], [0], [0], [1], [0, 0, 1, 1], [], []>} : vector<64x32xbf16>, vector<32x512xbf16>, vector<64x512xf32> -> vector<64x512xf32>
    %141 = arith.addf %132, %140 : vector<64x512xf32>
    %142 = vector.extract_strided_slice %106 {offsets = [4, 0, 0], sizes = [1, 64, 32], strides = [1, 1, 1]} : vector<9x64x32xbf16> to vector<1x64x32xbf16>
    %143 = vector.shape_cast %142 : vector<1x64x32xbf16> to vector<64x32xbf16>
    %144 = arith.truncf %105 : vector<32x512xf32> to vector<32x512xbf16>
    %cst_42 = arith.constant dense<0.000000e+00> : vector<64x512xf32>
    %145 = tpu.matmul %143, %144, %cst_42 {dimension_numbers = #tpu.dot_dimension_numbers<[1], [0], [0], [1], [0, 0, 1, 1], [], []>} : vector<64x32xbf16>, vector<32x512xbf16>, vector<64x512xf32> -> vector<64x512xf32>
    %146 = arith.addf %141, %145 : vector<64x512xf32>
    %c511_i32_43 = arith.constant 511 : i32
    %147 = tpu.dynamic_rotate %105 by %c511_i32_43 dim 1 : vector<32x512xf32>, i32 -> vector<32x512xf32>
    %148 = vector.extract_strided_slice %0 {offsets = [5, 0], sizes = [1, 512], strides = [1, 1]} : vector<9x512xf32> to vector<1x512xf32>
    %149 = vector.broadcast %148 : vector<1x512xf32> to vector<32x512xf32>
    %150 = arith.mulf %147, %149 : vector<32x512xf32>
    %151 = vector.extract_strided_slice %106 {offsets = [5, 0, 0], sizes = [1, 64, 32], strides = [1, 1, 1]} : vector<9x64x32xbf16> to vector<1x64x32xbf16>
    %152 = vector.shape_cast %151 : vector<1x64x32xbf16> to vector<64x32xbf16>
    %153 = arith.truncf %150 : vector<32x512xf32> to vector<32x512xbf16>
    %cst_44 = arith.constant dense<0.000000e+00> : vector<64x512xf32>
    %154 = tpu.matmul %152, %153, %cst_44 {dimension_numbers = #tpu.dot_dimension_numbers<[1], [0], [0], [1], [0, 0, 1, 1], [], []>} : vector<64x32xbf16>, vector<32x512xbf16>, vector<64x512xf32> -> vector<64x512xf32>
    %155 = arith.addf %146, %154 : vector<64x512xf32>
    %c497_i32_45 = arith.constant 497 : i32
    %156 = tpu.dynamic_rotate %105 by %c497_i32_45 dim 1 : vector<32x512xf32>, i32 -> vector<32x512xf32>
    %157 = vector.extract_strided_slice %0 {offsets = [6, 0], sizes = [1, 512], strides = [1, 1]} : vector<9x512xf32> to vector<1x512xf32>
    %158 = vector.broadcast %157 : vector<1x512xf32> to vector<32x512xf32>
    %159 = arith.mulf %156, %158 : vector<32x512xf32>
    %160 = vector.extract_strided_slice %106 {offsets = [6, 0, 0], sizes = [1, 64, 32], strides = [1, 1, 1]} : vector<9x64x32xbf16> to vector<1x64x32xbf16>
    %161 = vector.shape_cast %160 : vector<1x64x32xbf16> to vector<64x32xbf16>
    %162 = arith.truncf %159 : vector<32x512xf32> to vector<32x512xbf16>
    %cst_46 = arith.constant dense<0.000000e+00> : vector<64x512xf32>
    %163 = tpu.matmul %161, %162, %cst_46 {dimension_numbers = #tpu.dot_dimension_numbers<[1], [0], [0], [1], [0, 0, 1, 1], [], []>} : vector<64x32xbf16>, vector<32x512xbf16>, vector<64x512xf32> -> vector<64x512xf32>
    %164 = arith.addf %155, %163 : vector<64x512xf32>
    %c496_i32_47 = arith.constant 496 : i32
    %165 = tpu.dynamic_rotate %105 by %c496_i32_47 dim 1 : vector<32x512xf32>, i32 -> vector<32x512xf32>
    %166 = vector.extract_strided_slice %0 {offsets = [7, 0], sizes = [1, 512], strides = [1, 1]} : vector<9x512xf32> to vector<1x512xf32>
    %167 = vector.broadcast %166 : vector<1x512xf32> to vector<32x512xf32>
    %168 = arith.mulf %165, %167 : vector<32x512xf32>
    %169 = vector.extract_strided_slice %106 {offsets = [7, 0, 0], sizes = [1, 64, 32], strides = [1, 1, 1]} : vector<9x64x32xbf16> to vector<1x64x32xbf16>
    %170 = vector.shape_cast %169 : vector<1x64x32xbf16> to vector<64x32xbf16>
    %171 = arith.truncf %168 : vector<32x512xf32> to vector<32x512xbf16>
    %cst_48 = arith.constant dense<0.000000e+00> : vector<64x512xf32>
    %172 = tpu.matmul %170, %171, %cst_48 {dimension_numbers = #tpu.dot_dimension_numbers<[1], [0], [0], [1], [0, 0, 1, 1], [], []>} : vector<64x32xbf16>, vector<32x512xbf16>, vector<64x512xf32> -> vector<64x512xf32>
    %173 = arith.addf %164, %172 : vector<64x512xf32>
    %c495_i32_49 = arith.constant 495 : i32
    %174 = tpu.dynamic_rotate %105 by %c495_i32_49 dim 1 : vector<32x512xf32>, i32 -> vector<32x512xf32>
    %175 = vector.extract_strided_slice %0 {offsets = [8, 0], sizes = [1, 512], strides = [1, 1]} : vector<9x512xf32> to vector<1x512xf32>
    %176 = vector.broadcast %175 : vector<1x512xf32> to vector<32x512xf32>
    %177 = arith.mulf %174, %176 : vector<32x512xf32>
    %178 = vector.extract_strided_slice %106 {offsets = [8, 0, 0], sizes = [1, 64, 32], strides = [1, 1, 1]} : vector<9x64x32xbf16> to vector<1x64x32xbf16>
    %179 = vector.shape_cast %178 : vector<1x64x32xbf16> to vector<64x32xbf16>
    %180 = arith.truncf %177 : vector<32x512xf32> to vector<32x512xbf16>
    %cst_50 = arith.constant dense<0.000000e+00> : vector<64x512xf32>
    %181 = tpu.matmul %179, %180, %cst_50 {dimension_numbers = #tpu.dot_dimension_numbers<[1], [0], [0], [1], [0, 0, 1, 1], [], []>} : vector<64x32xbf16>, vector<32x512xbf16>, vector<64x512xf32> -> vector<64x512xf32>
    %182 = arith.addf %173, %181 : vector<64x512xf32>
    %c0_51 = arith.constant 0 : index
    %c0_52 = arith.constant 0 : index
    %183 = vector.load %arg11[%c0_51, %c0_52] : memref<64x1xf32, #tpu.memory_space<vmem>>, vector<64x1xf32>
    %184 = vector.broadcast %183 : vector<64x1xf32> to vector<64x512xf32>
    %185 = arith.addf %182, %184 : vector<64x512xf32>
    %cst_53 = arith.constant 0.000000e+00 : f32
    %186 = vector.broadcast %cst_53 : f32 to vector<64x512xf32>
    %187 = arith.maximumf %185, %186 : vector<64x512xf32>
    %188 = vector.extract_strided_slice %187 {offsets = [0, 0], sizes = [64, 256], strides = [1, 1]} : vector<64x512xf32> to vector<64x256xf32>
    %cst_54 = arith.constant dense<0.000000e+00> : vector<64xf32>
    %189 = vector.multi_reduction <add>, %188, %cst_54 [1] : vector<64x256xf32> to vector<64xf32>
    %190 = vector.shape_cast %189 : vector<64xf32> to vector<64x1xf32>
    %cst_55 = arith.constant 2.560000e+02 : f32
    %191 = vector.broadcast %cst_55 : f32 to vector<64x1xf32>
    %192 = arith.divf %190, %191 : vector<64x1xf32>
    %193 = vector.extract_strided_slice %187 {offsets = [0, 256], sizes = [64, 256], strides = [1, 1]} : vector<64x512xf32> to vector<64x256xf32>
    %cst_56 = arith.constant dense<0.000000e+00> : vector<64xf32>
    %194 = vector.multi_reduction <add>, %193, %cst_56 [1] : vector<64x256xf32> to vector<64xf32>
    %195 = vector.shape_cast %194 : vector<64xf32> to vector<64x1xf32>
    %cst_57 = arith.constant 2.560000e+02 : f32
    %196 = vector.broadcast %cst_57 : f32 to vector<64x1xf32>
    %197 = arith.divf %195, %196 : vector<64x1xf32>
    %cst_58 = arith.constant 0.000000e+00 : f32
    %198 = vector.broadcast %cst_58 : f32 to vector<64x126xf32>
    %199 = tpu.concatenate %192, %197, %198 in 1 : vector<64x1xf32>, vector<64x1xf32>, vector<64x126xf32> -> vector<64x128xf32>
    %cst_59 = arith.constant 0.000000e+00 : f32
    %200 = vector.broadcast %cst_59 : f32 to vector<64x128xf32>
    %201 = tpu.concatenate %199, %200 in 0 : vector<64x128xf32>, vector<64x128xf32> -> vector<128x128xf32>
    %202 = tpu.transpose %201, [1, 0] : vector<128x128xf32> -> vector<128x128xf32>
    %203 = vector.extract_strided_slice %202 {offsets = [0, 0], sizes = [8, 64], strides = [1, 1]} : vector<128x128xf32> to vector<8x64xf32>
    %c0_60 = arith.constant 0 : index
    %c0_61 = arith.constant 0 : index
    %204 = vector.load %arg12[%c0_60, %c0_61] : memref<64x128xf32, #tpu.memory_space<vmem>>, vector<64x128xf32>
    %cst_62 = arith.constant dense<0.000000e+00> : vector<8x128xf32>
    %205 = tpu.matmul %203, %204, %cst_62 {dimension_numbers = #tpu.dot_dimension_numbers<[1], [0], [0], [1], [0, 0, 1, 1], [], []>} : vector<8x64xf32>, vector<64x128xf32>, vector<8x128xf32> -> vector<8x128xf32>
    %c0_63 = arith.constant 0 : index
    %c0_64 = arith.constant 0 : index
    %206 = vector.load %arg13[%c0_63, %c0_64] : memref<1x128xf32, #tpu.memory_space<vmem>>, vector<1x128xf32>
    %207 = vector.broadcast %206 : vector<1x128xf32> to vector<8x128xf32>
    %208 = arith.addf %205, %207 : vector<8x128xf32>
    %c0_65 = arith.constant 0 : index
    %c0_66 = arith.constant 0 : index
    %c0_67 = arith.constant 0 : index
    %209 = vector.load %arg14[%c0_65, %c0_66, %c0_67] : memref<1x8x128xf32, #tpu.memory_space<vmem>>, vector<1x8x128xf32>
    %210 = vector.shape_cast %209 : vector<1x8x128xf32> to vector<8x128xf32>
    %211 = vector.shape_cast %208 : vector<8x128xf32> to vector<1x8x128xf32>
    tpu.vector_store %arg14[%c0_65, %c0_66, %c0_67], %211 {strides = array<i32>} : memref<1x8x128xf32, #tpu.memory_space<vmem>>, vector<1x8x128xf32>,
    return
  }
  func.func @transform_0(%arg0: i32) -> (i32, i32, i32) {
    %c0_i32 = arith.constant 0 : i32
    %c0_i32_0 = arith.constant 0 : i32
    %c0_i32_1 = arith.constant 0 : i32
    return %arg0, %c0_i32, %c0_i32_0 : i32, i32, i32
  }
  func.func @transform_1(%arg0: i32) -> (i32, i32) {
    %c0_i32 = arith.constant 0 : i32
    %c0_i32_0 = arith.constant 0 : i32
    %c0_i32_1 = arith.constant 0 : i32
    return %c0_i32, %c0_i32_0 : i32, i32
  }
  func.func @transform_2(%arg0: i32) -> (i32, i32) {
    %c0_i32 = arith.constant 0 : i32
    %c0_i32_0 = arith.constant 0 : i32
    %c0_i32_1 = arith.constant 0 : i32
    return %c0_i32, %c0_i32_0 : i32, i32
  }
  func.func @transform_3(%arg0: i32) -> (i32, i32, i32) {
    %c0_i32 = arith.constant 0 : i32
    %c0_i32_0 = arith.constant 0 : i32
    %c0_i32_1 = arith.constant 0 : i32
    %c0_i32_2 = arith.constant 0 : i32
    return %c0_i32, %c0_i32_0, %c0_i32_1 : i32, i32, i32
  }
  func.func @transform_4(%arg0: i32) -> (i32, i32) {
    %c0_i32 = arith.constant 0 : i32
    %c0_i32_0 = arith.constant 0 : i32
    %c0_i32_1 = arith.constant 0 : i32
    return %c0_i32, %c0_i32_0 : i32, i32
  }
  func.func @transform_5(%arg0: i32) -> (i32, i32) {
    %c0_i32 = arith.constant 0 : i32
    %c0_i32_0 = arith.constant 0 : i32
    %c0_i32_1 = arith.constant 0 : i32
    return %c0_i32, %c0_i32_0 : i32, i32
  }
  func.func @transform_6(%arg0: i32) -> (i32, i32) {
    %c0_i32 = arith.constant 0 : i32
    %c0_i32_0 = arith.constant 0 : i32
    %c0_i32_1 = arith.constant 0 : i32
    return %c0_i32, %c0_i32_0 : i32, i32
  }
  func.func @transform_7(%arg0: i32) -> (i32, i32) {
    %c0_i32 = arith.constant 0 : i32
    %c0_i32_0 = arith.constant 0 : i32
    %c0_i32_1 = arith.constant 0 : i32
    return %c0_i32, %c0_i32_0 : i32, i32
  }
  func.func @transform_8(%arg0: i32) -> (i32, i32) {
    %c0_i32 = arith.constant 0 : i32
    %c0_i32_0 = arith.constant 0 : i32
    %c0_i32_1 = arith.constant 0 : i32
    return %c0_i32, %c0_i32_0 : i32, i32
  }
  func.func @transform_9(%arg0: i32) -> (i32, i32, i32) {
    %c0_i32 = arith.constant 0 : i32
    %c0_i32_0 = arith.constant 0 : i32
    %c0_i32_1 = arith.constant 0 : i32
    %c0_i32_2 = arith.constant 0 : i32
    return %c0_i32, %c0_i32_0, %c0_i32_1 : i32, i32, i32
  }
  func.func @transform_10(%arg0: i32) -> (i32, i32) {
    %c0_i32 = arith.constant 0 : i32
    %c0_i32_0 = arith.constant 0 : i32
    %c0_i32_1 = arith.constant 0 : i32
    return %c0_i32, %c0_i32_0 : i32, i32
  }
  func.func @transform_11(%arg0: i32) -> (i32, i32) {
    %c0_i32 = arith.constant 0 : i32
    %c0_i32_0 = arith.constant 0 : i32
    %c0_i32_1 = arith.constant 0 : i32
    return %c0_i32, %c0_i32_0 : i32, i32
  }
  func.func @transform_12(%arg0: i32) -> (i32, i32) {
    %c0_i32 = arith.constant 0 : i32
    %c0_i32_0 = arith.constant 0 : i32
    %c0_i32_1 = arith.constant 0 : i32
    return %c0_i32, %c0_i32_0 : i32, i32
  }
  func.func @transform_13(%arg0: i32) -> (i32, i32, i32) {
    %c0_i32 = arith.constant 0 : i32
    %c0_i32_0 = arith.constant 0 : i32
    %c0_i32_1 = arith.constant 0 : i32
    return %arg0, %c0_i32, %c0_i32_0 : i32, i32, i32
  }
}

</mosaic_0001>

<llo_original>
// kernel: vonet_forward.1
$region0: #{vonet_forward.1}
  #allocation0 [shape = 'u32[]', space=smem, size = 0x4, offset = 0x4, fixed_abs, tag = 'smem constant byte address 0x4 - core index']
  #allocation1 [shape = 'u32[144,128]{1,0:T(1,128)}', space=vmem, size = 0x12000, scoped, tag = 'internal scratch']
  %s0 = inlined_call_operand.vmem [shape: f32[2,6,512], index: 0, kind: input, shape index: {}]
  %s1 = inlined_call_operand.vmem [shape: f32[1,512], index: 1, kind: input, shape index: {}]
  %s2 = inlined_call_operand.vmem [shape: f32[9,512], index: 2, kind: input, shape index: {}]
  %s3 = inlined_call_operand.vmem [shape: bf16[9,2,6], index: 3, kind: input, shape index: {}]
  %s4 = inlined_call_operand.vmem [shape: f32[2,1], index: 4, kind: input, shape index: {}]
  %s5 = inlined_call_operand.vmem [shape: bf16[16,2], index: 5, kind: input, shape index: {}]
  %s6 = inlined_call_operand.vmem [shape: f32[16,1], index: 6, kind: input, shape index: {}]
  %s7 = inlined_call_operand.vmem [shape: bf16[32,16], index: 7, kind: input, shape index: {}]
  %s8 = inlined_call_operand.vmem [shape: f32[32,1], index: 8, kind: input, shape index: {}]
  %s9 = inlined_call_operand.vmem [shape: bf16[9,64,32], index: 9, kind: input, shape index: {}]
  %s10 = inlined_call_operand.vmem [shape: f32[64,1], index: 10, kind: input, shape index: {}]
  %s11 = inlined_call_operand.vmem [shape: f32[64,128], index: 11, kind: input, shape index: {}]
  %s12 = inlined_call_operand.vmem [shape: f32[1,128], index: 12, kind: input, shape index: {}]
  %s13 = inlined_call_operand.vmem [shape: f32[2,8,128], index: 13, kind: output, shape index: {}]
  %s14 = sld [smem:[#allocation0]]
  $region85: #{vonet_forward.1} parent=0
    _
  %s16 = ssub.s32 1, %s14
  %s17 = scalar_select 0, %s16, %s14
  loop: start=0, step=1, limit=4
  $region2: #{vonet_forward.1} parent=0 // loop_pre_header
    _
  $region3: #{vonet_forward.1} parent=0 // loop_header
    %s19 = sphi 0, %s23
    %p20 = scmp.ge.s32.totalorder %s19, 4
    %s29 = sphi 0, %s31
    %s32 = sphi 0, %s29
    %s33 = sphi 0, %s32
    %s49 = sphi 0, %s33
    %s53 = sphi 0, %s53
    %s55 = sphi 0, %s53
    %s56 = sphi 0, %s55
    %s70 = sphi 0, %s56
    %s74 = sphi 0, %s74
    %s76 = sphi 0, %s74
    %s77 = sphi 0, %s76
    %s91 = sphi 0, %s77
    %s95 = sphi 0, %s95
    %s97 = sphi 0, %s95
    %s98 = sphi 0, %s97
    %s112 = sphi 0, %s98
    %s116 = sphi 0, %s116
    %s118 = sphi 0, %s116
    %s119 = sphi 0, %s118
    %s133 = sphi 0, %s119
    %s137 = sphi 0, %s137
    %s139 = sphi 0, %s137
    %s140 = sphi 0, %s139
    %s154 = sphi 0, %s140
    %s158 = sphi 0, %s158
    %s160 = sphi 0, %s158
    %s161 = sphi 0, %s160
    %s175 = sphi 0, %s161
    %s179 = sphi 0, %s179
    %s181 = sphi 0, %s179
    %s182 = sphi 0, %s181
    %s196 = sphi 0, %s182
    %s200 = sphi 0, %s200
    %s202 = sphi 0, %s200
    %s203 = sphi 0, %s202
    %s217 = sphi 0, %s203
    %s221 = sphi 0, %s221
    %s223 = sphi 0, %s221
    %s224 = sphi 0, %s223
    %s238 = sphi 0, %s224
    %s242 = sphi 0, %s242
    %s244 = sphi 0, %s242
    %s245 = sphi 0, %s244
    %s259 = sphi 0, %s245
    %s263 = sphi 0, %s263
    %s265 = sphi 0, %s263
    %s266 = sphi 0, %s265
    %s280 = sphi 0, %s266
    %s284 = sphi 0, %s284
    %s286 = sphi 0, %s284
    %s287 = sphi 0, %s286
    %s301 = sphi 0, %s287
    %s307 = sphi 0, %s309
    %s310 = sphi 0, %s307
    %s311 = sphi 0, %s310
    %s327 = sphi 0, %s311
  $region4: #{vonet_forward.1} parent=0 // loop_header_branch
    %22 = sbr.rel (%p20) target = $region8
  $region5: #{vonet_forward.1} parent=0 // loop_body
    %s24 = ssub.s32 %s19, 1
    %s25 = ssub.s32 %s19, 2
    %s26 = sadd.s32 %s19, 1
    %s27 = ssub.s32 %s19, %s26
    %p28 = scmp.eq.s32.totalorder %s27, 0
    %s30 = sadd.s32 %s29, 1
    %s31 = scalar_select %p28, %s29, %s30
    %p34 = pneg %p28
    %p35 = scmp.eq.s32.totalorder %s19, 1
    %p36 = por %p34, %p35
    %p37 = scmp.ne.s32.totalorder %s29, %s32
    %p38 = scmp.eq.s32.totalorder %s19, 0
    %p39 = por %p37, %p38
    %p40 = scmp.ne.s32.totalorder %s29, %s32
    %p41 = scmp.eq.s32.totalorder %s24, 1
    %p42 = por %p40, %p41
    %p43 = scmp.ne.s32.totalorder %s32, %s33
    %p44 = scmp.eq.s32.totalorder %s24, 0
    %p45 = por %p43, %p44
    %p46 = scmp.ne.s32.totalorder %s32, %s33
    %p47 = scmp.eq.s32.totalorder %s25, 1
    %p48 = por %p46, %p47
    %p50 = scmp.ne.s32.totalorder %s33, %s49
    %p51 = scmp.eq.s32.totalorder %s25, 0
    %p52 = por %p50, %p51
    %s54 = sadd.s32 %s53, 1
    %p57 = scmp.eq.s32.totalorder %s19, 1
    %p58 = scmp.ne.s32.totalorder %s53, %s55
    %p59 = scmp.eq.s32.totalorder %s19, 0
    %p60 = por %p58, %p59
    %p61 = scmp.ne.s32.totalorder %s53, %s55
    %p62 = scmp.eq.s32.totalorder %s24, 1
    %p63 = por %p61, %p62
    %p64 = scmp.ne.s32.totalorder %s55, %s56
    %p65 = scmp.eq.s32.totalorder %s24, 0
    %p66 = por %p64, %p65
    %p67 = scmp.ne.s32.totalorder %s55, %s56
    %p68 = scmp.eq.s32.totalorder %s25, 1
    %p69 = por %p67, %p68
    %p71 = scmp.ne.s32.totalorder %s56, %s70
    %p72 = scmp.eq.s32.totalorder %s25, 0
    %p73 = por %p71, %p72
    %s75 = sadd.s32 %s74, 1
    %p78 = scmp.eq.s32.totalorder %s19, 1
    %p79 = scmp.ne.s32.totalorder %s74, %s76
    %p80 = scmp.eq.s32.totalorder %s19, 0
    %p81 = por %p79, %p80
    %p82 = scmp.ne.s32.totalorder %s74, %s76
    %p83 = scmp.eq.s32.totalorder %s24, 1
    %p84 = por %p82, %p83
    %p85 = scmp.ne.s32.totalorder %s76, %s77
    %p86 = scmp.eq.s32.totalorder %s24, 0
    %p87 = por %p85, %p86
    %p88 = scmp.ne.s32.totalorder %s76, %s77
    %p89 = scmp.eq.s32.totalorder %s25, 1
    %p90 = por %p88, %p89
    %p92 = scmp.ne.s32.totalorder %s77, %s91
    %p93 = scmp.eq.s32.totalorder %s25, 0
    %p94 = por %p92, %p93
    %s96 = sadd.s32 %s95, 1
    %p99 = scmp.eq.s32.totalorder %s19, 1
    %p100 = scmp.ne.s32.totalorder %s95, %s97
    %p101 = scmp.eq.s32.totalorder %s19, 0
    %p102 = por %p100, %p101
    %p103 = scmp.ne.s32.totalorder %s95, %s97
    %p104 = scmp.eq.s32.totalorder %s24, 1
    %p105 = por %p103, %p104
    %p106 = scmp.ne.s32.totalorder %s97, %s98
    %p107 = scmp.eq.s32.totalorder %s24, 0
    %p108 = por %p106, %p107
    %p109 = scmp.ne.s32.totalorder %s97, %s98
    %p110 = scmp.eq.s32.totalorder %s25, 1
    %p111 = por %p109, %p110
    %p113 = scmp.ne.s32.totalorder %s98, %s112
    %p114 = scmp.eq.s32.totalorder %s25, 0
    %p115 = por %p113, %p114
    %s117 = sadd.s32 %s116, 1
    %p120 = scmp.eq.s32.totalorder %s19, 1
    %p121 = scmp.ne.s32.totalorder %s116, %s118
    %p122 = scmp.eq.s32.totalorder %s19, 0
    %p123 = por %p121, %p122
    %p124 = scmp.ne.s32.totalorder %s116, %s118
    %p125 = scmp.eq.s32.totalorder %s24, 1
    %p126 = por %p124, %p125
    %p127 = scmp.ne.s32.totalorder %s118, %s119
    %p128 = scmp.eq.s32.totalorder %s24, 0
    %p129 = por %p127, %p128
    %p130 = scmp.ne.s32.totalorder %s118, %s119
    %p131 = scmp.eq.s32.totalorder %s25, 1
    %p132 = por %p130, %p131
    %p134 = scmp.ne.s32.totalorder %s119, %s133
    %p135 = scmp.eq.s32.totalorder %s25, 0
    %p136 = por %p134, %p135
    %s138 = sadd.s32 %s137, 1
    %p141 = scmp.eq.s32.totalorder %s19, 1
    %p142 = scmp.ne.s32.totalorder %s137, %s139
    %p143 = scmp.eq.s32.totalorder %s19, 0
    %p144 = por %p142, %p143
    %p145 = scmp.ne.s32.totalorder %s137, %s139
    %p146 = scmp.eq.s32.totalorder %s24, 1
    %p147 = por %p145, %p146
    %p148 = scmp.ne.s32.totalorder %s139, %s140
    %p149 = scmp.eq.s32.totalorder %s24, 0
    %p150 = por %p148, %p149
    %p151 = scmp.ne.s32.totalorder %s139, %s140
    %p152 = scmp.eq.s32.totalorder %s25, 1
    %p153 = por %p151, %p152
    %p155 = scmp.ne.s32.totalorder %s140, %s154
    %p156 = scmp.eq.s32.totalorder %s25, 0
    %p157 = por %p155, %p156
    %s159 = sadd.s32 %s158, 1
    %p162 = scmp.eq.s32.totalorder %s19, 1
    %p163 = scmp.ne.s32.totalorder %s158, %s160
    %p164 = scmp.eq.s32.totalorder %s19, 0
    %p165 = por %p163, %p164
    %p166 = scmp.ne.s32.totalorder %s158, %s160
    %p167 = scmp.eq.s32.totalorder %s24, 1
    %p168 = por %p166, %p167
    %p169 = scmp.ne.s32.totalorder %s160, %s161
    %p170 = scmp.eq.s32.totalorder %s24, 0
    %p171 = por %p169, %p170
    %p172 = scmp.ne.s32.totalorder %s160, %s161
    %p173 = scmp.eq.s32.totalorder %s25, 1
    %p174 = por %p172, %p173
    %p176 = scmp.ne.s32.totalorder %s161, %s175
    %p177 = scmp.eq.s32.totalorder %s25, 0
    %p178 = por %p176, %p177
    %s180 = sadd.s32 %s179, 1
    %p183 = scmp.eq.s32.totalorder %s19, 1
    %p184 = scmp.ne.s32.totalorder %s179, %s181
    %p185 = scmp.eq.s32.totalorder %s19, 0
    %p186 = por %p184, %p185
    %p187 = scmp.ne.s32.totalorder %s179, %s181
    %p188 = scmp.eq.s32.totalorder %s24, 1
    %p189 = por %p187, %p188
    %p190 = scmp.ne.s32.totalorder %s181, %s182
    %p191 = scmp.eq.s32.totalorder %s24, 0
    %p192 = por %p190, %p191
    %p193 = scmp.ne.s32.totalorder %s181, %s182
    %p194 = scmp.eq.s32.totalorder %s25, 1
    %p195 = por %p193, %p194
    %p197 = scmp.ne.s32.totalorder %s182, %s196
    %p198 = scmp.eq.s32.totalorder %s25, 0
    %p199 = por %p197, %p198
    %s201 = sadd.s32 %s200, 1
    %p204 = scmp.eq.s32.totalorder %s19, 1
    %p205 = scmp.ne.s32.totalorder %s200, %s202
    %p206 = scmp.eq.s32.totalorder %s19, 0
    %p207 = por %p205, %p206
    %p208 = scmp.ne.s32.totalorder %s200, %s202
    %p209 = scmp.eq.s32.totalorder %s24, 1
    %p210 = por %p208, %p209
    %p211 = scmp.ne.s32.totalorder %s202, %s203
    %p212 = scmp.eq.s32.totalorder %s24, 0
    %p213 = por %p211, %p212
    %p214 = scmp.ne.s32.totalorder %s202, %s203
    %p215 = scmp.eq.s32.totalorder %s25, 1
    %p216 = por %p214, %p215
    %p218 = scmp.ne.s32.totalorder %s203, %s217
    %p219 = scmp.eq.s32.totalorder %s25, 0
    %p220 = por %p218, %p219
    %s222 = sadd.s32 %s221, 1
    %p225 = scmp.eq.s32.totalorder %s19, 1
    %p226 = scmp.ne.s32.totalorder %s221, %s223
    %p227 = scmp.eq.s32.totalorder %s19, 0
    %p228 = por %p226, %p227
    %p229 = scmp.ne.s32.totalorder %s221, %s223
    %p230 = scmp.eq.s32.totalorder %s24, 1
    %p231 = por %p229, %p230
    %p232 = scmp.ne.s32.totalorder %s223, %s224
    %p233 = scmp.eq.s32.totalorder %s24, 0
    %p234 = por %p232, %p233
    %p235 = scmp.ne.s32.totalorder %s223, %s224
    %p236 = scmp.eq.s32.totalorder %s25, 1
    %p237 = por %p235, %p236
    %p239 = scmp.ne.s32.totalorder %s224, %s238
    %p240 = scmp.eq.s32.totalorder %s25, 0
    %p241 = por %p239, %p240
    %s243 = sadd.s32 %s242, 1
    %p246 = scmp.eq.s32.totalorder %s19, 1
    %p247 = scmp.ne.s32.totalorder %s242, %s244
    %p248 = scmp.eq.s32.totalorder %s19, 0
    %p249 = por %p247, %p248
    %p250 = scmp.ne.s32.totalorder %s242, %s244
    %p251 = scmp.eq.s32.totalorder %s24, 1
    %p252 = por %p250, %p251
    %p253 = scmp.ne.s32.totalorder %s244, %s245
    %p254 = scmp.eq.s32.totalorder %s24, 0
    %p255 = por %p253, %p254
    %p256 = scmp.ne.s32.totalorder %s244, %s245
    %p257 = scmp.eq.s32.totalorder %s25, 1
    %p258 = por %p256, %p257
    %p260 = scmp.ne.s32.totalorder %s245, %s259
    %p261 = scmp.eq.s32.totalorder %s25, 0
    %p262 = por %p260, %p261
    %s264 = sadd.s32 %s263, 1
    %p267 = scmp.eq.s32.totalorder %s19, 1
    %p268 = scmp.ne.s32.totalorder %s263, %s265
    %p269 = scmp.eq.s32.totalorder %s19, 0
    %p270 = por %p268, %p269
    %p271 = scmp.ne.s32.totalorder %s263, %s265
    %p272 = scmp.eq.s32.totalorder %s24, 1
    %p273 = por %p271, %p272
    %p274 = scmp.ne.s32.totalorder %s265, %s266
    %p275 = scmp.eq.s32.totalorder %s24, 0
    %p276 = por %p274, %p275
    %p277 = scmp.ne.s32.totalorder %s265, %s266
    %p278 = scmp.eq.s32.totalorder %s25, 1
    %p279 = por %p277, %p278
    %p281 = scmp.ne.s32.totalorder %s266, %s280
    %p282 = scmp.eq.s32.totalorder %s25, 0
    %p283 = por %p281, %p282
    %s285 = sadd.s32 %s284, 1
    %p288 = scmp.eq.s32.totalorder %s19, 1
    %p289 = scmp.ne.s32.totalorder %s284, %s286
    %p290 = scmp.eq.s32.totalorder %s19, 0
    %p291 = por %p289, %p290
    %p292 = scmp.ne.s32.totalorder %s284, %s286
    %p293 = scmp.eq.s32.totalorder %s24, 1
    %p294 = por %p292, %p293
    %p295 = scmp.ne.s32.totalorder %s286, %s287
    %p296 = scmp.eq.s32.totalorder %s24, 0
    %p297 = por %p295, %p296
    %p298 = scmp.ne.s32.totalorder %s286, %s287
    %p299 = scmp.eq.s32.totalorder %s25, 1
    %p300 = por %p298, %p299
    %p302 = scmp.ne.s32.totalorder %s287, %s301
    %p303 = scmp.eq.s32.totalorder %s25, 0
    %p304 = por %p302, %p303
    %s305 = ssub.s32 %s19, %s26
    %p306 = scmp.eq.s32.totalorder %s305, 0
    %s308 = sadd.s32 %s307, 1
    %s309 = scalar_select %p306, %s307, %s308
    %p312 = pneg %p306
    %p313 = scmp.eq.s32.totalorder %s19, 1
    %p314 = por %p312, %p313
    %p315 = scmp.ne.s32.totalorder %s307, %s310
    %p316 = scmp.eq.s32.totalorder %s19, 0
    %p317 = por %p315, %p316
    %p318 = scmp.ne.s32.totalorder %s307, %s310
    %p319 = scmp.eq.s32.totalorder %s24, 1
    %p320 = por %p318, %p319
    %p321 = scmp.ne.s32.totalorder %s310, %s311
    %p322 = scmp.eq.s32.totalorder %s24, 0
    %p323 = por %p321, %p322
    %p324 = scmp.ne.s32.totalorder %s310, %s311
    %p325 = scmp.eq.s32.totalorder %s25, 1
    %p326 = por %p324, %p325
    %p328 = scmp.ne.s32.totalorder %s311, %s327
    %p329 = scmp.eq.s32.totalorder %s25, 0
    %p330 = por %p328, %p329
    %p331 = scmp.le.s32.totalorder 1, %s19
    %p332 = scmp.lt.s32.totalorder %s19, 3
    %p333 = pnand %p331, %p332
    %p334 = pneg %p333
    // Predicated region
    $region9: #{vonet_forward.1} parent=5 // pred_check
      _
    $region10: #{vonet_forward.1} parent=5 // pred_check_branch
      %336 = sbr.rel (%p333) target = $region12
    $region11: #{vonet_forward.1} parent=5 // pred_region
      %s337 = ssub.s32 %s19, 1
      // Predicated region
      $region13: #{vonet_forward.1} parent=11 // pred_check
        %p338 = pneg %p66
      $region14: #{vonet_forward.1} parent=11 // pred_check_branch
        %340 = sbr.rel (%p338) target = $region16
      $region15: #{vonet_forward.1} parent=11 // pred_region
        _
      $region16: #{vonet_forward.1} parent=11 // pred_fallthru
        _
      // Predicated region
      $region17: #{vonet_forward.1} parent=11 // pred_check
        %p341 = pneg %p87
      $region18: #{vonet_forward.1} parent=11 // pred_check_branch
        %343 = sbr.rel (%p341) target = $region20
      $region19: #{vonet_forward.1} parent=11 // pred_region
        _
      $region20: #{vonet_forward.1} parent=11 // pred_fallthru
        _
      // Predicated region
      $region21: #{vonet_forward.1} parent=11 // pred_check
        %p344 = pneg %p108
      $region22: #{vonet_forward.1} parent=11 // pred_check_branch
        %346 = sbr.rel (%p344) target = $region24
      $region23: #{vonet_forward.1} parent=11 // pred_region
        _
      $region24: #{vonet_forward.1} parent=11 // pred_fallthru
        _
      // Predicated region
      $region25: #{vonet_forward.1} parent=11 // pred_check
        %p347 = pneg %p129
      $region26: #{vonet_forward.1} parent=11 // pred_check_branch
        %349 = sbr.rel (%p347) target = $region28
      $region27: #{vonet_forward.1} parent=11 // pred_region
        _
      $region28: #{vonet_forward.1} parent=11 // pred_fallthru
        _
      // Predicated region
      $region29: #{vonet_forward.1} parent=11 // pred_check
        %p350 = pneg %p150
      $region30: #{vonet_forward.1} parent=11 // pred_check_branch
        %352 = sbr.rel (%p350) target = $region32
      $region31: #{vonet_forward.1} parent=11 // pred_region
        _
      $region32: #{vonet_forward.1} parent=11 // pred_fallthru
        _
      // Predicated region
      $region33: #{vonet_forward.1} parent=11 // pred_check
        %p353 = pneg %p171
      $region34: #{vonet_forward.1} parent=11 // pred_check_branch
        %355 = sbr.rel (%p353) target = $region36
      $region35: #{vonet_forward.1} parent=11 // pred_region
        _
      $region36: #{vonet_forward.1} parent=11 // pred_fallthru
        _
      // Predicated region
      $region37: #{vonet_forward.1} parent=11 // pred_check
        %p356 = pneg %p192
      $region38: #{vonet_forward.1} parent=11 // pred_check_branch
        %358 = sbr.rel (%p356) target = $region40
      $region39: #{vonet_forward.1} parent=11 // pred_region
        _
      $region40: #{vonet_forward.1} parent=11 // pred_fallthru
        _
      // Predicated region
      $region41: #{vonet_forward.1} parent=11 // pred_check
        %p359 = pneg %p213
      $region42: #{vonet_forward.1} parent=11 // pred_check_branch
        %361 = sbr.rel (%p359) target = $region44
      $region43: #{vonet_forward.1} parent=11 // pred_region
        _
      $region44: #{vonet_forward.1} parent=11 // pred_fallthru
        _
      // Predicated region
      $region45: #{vonet_forward.1} parent=11 // pred_check
        %p362 = pneg %p234
      $region46: #{vonet_forward.1} parent=11 // pred_check_branch
        %364 = sbr.rel (%p362) target = $region48
      $region47: #{vonet_forward.1} parent=11 // pred_region
        _
      $region48: #{vonet_forward.1} parent=11 // pred_fallthru
        _
      // Predicated region
      $region49: #{vonet_forward.1} parent=11 // pred_check
        %p365 = pneg %p255
      $region50: #{vonet_forward.1} parent=11 // pred_check_branch
        %367 = sbr.rel (%p365) target = $region52
      $region51: #{vonet_forward.1} parent=11 // pred_region
        _
      $region52: #{vonet_forward.1} parent=11 // pred_fallthru
        _
      // Predicated region
      $region53: #{vonet_forward.1} parent=11 // pred_check
        %p368 = pneg %p276
      $region54: #{vonet_forward.1} parent=11 // pred_check_branch
        %370 = sbr.rel (%p368) target = $region56
      $region55: #{vonet_forward.1} parent=11 // pred_region
        _
      $region56: #{vonet_forward.1} parent=11 // pred_fallthru
        _
      // Predicated region
      $region57: #{vonet_forward.1} parent=11 // pred_check
        %p371 = pneg %p297
      $region58: #{vonet_forward.1} parent=11 // pred_check_branch
        %373 = sbr.rel (%p371) target = $region60
      $region59: #{vonet_forward.1} parent=11 // pred_region
        _
      $region60: #{vonet_forward.1} parent=11 // pred_fallthru
        _
    $region12: #{vonet_forward.1} parent=5 // pred_fallthru
      _
    %p374 = scmp.lt.s32.totalorder %s19, 2
    // Predicated region
    $region61: #{vonet_forward.1} parent=5 // pred_check
      %p375 = pneg %p374
    $region62: #{vonet_forward.1} parent=5 // pred_check_branch
      %377 = sbr.rel (%p375) target = $region64
    $region63: #{vonet_forward.1} parent=5 // pred_region
      // Predicated region
      $region65: #{vonet_forward.1} parent=63 // pred_check
        %p378 = pneg %p39
      $region66: #{vonet_forward.1} parent=63 // pred_check_branch
        %380 = sbr.rel (%p378) target = $region68
      $region67: #{vonet_forward.1} parent=63 // pred_region
        %p381 = scmp.lt.s32.totalorder %s19, 1
        %s382 = scalar_select %p381, %s19, 1
        %s383 = smul.addr %s382, 4
        %s384 = smul.addr %s383, 8
        %s385 = scalar_lea.vmem %s0, %s384
      $region68: #{vonet_forward.1} parent=63 // pred_fallthru
        _
    $region64: #{vonet_forward.1} parent=5 // pred_fallthru
      _
    %p386 = scmp.le.s32.totalorder 1, %s19
    %p387 = scmp.lt.s32.totalorder %s19, 3
    %p388 = pnand %p386, %p387
    %p389 = pneg %p388
    // Predicated region
    $region69: #{vonet_forward.1} parent=5 // pred_check
      _
    $region70: #{vonet_forward.1} parent=5 // pred_check_branch
      %391 = sbr.rel (%p388) target = $region72
    $region71: #{vonet_forward.1} parent=5 // pred_region
      %s392 = ssub.s32 %s19, 1
      %p393 = scmp.lt.s32.totalorder %s24, 1
      %s394 = scalar_select %p393, %s24, 1
      %s395 = smul.addr %s394, 4
      %s396 = smul.addr %s395, 8
      %s397 = scalar_lea.vmem %s0, %s396
      %p398 = pneg %p45
      %p399 = pneg %p42
      %p400 = pneg %p66
      %p401 = pneg %p63
      %p402 = pneg %p87
      %p403 = pneg %p84
      %p404 = pneg %p108
      %p405 = pneg %p105
      %p406 = pneg %p129
      %p407 = pneg %p126
      %p408 = pneg %p150
      %p409 = pneg %p147
      %p410 = pneg %p171
      %p411 = pneg %p168
      %p412 = pneg %p192
      %p413 = pneg %p189
      %p414 = pneg %p213
      %p415 = pneg %p210
      %p416 = pneg %p234
      %p417 = pneg %p231
      %p418 = pneg %p255
      %p419 = pneg %p252
      %p420 = pneg %p276
      %p421 = pneg %p273
      %p422 = pneg %p297
      %p423 = pneg %p294
      %p424 = pneg %p323
      %p425 = pneg %p320
      %p426 = scmp.lt.s32.totalorder %s24, 1
      %s427 = scalar_select %p426, %s24, 1
      %s428 = smul.addr %s427, 8
      %s429 = scalar_lea.vmem %s13, %s428
      %p430 = scmp.lt.s32.totalorder %s24, 1
      %s431 = scalar_select %p430, %s24, 1
      %s432 = smul.addr %s431, 4
      %s433 = smul.addr %s432, 8
      %s434 = scalar_lea.vmem %s0, %s433
      %p435 = scmp.lt.s32.totalorder %s24, 1
      %s436 = scalar_select %p435, %s24, 1
      %s437 = smul.addr %s436, 8
      %s438 = scalar_lea.vmem %s13, %s437
      %v440 = vld [vmem:[%s2] sm:$0xff]
      %v441 = vld [vmem:[%s2 + $0x8] sm:$0xff]
      %v442 = vld [vmem:[%s2 + $0x10] sm:$0xff]
      %v443 = vld [vmem:[%s2 + $0x18] sm:$0xff]
      %v444 = vld [vmem:[%s2 + $0x20] sm:$0x1]
      %v445 = vld [vmem:[%s2 + $0x28] sm:$0x1]
      %v446 = vld [vmem:[%s2 + $0x30] sm:$0x1]
      %v447 = vld [vmem:[%s2 + $0x38] sm:$0x1]
      %v448 = vld [vmem:[%s434] sm:$0x3f]
      %v449 = vld [vmem:[%s434 + $0x8] sm:$0x3f]
      %v450 = vld [vmem:[%s434 + $0x10] sm:$0x3f]
      %v451 = vld [vmem:[%s434 + $0x18] sm:$0x3f]
      %v452 = vld [vmem:[%s3] sm:$0x1]
      %v453 = vld [vmem:[%s3 + $0x1] sm:$0x1]
      %v454 = vld [vmem:[%s3 + $0x2] sm:$0x1]
      %v455 = vld [vmem:[%s3 + $0x3] sm:$0x1]
      %v456 = vld [vmem:[%s3 + $0x4] sm:$0x1]
      %v457 = vld [vmem:[%s3 + $0x5] sm:$0x1]
      %v458 = vld [vmem:[%s3 + $0x6] sm:$0x1]
      %v459 = vld [vmem:[%s3 + $0x7] sm:$0x1]
      %v460 = vld [vmem:[%s3 + $0x8] sm:$0x1]
      %461 = vrot.lane.b32.xlu0 %v448, 17
      %v462 = vpop.permute.xlu0 %461
      %463 = vrot.lane.b32.xlu0 %v449, 17
      %v464 = vpop.permute.xlu0 %463
      %465 = vrot.lane.b32.xlu0 %v450, 17
      %v466 = vpop.permute.xlu0 %465
      %467 = vrot.lane.b32.xlu0 %v451, 17
      %v468 = vpop.permute.xlu0 %467
      %v469 = vlaneseq
      %v470 = vand.u32 %v469, 127
      %vm471 = vcmp.lt.s32.totalorder %v470, 17
      %v472 = vsel %vm471, %v466, %v468
      %v473 = vsel %vm471, %v464, %v466
      %v474 = vsel %vm471, %v462, %v464
      %v475 = vsel %vm471, %v468, %v462
      %v476 = vlaneseq
      %v477 = vshrl.u32 %v476, 7
      %v478 = vsub.s32 0, %v477
      %v479 = vrot.slane %v440, %v478
      %v480 = vlaneseq
      %v481 = vshrl.u32 %v480, 7
      %v482 = vsub.s32 0, %v481
      %v483 = vrot.slane %v441, %v482
      %v484 = vlaneseq
      %v485 = vshrl.u32 %v484, 7
      %v486 = vsub.s32 0, %v485
      %v487 = vrot.slane %v442, %v486
      %v488 = vlaneseq
      %v489 = vshrl.u32 %v488, 7
      %v490 = vsub.s32 0, %v489
      %v491 = vrot.slane %v443, %v490
      %v492 = vmul.f32 %v475, %v479
      %v493 = vmul.f32 %v474, %v483
      %v494 = vmul.f32 %v473, %v487
      %v495 = vmul.f32 %v472, %v491
      %v496 = vpack.c.bf16 %v492, %v492
      %v497 = vpack.c.bf16 %v493, %v493
      %v498 = vpack.c.bf16 %v494, %v494
      %v499 = vpack.c.bf16 %v495, %v495
      %500 = vrot.lane.b32.xlu0 %v448, 16
      %v501 = vpop.permute.xlu0 %500
      %502 = vrot.lane.b32.xlu0 %v449, 16
      %v503 = vpop.permute.xlu0 %502
      %504 = vrot.lane.b32.xlu0 %v450, 16
      %v505 = vpop.permute.xlu0 %504
      %506 = vrot.lane.b32.xlu0 %v451, 16
      %v507 = vpop.permute.xlu0 %506
      %vm508 = vcmp.lt.s32.totalorder %v470, 16
      %v509 = vsel %vm508, %v505, %v507
      %v510 = vsel %vm508, %v503, %v505
      %v511 = vsel %vm508, %v501, %v503
      %v512 = vsel %vm508, %v507, %v501
      %v513 = vlaneseq
      %v514 = vshrl.u32 %v513, 7
      %v515 = vsub.s32 1, %v514
      %v516 = vrot.slane %v440, %v515
      %v517 = vlaneseq
      %v518 = vshrl.u32 %v517, 7
      %v519 = vsub.s32 1, %v518
      %v520 = vrot.slane %v441, %v519
      %v521 = vlaneseq
      %v522 = vshrl.u32 %v521, 7
      %v523 = vsub.s32 1, %v522
      %v524 = vrot.slane %v442, %v523
      %v525 = vlaneseq
      %v526 = vshrl.u32 %v525, 7
      %v527 = vsub.s32 1, %v526
      %v528 = vrot.slane %v443, %v527
      %v529 = vmul.f32 %v512, %v516
      %v530 = vmul.f32 %v511, %v520
      %v531 = vmul.f32 %v510, %v524
      %v532 = vmul.f32 %v509, %v528
      %v533 = vpack.c.bf16 %v529, %v529
      %v534 = vpack.c.bf16 %v530, %v530
      %v535 = vpack.c.bf16 %v531, %v531
      %v536 = vpack.c.bf16 %v532, %v532
      %vm537 = vcmask 48128
      %v539 = vsel %vm537, %v453, 0
      %vm541 = vcmask 1042432
      %v543 = vsel %vm541, %v533, 0
      %v546 = vsel %vm541, %v534, 0
      %v549 = vsel %vm541, %v535, 0
      %v552 = vsel %vm541, %v536, 0
      %554 = vmatprep.subr.bf16.mxu0 %v546
      %555 = vmatpush1.bf16.msra.mxu0 %v543
      %556 = vmatprep.subr.bf16.mxu0 0
      %557 = vmatpush1.bf16.msra.mxu0 0
      %558 = vmatprep.subr.bf16.mxu0 0
      %559 = vmatpush1.bf16.msra.mxu0 0
      %560 = vmatprep.subr.bf16.mxu0 0
      %561 = vmatpush1.bf16.msra.mxu0 0
      %562 = vmatprep.subr.bf16.mxu0 0
      %563 = vmatpush1.bf16.msra.mxu0 0
      %564 = vmatprep.subr.bf16.mxu0 0
      %565 = vmatpush1.bf16.msra.mxu0 0
      %566 = vmatprep.subr.bf16.mxu0 0
      %567 = vmatpush1.bf16.msra.mxu0 0
      %568 = vmatprep.subr.bf16.mxu0 0
      %569 = vmatpush1.bf16.msra.mxu0 0
      %570 = vmatprep.subr.bf16.mxu0 0
      %571 = vmatpush1.bf16.msra.mxu0 0
      %572 = vmatprep.subr.bf16.mxu0 0
      %573 = vmatpush1.bf16.msra.mxu0 0
      %574 = vmatprep.subr.bf16.mxu0 0
      %575 = vmatpush1.bf16.msra.mxu0 0
      %576 = vmatprep.subr.bf16.mxu0 0
      %577 = vmatpush1.bf16.msra.mxu0 0
      %578 = vmatprep.subr.bf16.mxu0 0
      %579 = vmatpush1.bf16.msra.mxu0 0
      %580 = vmatprep.subr.bf16.mxu0 0
      %581 = vmatpush1.bf16.msra.mxu0 0
      %582 = vmatprep.subr.bf16.mxu0 0
      %583 = vmatpush1.bf16.msra.mxu0 0
      %584 = vmatprep.subr.bf16.mxu0 0
      %585 = vmatpush1.bf16.msra.mxu0 0
      %586 = vmatprep.mubr.bf16.mxu0 0
      %587 = vmatmul.mubr.bf16.gmra.mrb[0].mxu0 %v539
      %v588 = vpop.f32.mrb[0].mxu0
      %v589 = vadd.f32 0.0, %v588
      %v590 = vpop.f32.mrb[0].mxu0
      %v591 = vadd.f32 0.0, %v590
      %v592 = vpop.f32.mrb[0].mxu0
      %v593 = vpop.f32.mrb[0].mxu0
      %594 = vdwg.mxu0
      %595 = vmatprep.subr.bf16.mxu0 %v552
      %596 = vmatpush1.bf16.msra.mxu0 %v549
      %597 = vmatprep.subr.bf16.mxu0 0
      %598 = vmatpush1.bf16.msra.mxu0 0
      %599 = vmatprep.subr.bf16.mxu0 0
      %600 = vmatpush1.bf16.msra.mxu0 0
      %601 = vmatprep.subr.bf16.mxu0 0
      %602 = vmatpush1.bf16.msra.mxu0 0
      %603 = vmatprep.subr.bf16.mxu0 0
      %604 = vmatpush1.bf16.msra.mxu0 0
      %605 = vmatprep.subr.bf16.mxu0 0
      %606 = vmatpush1.bf16.msra.mxu0 0
      %607 = vmatprep.subr.bf16.mxu0 0
      %608 = vmatpush1.bf16.msra.mxu0 0
      %609 = vmatprep.subr.bf16.mxu0 0
      %610 = vmatpush1.bf16.msra.mxu0 0
      %611 = vmatprep.subr.bf16.mxu0 0
      %612 = vmatpush1.bf16.msra.mxu0 0
      %613 = vmatprep.subr.bf16.mxu0 0
      %614 = vmatpush1.bf16.msra.mxu0 0
      %615 = vmatprep.subr.bf16.mxu0 0
      %616 = vmatpush1.bf16.msra.mxu0 0
      %617 = vmatprep.subr.bf16.mxu0 0
      %618 = vmatpush1.bf16.msra.mxu0 0
      %619 = vmatprep.subr.bf16.mxu0 0
      %620 = vmatpush1.bf16.msra.mxu0 0
      %621 = vmatprep.subr.bf16.mxu0 0
      %622 = vmatpush1.bf16.msra.mxu0 0
      %623 = vmatprep.subr.bf16.mxu0 0
      %624 = vmatpush1.bf16.msra.mxu0 0
      %625 = vmatprep.subr.bf16.mxu0 0
      %626 = vmatpush1.bf16.msra.mxu0 0
      %627 = vmatprep.mubr.bf16.mxu0 0
      %628 = vmatmul.mubr.bf16.gmra.mrb[0].mxu0 %v539
      %v629 = vpop.f32.mrb[0].mxu0
      %v630 = vadd.f32 0.0, %v629
      %v631 = vpop.f32.mrb[0].mxu0
      %v632 = vadd.f32 0.0, %v631
      %v633 = vpop.f32.mrb[0].mxu0
      %v634 = vpop.f32.mrb[0].mxu0
      %635 = vdwg.mxu0
      %v637 = vsel %vm537, %v452, 0
      %v640 = vsel %vm541, %v496, 0
      %v643 = vsel %vm541, %v497, 0
      %v646 = vsel %vm541, %v498, 0
      %v649 = vsel %vm541, %v499, 0
      %651 = vmatprep.subr.bf16.mxu0 %v643
      %652 = vmatpush1.bf16.msra.mxu0 %v640
      %653 = vmatprep.subr.bf16.mxu0 0
      %654 = vmatpush1.bf16.msra.mxu0 0
      %655 = vmatprep.subr.bf16.mxu0 0
      %656 = vmatpush1.bf16.msra.mxu0 0
      %657 = vmatprep.subr.bf16.mxu0 0
      %658 = vmatpush1.bf16.msra.mxu0 0
      %659 = vmatprep.subr.bf16.mxu0 0
      %660 = vmatpush1.bf16.msra.mxu0 0
      %661 = vmatprep.subr.bf16.mxu0 0
      %662 = vmatpush1.bf16.msra.mxu0 0
      %663 = vmatprep.subr.bf16.mxu0 0
      %664 = vmatpush1.bf16.msra.mxu0 0
      %665 = vmatprep.subr.bf16.mxu0 0
      %666 = vmatpush1.bf16.msra.mxu0 0
      %667 = vmatprep.subr.bf16.mxu0 0
      %668 = vmatpush1.bf16.msra.mxu0 0
      %669 = vmatprep.subr.bf16.mxu0 0
      %670 = vmatpush1.bf16.msra.mxu0 0
      %671 = vmatprep.subr.bf16.mxu0 0
      %672 = vmatpush1.bf16.msra.mxu0 0
      %673 = vmatprep.subr.bf16.mxu0 0
      %674 = vmatpush1.bf16.msra.mxu0 0
      %675 = vmatprep.subr.bf16.mxu0 0
      %676 = vmatpush1.bf16.msra.mxu0 0
      %677 = vmatprep.subr.bf16.mxu0 0
      %678 = vmatpush1.bf16.msra.mxu0 0
      %679 = vmatprep.subr.bf16.mxu0 0
      %680 = vmatpush1.bf16.msra.mxu0 0
      %681 = vmatprep.subr.bf16.mxu0 0
      %682 = vmatpush1.bf16.msra.mxu0 0
      %683 = vmatprep.mubr.bf16.mxu0 0
      %684 = vmatmul.mubr.bf16.gmra.mrb[0].mxu0 %v637
      %v685 = vpop.f32.mrb[0].mxu0
      %v686 = vadd.f32 %v589, %v685
      %v687 = vpop.f32.mrb[0].mxu0
      %v688 = vadd.f32 %v591, %v687
      %v689 = vpop.f32.mrb[0].mxu0
      %v690 = vpop.f32.mrb[0].mxu0
      %691 = vdwg.mxu0
      %692 = vmatprep.subr.bf16.mxu0 %v649
      %693 = vmatpush1.bf16.msra.mxu0 %v646
      %694 = vmatprep.subr.bf16.mxu0 0
      %695 = vmatpush1.bf16.msra.mxu0 0
      %696 = vmatprep.subr.bf16.mxu0 0
      %697 = vmatpush1.bf16.msra.mxu0 0
      %698 = vmatprep.subr.bf16.mxu0 0
      %699 = vmatpush1.bf16.msra.mxu0 0
      %700 = vmatprep.subr.bf16.mxu0 0
      %701 = vmatpush1.bf16.msra.mxu0 0
      %702 = vmatprep.subr.bf16.mxu0 0
      %703 = vmatpush1.bf16.msra.mxu0 0
      %704 = vmatprep.subr.bf16.mxu0 0
      %705 = vmatpush1.bf16.msra.mxu0 0
      %706 = vmatprep.subr.bf16.mxu0 0
      %707 = vmatpush1.bf16.msra.mxu0 0
      %708 = vmatprep.subr.bf16.mxu0 0
      %709 = vmatpush1.bf16.msra.mxu0 0
      %710 = vmatprep.subr.bf16.mxu0 0
      %711 = vmatpush1.bf16.msra.mxu0 0
      %712 = vmatprep.subr.bf16.mxu0 0
      %713 = vmatpush1.bf16.msra.mxu0 0
      %714 = vmatprep.subr.bf16.mxu0 0
      %715 = vmatpush1.bf16.msra.mxu0 0
      %716 = vmatprep.subr.bf16.mxu0 0
      %717 = vmatpush1.bf16.msra.mxu0 0
      %718 = vmatprep.subr.bf16.mxu0 0
      %719 = vmatpush1.bf16.msra.mxu0 0
      %720 = vmatprep.subr.bf16.mxu0 0
      %721 = vmatpush1.bf16.msra.mxu0 0
      %722 = vmatprep.subr.bf16.mxu0 0
      %723 = vmatpush1.bf16.msra.mxu0 0
      %724 = vmatprep.mubr.bf16.mxu0 0
      %725 = vmatmul.mubr.bf16.gmra.mrb[0].mxu0 %v637
      %v726 = vpop.f32.mrb[0].mxu0
      %v727 = vadd.f32 %v630, %v726
      %v728 = vpop.f32.mrb[0].mxu0
      %v729 = vadd.f32 %v632, %v728
      %v730 = vpop.f32.mrb[0].mxu0
      %v731 = vpop.f32.mrb[0].mxu0
      %732 = vdwg.mxu0
      %733 = vrot.lane.b32.xlu0 %v448, 15
      %v734 = vpop.permute.xlu0 %733
      %735 = vrot.lane.b32.xlu0 %v449, 15
      %v736 = vpop.permute.xlu0 %735
      %737 = vrot.lane.b32.xlu0 %v450, 15
      %v738 = vpop.permute.xlu0 %737
      %739 = vrot.lane.b32.xlu0 %v451, 15
      %v740 = vpop.permute.xlu0 %739
      %vm741 = vcmp.lt.s32.totalorder %v470, 15
      %v742 = vsel %vm741, %v738, %v740
      %v743 = vsel %vm741, %v736, %v738
      %v744 = vsel %vm741, %v734, %v736
      %v745 = vsel %vm741, %v740, %v734
      %v746 = vlaneseq
      %v747 = vshrl.u32 %v746, 7
      %v748 = vsub.s32 2, %v747
      %v749 = vrot.slane %v440, %v748
      %v750 = vlaneseq
      %v751 = vshrl.u32 %v750, 7
      %v752 = vsub.s32 2, %v751
      %v753 = vrot.slane %v441, %v752
      %v754 = vlaneseq
      %v755 = vshrl.u32 %v754, 7
      %v756 = vsub.s32 2, %v755
      %v757 = vrot.slane %v442, %v756
      %v758 = vlaneseq
      %v759 = vshrl.u32 %v758, 7
      %v760 = vsub.s32 2, %v759
      %v761 = vrot.slane %v443, %v760
      %v762 = vmul.f32 %v745, %v749
      %v763 = vmul.f32 %v744, %v753
      %v764 = vmul.f32 %v743, %v757
      %v765 = vmul.f32 %v742, %v761
      %v766 = vpack.c.bf16 %v762, %v762
      %v767 = vpack.c.bf16 %v763, %v763
      %v768 = vpack.c.bf16 %v764, %v764
      %v769 = vpack.c.bf16 %v765, %v765
      %v771 = vsel %vm537, %v454, 0
      %v774 = vsel %vm541, %v766, 0
      %v777 = vsel %vm541, %v767, 0
      %v780 = vsel %vm541, %v768, 0
      %v783 = vsel %vm541, %v769, 0
      %785 = vmatprep.subr.bf16.mxu0 %v777
      %786 = vmatpush1.bf16.msra.mxu0 %v774
      %787 = vmatprep.subr.bf16.mxu0 0
      %788 = vmatpush1.bf16.msra.mxu0 0
      %789 = vmatprep.subr.bf16.mxu0 0
      %790 = vmatpush1.bf16.msra.mxu0 0
      %791 = vmatprep.subr.bf16.mxu0 0
      %792 = vmatpush1.bf16.msra.mxu0 0
      %793 = vmatprep.subr.bf16.mxu0 0
      %794 = vmatpush1.bf16.msra.mxu0 0
      %795 = vmatprep.subr.bf16.mxu0 0
      %796 = vmatpush1.bf16.msra.mxu0 0
      %797 = vmatprep.subr.bf16.mxu0 0
      %798 = vmatpush1.bf16.msra.mxu0 0
      %799 = vmatprep.subr.bf16.mxu0 0
      %800 = vmatpush1.bf16.msra.mxu0 0
      %801 = vmatprep.subr.bf16.mxu0 0
      %802 = vmatpush1.bf16.msra.mxu0 0
      %803 = vmatprep.subr.bf16.mxu0 0
      %804 = vmatpush1.bf16.msra.mxu0 0
      %805 = vmatprep.subr.bf16.mxu0 0
      %806 = vmatpush1.bf16.msra.mxu0 0
      %807 = vmatprep.subr.bf16.mxu0 0
      %808 = vmatpush1.bf16.msra.mxu0 0
      %809 = vmatprep.subr.bf16.mxu0 0
      %810 = vmatpush1.bf16.msra.mxu0 0
      %811 = vmatprep.subr.bf16.mxu0 0
      %812 = vmatpush1.bf16.msra.mxu0 0
      %813 = vmatprep.subr.bf16.mxu0 0
      %814 = vmatpush1.bf16.msra.mxu0 0
      %815 = vmatprep.subr.bf16.mxu0 0
      %816 = vmatpush1.bf16.msra.mxu0 0
      %817 = vmatprep.mubr.bf16.mxu0 0
      %818 = vmatmul.mubr.bf16.gmra.mrb[0].mxu0 %v771
      %v819 = vpop.f32.mrb[0].mxu0
      %v820 = vadd.f32 0.0, %v819
      %v821 = vpop.f32.mrb[0].mxu0
      %v822 = vadd.f32 0.0, %v821
      %v823 = vpop.f32.mrb[0].mxu0
      %v824 = vpop.f32.mrb[0].mxu0
      %825 = vdwg.mxu0
      %826 = vmatprep.subr.bf16.mxu0 %v783
      %827 = vmatpush1.bf16.msra.mxu0 %v780
      %828 = vmatprep.subr.bf16.mxu0 0
      %829 = vmatpush1.bf16.msra.mxu0 0
      %830 = vmatprep.subr.bf16.mxu0 0
      %831 = vmatpush1.bf16.msra.mxu0 0
      %832 = vmatprep.subr.bf16.mxu0 0
      %833 = vmatpush1.bf16.msra.mxu0 0
      %834 = vmatprep.subr.bf16.mxu0 0
      %835 = vmatpush1.bf16.msra.mxu0 0
      %836 = vmatprep.subr.bf16.mxu0 0
      %837 = vmatpush1.bf16.msra.mxu0 0
      %838 = vmatprep.subr.bf16.mxu0 0
      %839 = vmatpush1.bf16.msra.mxu0 0
      %840 = vmatprep.subr.bf16.mxu0 0
      %841 = vmatpush1.bf16.msra.mxu0 0
      %842 = vmatprep.subr.bf16.mxu0 0
      %843 = vmatpush1.bf16.msra.mxu0 0
      %844 = vmatprep.subr.bf16.mxu0 0
      %845 = vmatpush1.bf16.msra.mxu0 0
      %846 = vmatprep.subr.bf16.mxu0 0
      %847 = vmatpush1.bf16.msra.mxu0 0
      %848 = vmatprep.subr.bf16.mxu0 0
      %849 = vmatpush1.bf16.msra.mxu0 0
      %850 = vmatprep.subr.bf16.mxu0 0
      %851 = vmatpush1.bf16.msra.mxu0 0
      %852 = vmatprep.subr.bf16.mxu0 0
      %853 = vmatpush1.bf16.msra.mxu0 0
      %854 = vmatprep.subr.bf16.mxu0 0
      %855 = vmatpush1.bf16.msra.mxu0 0
      %856 = vmatprep.subr.bf16.mxu0 0
      %857 = vmatpush1.bf16.msra.mxu0 0
      %858 = vmatprep.mubr.bf16.mxu0 0
      %859 = vmatmul.mubr.bf16.gmra.mrb[0].mxu0 %v771
      %v860 = vpop.f32.mrb[0].mxu0
      %v861 = vadd.f32 0.0, %v860
      %v862 = vpop.f32.mrb[0].mxu0
      %v863 = vadd.f32 0.0, %v862
      %v864 = vpop.f32.mrb[0].mxu0
      %v865 = vpop.f32.mrb[0].mxu0
      %866 = vdwg.mxu0
      %v867 = vadd.f32 %v686, %v820
      %v868 = vadd.f32 %v688, %v822
      %v869 = vadd.f32 %v727, %v861
      %v870 = vadd.f32 %v729, %v863
      %871 = vrot.lane.b32.xlu0 %v448, 1
      %v872 = vpop.permute.xlu0 %871
      %873 = vrot.lane.b32.xlu0 %v449, 1
      %v874 = vpop.permute.xlu0 %873
      %875 = vrot.lane.b32.xlu0 %v450, 1
      %v876 = vpop.permute.xlu0 %875
      %877 = vrot.lane.b32.xlu0 %v451, 1
      %v878 = vpop.permute.xlu0 %877
      %vm879 = vcmp.lt.s32.totalorder %v470, 1
      %v880 = vsel %vm879, %v876, %v878
      %v881 = vsel %vm879, %v874, %v876
      %v882 = vsel %vm879, %v872, %v874
      %v883 = vsel %vm879, %v878, %v872
      %v884 = vlaneseq
      %v885 = vshrl.u32 %v884, 7
      %v886 = vsub.s32 3, %v885
      %v887 = vrot.slane %v440, %v886
      %v888 = vlaneseq
      %v889 = vshrl.u32 %v888, 7
      %v890 = vsub.s32 3, %v889
      %v891 = vrot.slane %v441, %v890
      %v892 = vlaneseq
      %v893 = vshrl.u32 %v892, 7
      %v894 = vsub.s32 3, %v893
      %v895 = vrot.slane %v442, %v894
      %v896 = vlaneseq
      %v897 = vshrl.u32 %v896, 7
      %v898 = vsub.s32 3, %v897
      %v899 = vrot.slane %v443, %v898
      %v900 = vmul.f32 %v883, %v887
      %v901 = vmul.f32 %v882, %v891
      %v902 = vmul.f32 %v881, %v895
      %v903 = vmul.f32 %v880, %v899
      %v904 = vpack.c.bf16 %v900, %v900
      %v905 = vpack.c.bf16 %v901, %v901
      %v906 = vpack.c.bf16 %v902, %v902
      %v907 = vpack.c.bf16 %v903, %v903
      %v909 = vsel %vm537, %v455, 0
      %v912 = vsel %vm541, %v904, 0
      %v915 = vsel %vm541, %v905, 0
      %v918 = vsel %vm541, %v906, 0
      %v921 = vsel %vm541, %v907, 0
      %923 = vmatprep.subr.bf16.mxu0 %v915
      %924 = vmatpush1.bf16.msra.mxu0 %v912
      %925 = vmatprep.subr.bf16.mxu0 0
      %926 = vmatpush1.bf16.msra.mxu0 0
      %927 = vmatprep.subr.bf16.mxu0 0
      %928 = vmatpush1.bf16.msra.mxu0 0
      %929 = vmatprep.subr.bf16.mxu0 0
      %930 = vmatpush1.bf16.msra.mxu0 0
      %931 = vmatprep.subr.bf16.mxu0 0
      %932 = vmatpush1.bf16.msra.mxu0 0
      %933 = vmatprep.subr.bf16.mxu0 0
      %934 = vmatpush1.bf16.msra.mxu0 0
      %935 = vmatprep.subr.bf16.mxu0 0
      %936 = vmatpush1.bf16.msra.mxu0 0
      %937 = vmatprep.subr.bf16.mxu0 0
      %938 = vmatpush1.bf16.msra.mxu0 0
      %939 = vmatprep.subr.bf16.mxu0 0
      %940 = vmatpush1.bf16.msra.mxu0 0
      %941 = vmatprep.subr.bf16.mxu0 0
      %942 = vmatpush1.bf16.msra.mxu0 0
      %943 = vmatprep.subr.bf16.mxu0 0
      %944 = vmatpush1.bf16.msra.mxu0 0
      %945 = vmatprep.subr.bf16.mxu0 0
      %946 = vmatpush1.bf16.msra.mxu0 0
      %947 = vmatprep.subr.bf16.mxu0 0
      %948 = vmatpush1.bf16.msra.mxu0 0
      %949 = vmatprep.subr.bf16.mxu0 0
      %950 = vmatpush1.bf16.msra.mxu0 0
      %951 = vmatprep.subr.bf16.mxu0 0
      %952 = vmatpush1.bf16.msra.mxu0 0
      %953 = vmatprep.subr.bf16.mxu0 0
      %954 = vmatpush1.bf16.msra.mxu0 0
      %955 = vmatprep.mubr.bf16.mxu0 0
      %956 = vmatmul.mubr.bf16.gmra.mrb[0].mxu0 %v909
      %v957 = vpop.f32.mrb[0].mxu0
      %v958 = vadd.f32 0.0, %v957
      %v959 = vpop.f32.mrb[0].mxu0
      %v960 = vadd.f32 0.0, %v959
      %v961 = vpop.f32.mrb[0].mxu0
      %v962 = vpop.f32.mrb[0].mxu0
      %963 = vdwg.mxu0
      %964 = vmatprep.subr.bf16.mxu0 %v921
      %965 = vmatpush1.bf16.msra.mxu0 %v918
      %966 = vmatprep.subr.bf16.mxu0 0
      %967 = vmatpush1.bf16.msra.mxu0 0
      %968 = vmatprep.subr.bf16.mxu0 0
      %969 = vmatpush1.bf16.msra.mxu0 0
      %970 = vmatprep.subr.bf16.mxu0 0
      %971 = vmatpush1.bf16.msra.mxu0 0
      %972 = vmatprep.subr.bf16.mxu0 0
      %973 = vmatpush1.bf16.msra.mxu0 0
      %974 = vmatprep.subr.bf16.mxu0 0
      %975 = vmatpush1.bf16.msra.mxu0 0
      %976 = vmatprep.subr.bf16.mxu0 0
      %977 = vmatpush1.bf16.msra.mxu0 0
      %978 = vmatprep.subr.bf16.mxu0 0
      %979 = vmatpush1.bf16.msra.mxu0 0
      %980 = vmatprep.subr.bf16.mxu0 0
      %981 = vmatpush1.bf16.msra.mxu0 0
      %982 = vmatprep.subr.bf16.mxu0 0
      %983 = vmatpush1.bf16.msra.mxu0 0
      %984 = vmatprep.subr.bf16.mxu0 0
      %985 = vmatpush1.bf16.msra.mxu0 0
      %986 = vmatprep.subr.bf16.mxu0 0
      %987 = vmatpush1.bf16.msra.mxu0 0
      %988 = vmatprep.subr.bf16.mxu0 0
      %989 = vmatpush1.bf16.msra.mxu0 0
      %990 = vmatprep.subr.bf16.mxu0 0
      %991 = vmatpush1.bf16.msra.mxu0 0
      %992 = vmatprep.subr.bf16.mxu0 0
      %993 = vmatpush1.bf16.msra.mxu0 0
      %994 = vmatprep.subr.bf16.mxu0 0
      %995 = vmatpush1.bf16.msra.mxu0 0
      %996 = vmatprep.mubr.bf16.mxu0 0
      %997 = vmatmul.mubr.bf16.gmra.mrb[0].mxu0 %v909
      %v998 = vpop.f32.mrb[0].mxu0
      %v999 = vadd.f32 0.0, %v998
      %v1000 = vpop.f32.mrb[0].mxu0
      %v1001 = vadd.f32 0.0, %v1000
      %v1002 = vpop.f32.mrb[0].mxu0
      %v1003 = vpop.f32.mrb[0].mxu0
      %1004 = vdwg.mxu0
      %v1005 = vadd.f32 %v867, %v958
      %v1006 = vadd.f32 %v868, %v960
      %v1007 = vadd.f32 %v869, %v999
      %v1008 = vadd.f32 %v870, %v1001
      %v1009 = vpack.c.bf16 %v448, %v448
      %v1010 = vpack.c.bf16 %v449, %v449
      %v1011 = vpack.c.bf16 %v450, %v450
      %v1012 = vpack.c.bf16 %v451, %v451
      %v1014 = vsel %vm537, %v456, 0
      %v1017 = vsel %vm541, %v1009, 0
      %v1020 = vsel %vm541, %v1010, 0
      %v1023 = vsel %vm541, %v1011, 0
      %v1026 = vsel %vm541, %v1012, 0
      %1028 = vmatprep.subr.bf16.mxu0 %v1020
      %1029 = vmatpush1.bf16.msra.mxu0 %v1017
      %1030 = vmatprep.subr.bf16.mxu0 0
      %1031 = vmatpush1.bf16.msra.mxu0 0
      %1032 = vmatprep.subr.bf16.mxu0 0
      %1033 = vmatpush1.bf16.msra.mxu0 0
      %1034 = vmatprep.subr.bf16.mxu0 0
      %1035 = vmatpush1.bf16.msra.mxu0 0
      %1036 = vmatprep.subr.bf16.mxu0 0
      %1037 = vmatpush1.bf16.msra.mxu0 0
      %1038 = vmatprep.subr.bf16.mxu0 0
      %1039 = vmatpush1.bf16.msra.mxu0 0
      %1040 = vmatprep.subr.bf16.mxu0 0
      %1041 = vmatpush1.bf16.msra.mxu0 0
      %1042 = vmatprep.subr.bf16.mxu0 0
      %1043 = vmatpush1.bf16.msra.mxu0 0
      %1044 = vmatprep.subr.bf16.mxu0 0
      %1045 = vmatpush1.bf16.msra.mxu0 0
      %1046 = vmatprep.subr.bf16.mxu0 0
      %1047 = vmatpush1.bf16.msra.mxu0 0
      %1048 = vmatprep.subr.bf16.mxu0 0
      %1049 = vmatpush1.bf16.msra.mxu0 0
      %1050 = vmatprep.subr.bf16.mxu0 0
      %1051 = vmatpush1.bf16.msra.mxu0 0
      %1052 = vmatprep.subr.bf16.mxu0 0
      %1053 = vmatpush1.bf16.msra.mxu0 0
      %1054 = vmatprep.subr.bf16.mxu0 0
      %1055 = vmatpush1.bf16.msra.mxu0 0
      %1056 = vmatprep.subr.bf16.mxu0 0
      %1057 = vmatpush1.bf16.msra.mxu0 0
      %1058 = vmatprep.subr.bf16.mxu0 0
      %1059 = vmatpush1.bf16.msra.mxu0 0
      %1060 = vmatprep.mubr.bf16.mxu0 0
      %1061 = vmatmul.mubr.bf16.gmra.mrb[0].mxu0 %v1014
      %v1062 = vpop.f32.mrb[0].mxu0
      %v1063 = vadd.f32 0.0, %v1062
      %v1064 = vpop.f32.mrb[0].mxu0
      %v1065 = vadd.f32 0.0, %v1064
      %v1066 = vpop.f32.mrb[0].mxu0
      %v1067 = vpop.f32.mrb[0].mxu0
      %1068 = vdwg.mxu0
      %1069 = vmatprep.subr.bf16.mxu0 %v1026
      %1070 = vmatpush1.bf16.msra.mxu0 %v1023
      %1071 = vmatprep.subr.bf16.mxu0 0
      %1072 = vmatpush1.bf16.msra.mxu0 0
      %1073 = vmatprep.subr.bf16.mxu0 0
      %1074 = vmatpush1.bf16.msra.mxu0 0
      %1075 = vmatprep.subr.bf16.mxu0 0
      %1076 = vmatpush1.bf16.msra.mxu0 0
      %1077 = vmatprep.subr.bf16.mxu0 0
      %1078 = vmatpush1.bf16.msra.mxu0 0
      %1079 = vmatprep.subr.bf16.mxu0 0
      %1080 = vmatpush1.bf16.msra.mxu0 0
      %1081 = vmatprep.subr.bf16.mxu0 0
      %1082 = vmatpush1.bf16.msra.mxu0 0
      %1083 = vmatprep.subr.bf16.mxu0 0
      %1084 = vmatpush1.bf16.msra.mxu0 0
      %1085 = vmatprep.subr.bf16.mxu0 0
      %1086 = vmatpush1.bf16.msra.mxu0 0
      %1087 = vmatprep.subr.bf16.mxu0 0
      %1088 = vmatpush1.bf16.msra.mxu0 0
      %1089 = vmatprep.subr.bf16.mxu0 0
      %1090 = vmatpush1.bf16.msra.mxu0 0
      %1091 = vmatprep.subr.bf16.mxu0 0
      %1092 = vmatpush1.bf16.msra.mxu0 0
      %1093 = vmatprep.subr.bf16.mxu0 0
      %1094 = vmatpush1.bf16.msra.mxu0 0
      %1095 = vmatprep.subr.bf16.mxu0 0
      %1096 = vmatpush1.bf16.msra.mxu0 0
      %1097 = vmatprep.subr.bf16.mxu0 0
      %1098 = vmatpush1.bf16.msra.mxu0 0
      %1099 = vmatprep.subr.bf16.mxu0 0
      %1100 = vmatpush1.bf16.msra.mxu0 0
      %1101 = vmatprep.mubr.bf16.mxu0 0
      %1102 = vmatmul.mubr.bf16.gmra.mrb[0].mxu0 %v1014
      %v1103 = vpop.f32.mrb[0].mxu0
      %v1104 = vadd.f32 0.0, %v1103
      %v1105 = vpop.f32.mrb[0].mxu0
      %v1106 = vadd.f32 0.0, %v1105
      %v1107 = vpop.f32.mrb[0].mxu0
      %v1108 = vpop.f32.mrb[0].mxu0
      %1109 = vdwg.mxu0
      %v1110 = vadd.f32 %v1005, %v1063
      %v1111 = vadd.f32 %v1006, %v1065
      %v1112 = vadd.f32 %v1007, %v1104
      %v1113 = vadd.f32 %v1008, %v1106
      %1114 = vrot.lane.b32.xlu0 %v448, 127
      %v1115 = vpop.permute.xlu0 %1114
      %1116 = vrot.lane.b32.xlu0 %v449, 127
      %v1117 = vpop.permute.xlu0 %1116
      %1118 = vrot.lane.b32.xlu0 %v450, 127
      %v1119 = vpop.permute.xlu0 %1118
      %1120 = vrot.lane.b32.xlu0 %v451, 127
      %v1121 = vpop.permute.xlu0 %1120
      %vm1122 = vcmp.lt.s32.totalorder %v470, 127
      %v1123 = vsel %vm1122, %v1119, %v1121
      %v1124 = vsel %vm1122, %v1117, %v1119
      %v1125 = vsel %vm1122, %v1115, %v1117
      %v1126 = vsel %vm1122, %v1121, %v1115
      %v1127 = vlaneseq
      %v1128 = vshrl.u32 %v1127, 7
      %v1129 = vsub.s32 5, %v1128
      %v1130 = vrot.slane %v440, %v1129
      %v1131 = vlaneseq
      %v1132 = vshrl.u32 %v1131, 7
      %v1133 = vsub.s32 5, %v1132
      %v1134 = vrot.slane %v441, %v1133
      %v1135 = vlaneseq
      %v1136 = vshrl.u32 %v1135, 7
      %v1137 = vsub.s32 5, %v1136
      %v1138 = vrot.slane %v442, %v1137
      %v1139 = vlaneseq
      %v1140 = vshrl.u32 %v1139, 7
      %v1141 = vsub.s32 5, %v1140
      %v1142 = vrot.slane %v443, %v1141
      %v1143 = vmul.f32 %v1125, %v1130
      %v1144 = vmul.f32 %v1124, %v1134
      %v1145 = vmul.f32 %v1123, %v1138
      %v1146 = vmul.f32 %v1126, %v1142
      %v1147 = vpack.c.bf16 %v1143, %v1143
      %v1148 = vpack.c.bf16 %v1144, %v1144
      %v1149 = vpack.c.bf16 %v1145, %v1145
      %v1150 = vpack.c.bf16 %v1146, %v1146
      %v1152 = vsel %vm537, %v457, 0
      %v1155 = vsel %vm541, %v1147, 0
      %v1158 = vsel %vm541, %v1148, 0
      %v1161 = vsel %vm541, %v1149, 0
      %v1164 = vsel %vm541, %v1150, 0
      %1166 = vmatprep.subr.bf16.mxu0 %v1158
      %1167 = vmatpush1.bf16.msra.mxu0 %v1155
      %1168 = vmatprep.subr.bf16.mxu0 0
      %1169 = vmatpush1.bf16.msra.mxu0 0
      %1170 = vmatprep.subr.bf16.mxu0 0
      %1171 = vmatpush1.bf16.msra.mxu0 0
      %1172 = vmatprep.subr.bf16.mxu0 0
      %1173 = vmatpush1.bf16.msra.mxu0 0
      %1174 = vmatprep.subr.bf16.mxu0 0
      %1175 = vmatpush1.bf16.msra.mxu0 0
      %1176 = vmatprep.subr.bf16.mxu0 0
      %1177 = vmatpush1.bf16.msra.mxu0 0
      %1178 = vmatprep.subr.bf16.mxu0 0
      %1179 = vmatpush1.bf16.msra.mxu0 0
      %1180 = vmatprep.subr.bf16.mxu0 0
      %1181 = vmatpush1.bf16.msra.mxu0 0
      %1182 = vmatprep.subr.bf16.mxu0 0
      %1183 = vmatpush1.bf16.msra.mxu0 0
      %1184 = vmatprep.subr.bf16.mxu0 0
      %1185 = vmatpush1.bf16.msra.mxu0 0
      %1186 = vmatprep.subr.bf16.mxu0 0
      %1187 = vmatpush1.bf16.msra.mxu0 0
      %1188 = vmatprep.subr.bf16.mxu0 0
      %1189 = vmatpush1.bf16.msra.mxu0 0
      %1190 = vmatprep.subr.bf16.mxu0 0
      %1191 = vmatpush1.bf16.msra.mxu0 0
      %1192 = vmatprep.subr.bf16.mxu0 0
      %1193 = vmatpush1.bf16.msra.mxu0 0
      %1194 = vmatprep.subr.bf16.mxu0 0
      %1195 = vmatpush1.bf16.msra.mxu0 0
      %1196 = vmatprep.subr.bf16.mxu0 0
      %1197 = vmatpush1.bf16.msra.mxu0 0
      %1198 = vmatprep.mubr.bf16.mxu0 0
      %1199 = vmatmul.mubr.bf16.gmra.mrb[0].mxu0 %v1152
      %v1200 = vpop.f32.mrb[0].mxu0
      %v1201 = vadd.f32 0.0, %v1200
      %v1202 = vpop.f32.mrb[0].mxu0
      %v1203 = vadd.f32 0.0, %v1202
      %v1204 = vpop.f32.mrb[0].mxu0
      %v1205 = vpop.f32.mrb[0].mxu0
      %1206 = vdwg.mxu0
      %1207 = vmatprep.subr.bf16.mxu0 %v1164
      %1208 = vmatpush1.bf16.msra.mxu0 %v1161
      %1209 = vmatprep.subr.bf16.mxu0 0
      %1210 = vmatpush1.bf16.msra.mxu0 0
      %1211 = vmatprep.subr.bf16.mxu0 0
      %1212 = vmatpush1.bf16.msra.mxu0 0
      %1213 = vmatprep.subr.bf16.mxu0 0
      %1214 = vmatpush1.bf16.msra.mxu0 0
      %1215 = vmatprep.subr.bf16.mxu0 0
      %1216 = vmatpush1.bf16.msra.mxu0 0
      %1217 = vmatprep.subr.bf16.mxu0 0
      %1218 = vmatpush1.bf16.msra.mxu0 0
      %1219 = vmatprep.subr.bf16.mxu0 0
      %1220 = vmatpush1.bf16.msra.mxu0 0
      %1221 = vmatprep.subr.bf16.mxu0 0
      %1222 = vmatpush1.bf16.msra.mxu0 0
      %1223 = vmatprep.subr.bf16.mxu0 0
      %1224 = vmatpush1.bf16.msra.mxu0 0
      %1225 = vmatprep.subr.bf16.mxu0 0
      %1226 = vmatpush1.bf16.msra.mxu0 0
      %1227 = vmatprep.subr.bf16.mxu0 0
      %1228 = vmatpush1.bf16.msra.mxu0 0
      %1229 = vmatprep.subr.bf16.mxu0 0
      %1230 = vmatpush1.bf16.msra.mxu0 0
      %1231 = vmatprep.subr.bf16.mxu0 0
      %1232 = vmatpush1.bf16.msra.mxu0 0
      %1233 = vmatprep.subr.bf16.mxu0 0
      %1234 = vmatpush1.bf16.msra.mxu0 0
      %1235 = vmatprep.subr.bf16.mxu0 0
      %1236 = vmatpush1.bf16.msra.mxu0 0
      %1237 = vmatprep.subr.bf16.mxu0 0
      %1238 = vmatpush1.bf16.msra.mxu0 0
      %1239 = vmatprep.mubr.bf16.mxu0 0
      %1240 = vmatmul.mubr.bf16.gmra.mrb[0].mxu0 %v1152
      %v1241 = vpop.f32.mrb[0].mxu0
      %v1242 = vadd.f32 0.0, %v1241
      %v1243 = vpop.f32.mrb[0].mxu0
      %v1244 = vadd.f32 0.0, %v1243
      %v1245 = vpop.f32.mrb[0].mxu0
      %v1246 = vpop.f32.mrb[0].mxu0
      %1247 = vdwg.mxu0
      %v1248 = vadd.f32 %v1110, %v1201
      %v1249 = vadd.f32 %v1111, %v1203
      %v1250 = vadd.f32 %v1112, %v1242
      %v1251 = vadd.f32 %v1113, %v1244
      %1252 = vrot.lane.b32.xlu0 %v448, 113
      %v1253 = vpop.permute.xlu0 %1252
      %1254 = vrot.lane.b32.xlu0 %v449, 113
      %v1255 = vpop.permute.xlu0 %1254
      %1256 = vrot.lane.b32.xlu0 %v450, 113
      %v1257 = vpop.permute.xlu0 %1256
      %1258 = vrot.lane.b32.xlu0 %v451, 113
      %v1259 = vpop.permute.xlu0 %1258
      %vm1260 = vcmp.lt.s32.totalorder %v470, 113
      %v1261 = vsel %vm1260, %v1257, %v1259
      %v1262 = vsel %vm1260, %v1255, %v1257
      %v1263 = vsel %vm1260, %v1253, %v1255
      %v1264 = vsel %vm1260, %v1259, %v1253
      %v1265 = vlaneseq
      %v1266 = vshrl.u32 %v1265, 7
      %v1267 = vsub.s32 6, %v1266
      %v1268 = vrot.slane %v440, %v1267
      %v1269 = vlaneseq
      %v1270 = vshrl.u32 %v1269, 7
      %v1271 = vsub.s32 6, %v1270
      %v1272 = vrot.slane %v441, %v1271
      %v1273 = vlaneseq
      %v1274 = vshrl.u32 %v1273, 7
      %v1275 = vsub.s32 6, %v1274
      %v1276 = vrot.slane %v442, %v1275
      %v1277 = vlaneseq
      %v1278 = vshrl.u32 %v1277, 7
      %v1279 = vsub.s32 6, %v1278
      %v1280 = vrot.slane %v443, %v1279
      %v1281 = vmul.f32 %v1263, %v1268
      %v1282 = vmul.f32 %v1262, %v1272
      %v1283 = vmul.f32 %v1261, %v1276
      %v1284 = vmul.f32 %v1264, %v1280
      %v1285 = vpack.c.bf16 %v1281, %v1281
      %v1286 = vpack.c.bf16 %v1282, %v1282
      %v1287 = vpack.c.bf16 %v1283, %v1283
      %v1288 = vpack.c.bf16 %v1284, %v1284
      %v1290 = vsel %vm537, %v458, 0
      %v1293 = vsel %vm541, %v1285, 0
      %v1296 = vsel %vm541, %v1286, 0
      %v1299 = vsel %vm541, %v1287, 0
      %v1302 = vsel %vm541, %v1288, 0
      %1304 = vmatprep.subr.bf16.mxu0 %v1296
      %1305 = vmatpush1.bf16.msra.mxu0 %v1293
      %1306 = vmatprep.subr.bf16.mxu0 0
      %1307 = vmatpush1.bf16.msra.mxu0 0
      %1308 = vmatprep.subr.bf16.mxu0 0
      %1309 = vmatpush1.bf16.msra.mxu0 0
      %1310 = vmatprep.subr.bf16.mxu0 0
      %1311 = vmatpush1.bf16.msra.mxu0 0
      %1312 = vmatprep.subr.bf16.mxu0 0
      %1313 = vmatpush1.bf16.msra.mxu0 0
      %1314 = vmatprep.subr.bf16.mxu0 0
      %1315 = vmatpush1.bf16.msra.mxu0 0
      %1316 = vmatprep.subr.bf16.mxu0 0
      %1317 = vmatpush1.bf16.msra.mxu0 0
      %1318 = vmatprep.subr.bf16.mxu0 0
      %1319 = vmatpush1.bf16.msra.mxu0 0
      %1320 = vmatprep.subr.bf16.mxu0 0
      %1321 = vmatpush1.bf16.msra.mxu0 0
      %1322 = vmatprep.subr.bf16.mxu0 0
      %1323 = vmatpush1.bf16.msra.mxu0 0
      %1324 = vmatprep.subr.bf16.mxu0 0
      %1325 = vmatpush1.bf16.msra.mxu0 0
      %1326 = vmatprep.subr.bf16.mxu0 0
      %1327 = vmatpush1.bf16.msra.mxu0 0
      %1328 = vmatprep.subr.bf16.mxu0 0
      %1329 = vmatpush1.bf16.msra.mxu0 0
      %1330 = vmatprep.subr.bf16.mxu0 0
      %1331 = vmatpush1.bf16.msra.mxu0 0
      %1332 = vmatprep.subr.bf16.mxu0 0
      %1333 = vmatpush1.bf16.msra.mxu0 0
      %1334 = vmatprep.subr.bf16.mxu0 0
      %1335 = vmatpush1.bf16.msra.mxu0 0
      %1336 = vmatprep.mubr.bf16.mxu0 0
      %1337 = vmatmul.mubr.bf16.gmra.mrb[0].mxu0 %v1290
      %v1338 = vpop.f32.mrb[0].mxu0
      %v1339 = vadd.f32 0.0, %v1338
      %v1340 = vpop.f32.mrb[0].mxu0
      %v1341 = vadd.f32 0.0, %v1340
      %v1342 = vpop.f32.mrb[0].mxu0
      %v1343 = vpop.f32.mrb[0].mxu0
      %1344 = vdwg.mxu0
      %1345 = vmatprep.subr.bf16.mxu0 %v1302
      %1346 = vmatpush1.bf16.msra.mxu0 %v1299
      %1347 = vmatprep.subr.bf16.mxu0 0
      %1348 = vmatpush1.bf16.msra.mxu0 0
      %1349 = vmatprep.subr.bf16.mxu0 0
      %1350 = vmatpush1.bf16.msra.mxu0 0
      %1351 = vmatprep.subr.bf16.mxu0 0
      %1352 = vmatpush1.bf16.msra.mxu0 0
      %1353 = vmatprep.subr.bf16.mxu0 0
      %1354 = vmatpush1.bf16.msra.mxu0 0
      %1355 = vmatprep.subr.bf16.mxu0 0
      %1356 = vmatpush1.bf16.msra.mxu0 0
      %1357 = vmatprep.subr.bf16.mxu0 0
      %1358 = vmatpush1.bf16.msra.mxu0 0
      %1359 = vmatprep.subr.bf16.mxu0 0
      %1360 = vmatpush1.bf16.msra.mxu0 0
      %1361 = vmatprep.subr.bf16.mxu0 0
      %1362 = vmatpush1.bf16.msra.mxu0 0
      %1363 = vmatprep.subr.bf16.mxu0 0
      %1364 = vmatpush1.bf16.msra.mxu0 0
      %1365 = vmatprep.subr.bf16.mxu0 0
      %1366 = vmatpush1.bf16.msra.mxu0 0
      %1367 = vmatprep.subr.bf16.mxu0 0
      %1368 = vmatpush1.bf16.msra.mxu0 0
      %1369 = vmatprep.subr.bf16.mxu0 0
      %1370 = vmatpush1.bf16.msra.mxu0 0
      %1371 = vmatprep.subr.bf16.mxu0 0
      %1372 = vmatpush1.bf16.msra.mxu0 0
      %1373 = vmatprep.subr.bf16.mxu0 0
      %1374 = vmatpush1.bf16.msra.mxu0 0
      %1375 = vmatprep.subr.bf16.mxu0 0
      %1376 = vmatpush1.bf16.msra.mxu0 0
      %1377 = vmatprep.mubr.bf16.mxu0 0
      %1378 = vmatmul.mubr.bf16.gmra.mrb[0].mxu0 %v1290
      %v1379 = vpop.f32.mrb[0].mxu0
      %v1380 = vadd.f32 0.0, %v1379
      %v1381 = vpop.f32.mrb[0].mxu0
      %v1382 = vadd.f32 0.0, %v1381
      %v1383 = vpop.f32.mrb[0].mxu0
      %v1384 = vpop.f32.mrb[0].mxu0
      %1385 = vdwg.mxu0
      %v1386 = vadd.f32 %v1248, %v1339
      %v1387 = vadd.f32 %v1249, %v1341
      %v1388 = vadd.f32 %v1250, %v1380
      %v1389 = vadd.f32 %v1251, %v1382
      %1390 = vrot.lane.b32.xlu0 %v448, 112
      %v1391 = vpop.permute.xlu0 %1390
      %1392 = vrot.lane.b32.xlu0 %v449, 112
      %v1393 = vpop.permute.xlu0 %1392
      %1394 = vrot.lane.b32.xlu0 %v450, 112
      %v1395 = vpop.permute.xlu0 %1394
      %1396 = vrot.lane.b32.xlu0 %v451, 112
      %v1397 = vpop.permute.xlu0 %1396
      %vm1398 = vcmp.lt.s32.totalorder %v470, 112
      %v1399 = vsel %vm1398, %v1395, %v1397
      %v1400 = vsel %vm1398, %v1393, %v1395
      %v1401 = vsel %vm1398, %v1391, %v1393
      %v1402 = vsel %vm1398, %v1397, %v1391
      %v1403 = vlaneseq
      %v1404 = vshrl.u32 %v1403, 7
      %v1405 = vsub.s32 7, %v1404
      %v1406 = vrot.slane %v440, %v1405
      %v1407 = vlaneseq
      %v1408 = vshrl.u32 %v1407, 7
      %v1409 = vsub.s32 7, %v1408
      %v1410 = vrot.slane %v441, %v1409
      %v1411 = vlaneseq
      %v1412 = vshrl.u32 %v1411, 7
      %v1413 = vsub.s32 7, %v1412
      %v1414 = vrot.slane %v442, %v1413
      %v1415 = vlaneseq
      %v1416 = vshrl.u32 %v1415, 7
      %v1417 = vsub.s32 7, %v1416
      %v1418 = vrot.slane %v443, %v1417
      %v1419 = vmul.f32 %v1401, %v1406
      %v1420 = vmul.f32 %v1400, %v1410
      %v1421 = vmul.f32 %v1399, %v1414
      %v1422 = vmul.f32 %v1402, %v1418
      %v1423 = vpack.c.bf16 %v1419, %v1419
      %v1424 = vpack.c.bf16 %v1420, %v1420
      %v1425 = vpack.c.bf16 %v1421, %v1421
      %v1426 = vpack.c.bf16 %v1422, %v1422
      %v1428 = vsel %vm537, %v459, 0
      %v1431 = vsel %vm541, %v1423, 0
      %v1434 = vsel %vm541, %v1424, 0
      %v1437 = vsel %vm541, %v1425, 0
      %v1440 = vsel %vm541, %v1426, 0
      %1442 = vmatprep.subr.bf16.mxu0 %v1434
      %1443 = vmatpush1.bf16.msra.mxu0 %v1431
      %1444 = vmatprep.subr.bf16.mxu0 0
      %1445 = vmatpush1.bf16.msra.mxu0 0
      %1446 = vmatprep.subr.bf16.mxu0 0
      %1447 = vmatpush1.bf16.msra.mxu0 0
      %1448 = vmatprep.subr.bf16.mxu0 0
      %1449 = vmatpush1.bf16.msra.mxu0 0
      %1450 = vmatprep.subr.bf16.mxu0 0
      %1451 = vmatpush1.bf16.msra.mxu0 0
      %1452 = vmatprep.subr.bf16.mxu0 0
      %1453 = vmatpush1.bf16.msra.mxu0 0
      %1454 = vmatprep.subr.bf16.mxu0 0
      %1455 = vmatpush1.bf16.msra.mxu0 0
      %1456 = vmatprep.subr.bf16.mxu0 0
      %1457 = vmatpush1.bf16.msra.mxu0 0
      %1458 = vmatprep.subr.bf16.mxu0 0
      %1459 = vmatpush1.bf16.msra.mxu0 0
      %1460 = vmatprep.subr.bf16.mxu0 0
      %1461 = vmatpush1.bf16.msra.mxu0 0
      %1462 = vmatprep.subr.bf16.mxu0 0
      %1463 = vmatpush1.bf16.msra.mxu0 0
      %1464 = vmatprep.subr.bf16.mxu0 0
      %1465 = vmatpush1.bf16.msra.mxu0 0
      %1466 = vmatprep.subr.bf16.mxu0 0
      %1467 = vmatpush1.bf16.msra.mxu0 0
      %1468 = vmatprep.subr.bf16.mxu0 0
      %1469 = vmatpush1.bf16.msra.mxu0 0
      %1470 = vmatprep.subr.bf16.mxu0 0
      %1471 = vmatpush1.bf16.msra.mxu0 0
      %1472 = vmatprep.subr.bf16.mxu0 0
      %1473 = vmatpush1.bf16.msra.mxu0 0
      %1474 = vmatprep.mubr.bf16.mxu0 0
      %1475 = vmatmul.mubr.bf16.gmra.mrb[0].mxu0 %v1428
      %v1476 = vpop.f32.mrb[0].mxu0
      %v1477 = vadd.f32 0.0, %v1476
      %v1478 = vpop.f32.mrb[0].mxu0
      %v1479 = vadd.f32 0.0, %v1478
      %v1480 = vpop.f32.mrb[0].mxu0
      %v1481 = vpop.f32.mrb[0].mxu0
      %1482 = vdwg.mxu0
      %1483 = vmatprep.subr.bf16.mxu0 %v1440
      %1484 = vmatpush1.bf16.msra.mxu0 %v1437
      %1485 = vmatprep.subr.bf16.mxu0 0
      %1486 = vmatpush1.bf16.msra.mxu0 0
      %1487 = vmatprep.subr.bf16.mxu0 0
      %1488 = vmatpush1.bf16.msra.mxu0 0
      %1489 = vmatprep.subr.bf16.mxu0 0
      %1490 = vmatpush1.bf16.msra.mxu0 0
      %1491 = vmatprep.subr.bf16.mxu0 0
      %1492 = vmatpush1.bf16.msra.mxu0 0
      %1493 = vmatprep.subr.bf16.mxu0 0
      %1494 = vmatpush1.bf16.msra.mxu0 0
      %1495 = vmatprep.subr.bf16.mxu0 0
      %1496 = vmatpush1.bf16.msra.mxu0 0
      %1497 = vmatprep.subr.bf16.mxu0 0
      %1498 = vmatpush1.bf16.msra.mxu0 0
      %1499 = vmatprep.subr.bf16.mxu0 0
      %1500 = vmatpush1.bf16.msra.mxu0 0
      %1501 = vmatprep.subr.bf16.mxu0 0
      %1502 = vmatpush1.bf16.msra.mxu0 0
      %1503 = vmatprep.subr.bf16.mxu0 0
      %1504 = vmatpush1.bf16.msra.mxu0 0
      %1505 = vmatprep.subr.bf16.mxu0 0
      %1506 = vmatpush1.bf16.msra.mxu0 0
      %1507 = vmatprep.subr.bf16.mxu0 0
      %1508 = vmatpush1.bf16.msra.mxu0 0
      %1509 = vmatprep.subr.bf16.mxu0 0
      %1510 = vmatpush1.bf16.msra.mxu0 0
      %1511 = vmatprep.subr.bf16.mxu0 0
      %1512 = vmatpush1.bf16.msra.mxu0 0
      %1513 = vmatprep.subr.bf16.mxu0 0
      %1514 = vmatpush1.bf16.msra.mxu0 0
      %1515 = vmatprep.mubr.bf16.mxu0 0
      %1516 = vmatmul.mubr.bf16.gmra.mrb[0].mxu0 %v1428
      %v1517 = vpop.f32.mrb[0].mxu0
      %v1518 = vadd.f32 0.0, %v1517
      %v1519 = vpop.f32.mrb[0].mxu0
      %v1520 = vadd.f32 0.0, %v1519
      %v1521 = vpop.f32.mrb[0].mxu0
      %v1522 = vpop.f32.mrb[0].mxu0
      %1523 = vdwg.mxu0
      %v1524 = vadd.f32 %v1386, %v1477
      %v1525 = vadd.f32 %v1387, %v1479
      %v1526 = vadd.f32 %v1388, %v1518
      %v1527 = vadd.f32 %v1389, %v1520
      %1528 = vrot.lane.b32.xlu0 %v448, 111
      %v1529 = vpop.permute.xlu0 %1528
      %1530 = vrot.lane.b32.xlu0 %v449, 111
      %v1531 = vpop.permute.xlu0 %1530
      %1532 = vrot.lane.b32.xlu0 %v450, 111
      %v1533 = vpop.permute.xlu0 %1532
      %1534 = vrot.lane.b32.xlu0 %v451, 111
      %v1535 = vpop.permute.xlu0 %1534
      %vm1536 = vcmp.lt.s32.totalorder %v470, 111
      %v1537 = vsel %vm1536, %v1533, %v1535
      %v1538 = vsel %vm1536, %v1531, %v1533
      %v1539 = vsel %vm1536, %v1529, %v1531
      %v1540 = vsel %vm1536, %v1535, %v1529
      %v1541 = vlaneseq
      %v1542 = vshrl.u32 %v1541, 7
      %v1543 = vsub.s32 0, %v1542
      %v1544 = vrot.slane %v444, %v1543
      %v1545 = vlaneseq
      %v1546 = vshrl.u32 %v1545, 7
      %v1547 = vsub.s32 0, %v1546
      %v1548 = vrot.slane %v445, %v1547
      %v1549 = vlaneseq
      %v1550 = vshrl.u32 %v1549, 7
      %v1551 = vsub.s32 0, %v1550
      %v1552 = vrot.slane %v446, %v1551
      %v1553 = vlaneseq
      %v1554 = vshrl.u32 %v1553, 7
      %v1555 = vsub.s32 0, %v1554
      %v1556 = vrot.slane %v447, %v1555
      %v1557 = vmul.f32 %v1539, %v1544
      %v1558 = vmul.f32 %v1538, %v1548
      %v1559 = vmul.f32 %v1537, %v1552
      %v1560 = vmul.f32 %v1540, %v1556
      %v1561 = vpack.c.bf16 %v1557, %v1557
      %v1562 = vpack.c.bf16 %v1558, %v1558
      %v1563 = vpack.c.bf16 %v1559, %v1559
      %v1564 = vpack.c.bf16 %v1560, %v1560
      %v1566 = vsel %vm537, %v460, 0
      %v1569 = vsel %vm541, %v1561, 0
      %v1572 = vsel %vm541, %v1562, 0
      %v1575 = vsel %vm541, %v1563, 0
      %v1578 = vsel %vm541, %v1564, 0
      %1580 = vmatprep.subr.bf16.mxu0 %v1572
      %1581 = vmatpush1.bf16.msra.mxu0 %v1569
      %1582 = vmatprep.subr.bf16.mxu0 0
      %1583 = vmatpush1.bf16.msra.mxu0 0
      %1584 = vmatprep.subr.bf16.mxu0 0
      %1585 = vmatpush1.bf16.msra.mxu0 0
      %1586 = vmatprep.subr.bf16.mxu0 0
      %1587 = vmatpush1.bf16.msra.mxu0 0
      %1588 = vmatprep.subr.bf16.mxu0 0
      %1589 = vmatpush1.bf16.msra.mxu0 0
      %1590 = vmatprep.subr.bf16.mxu0 0
      %1591 = vmatpush1.bf16.msra.mxu0 0
      %1592 = vmatprep.subr.bf16.mxu0 0
      %1593 = vmatpush1.bf16.msra.mxu0 0
      %1594 = vmatprep.subr.bf16.mxu0 0
      %1595 = vmatpush1.bf16.msra.mxu0 0
      %1596 = vmatprep.subr.bf16.mxu0 0
      %1597 = vmatpush1.bf16.msra.mxu0 0
      %1598 = vmatprep.subr.bf16.mxu0 0
      %1599 = vmatpush1.bf16.msra.mxu0 0
      %1600 = vmatprep.subr.bf16.mxu0 0
      %1601 = vmatpush1.bf16.msra.mxu0 0
      %1602 = vmatprep.subr.bf16.mxu0 0
      %1603 = vmatpush1.bf16.msra.mxu0 0
      %1604 = vmatprep.subr.bf16.mxu0 0
      %1605 = vmatpush1.bf16.msra.mxu0 0
      %1606 = vmatprep.subr.bf16.mxu0 0
      %1607 = vmatpush1.bf16.msra.mxu0 0
      %1608 = vmatprep.subr.bf16.mxu0 0
      %1609 = vmatpush1.bf16.msra.mxu0 0
      %1610 = vmatprep.subr.bf16.mxu0 0
      %1611 = vmatpush1.bf16.msra.mxu0 0
      %1612 = vmatprep.mubr.bf16.mxu0 0
      %1613 = vmatmul.mubr.bf16.gmra.mrb[0].mxu0 %v1566
      %v1614 = vpop.f32.mrb[0].mxu0
      %v1615 = vadd.f32 0.0, %v1614
      %v1616 = vpop.f32.mrb[0].mxu0
      %v1617 = vadd.f32 0.0, %v1616
      %v1618 = vpop.f32.mrb[0].mxu0
      %v1619 = vpop.f32.mrb[0].mxu0
      %1620 = vdwg.mxu0
      %1621 = vmatprep.subr.bf16.mxu0 %v1578
      %1622 = vmatpush1.bf16.msra.mxu0 %v1575
      %1623 = vmatprep.subr.bf16.mxu0 0
      %1624 = vmatpush1.bf16.msra.mxu0 0
      %1625 = vmatprep.subr.bf16.mxu0 0
      %1626 = vmatpush1.bf16.msra.mxu0 0
      %1627 = vmatprep.subr.bf16.mxu0 0
      %1628 = vmatpush1.bf16.msra.mxu0 0
      %1629 = vmatprep.subr.bf16.mxu0 0
      %1630 = vmatpush1.bf16.msra.mxu0 0
      %1631 = vmatprep.subr.bf16.mxu0 0
      %1632 = vmatpush1.bf16.msra.mxu0 0
      %1633 = vmatprep.subr.bf16.mxu0 0
      %1634 = vmatpush1.bf16.msra.mxu0 0
      %1635 = vmatprep.subr.bf16.mxu0 0
      %1636 = vmatpush1.bf16.msra.mxu0 0
      %1637 = vmatprep.subr.bf16.mxu0 0
      %1638 = vmatpush1.bf16.msra.mxu0 0
      %1639 = vmatprep.subr.bf16.mxu0 0
      %1640 = vmatpush1.bf16.msra.mxu0 0
      %1641 = vmatprep.subr.bf16.mxu0 0
      %1642 = vmatpush1.bf16.msra.mxu0 0
      %1643 = vmatprep.subr.bf16.mxu0 0
      %1644 = vmatpush1.bf16.msra.mxu0 0
      %1645 = vmatprep.subr.bf16.mxu0 0
      %1646 = vmatpush1.bf16.msra.mxu0 0
      %1647 = vmatprep.subr.bf16.mxu0 0
      %1648 = vmatpush1.bf16.msra.mxu0 0
      %1649 = vmatprep.subr.bf16.mxu0 0
      %1650 = vmatpush1.bf16.msra.mxu0 0
      %1651 = vmatprep.subr.bf16.mxu0 0
      %1652 = vmatpush1.bf16.msra.mxu0 0
      %1653 = vmatprep.mubr.bf16.mxu0 0
      %1654 = vmatmul.mubr.bf16.gmra.mrb[0].mxu0 %v1566
      %v1655 = vpop.f32.mrb[0].mxu0
      %v1656 = vadd.f32 0.0, %v1655
      %v1657 = vpop.f32.mrb[0].mxu0
      %v1658 = vadd.f32 0.0, %v1657
      %v1659 = vpop.f32.mrb[0].mxu0
      %v1660 = vpop.f32.mrb[0].mxu0
      %1661 = vdwg.mxu0
      %v1662 = vadd.f32 %v1524, %v1615
      %v1663 = vadd.f32 %v1525, %v1617
      %v1664 = vadd.f32 %v1526, %v1656
      %v1665 = vadd.f32 %v1527, %v1658
      %v1666 = vld [vmem:[%s4] sm:$0x3]
      %1668 = vset.pattern.permute.xlu0 0
      %1669 = vperm.xlu0 %1668, %v1666
      %v1670 = vpop.permute.xlu0 %1669
      %v1672 = vadd.f32 %v1662, %v1670
      %v1673 = vadd.f32 %v1663, %v1670
      %v1674 = vadd.f32 %v1664, %v1670
      %v1675 = vadd.f32 %v1665, %v1670
      %v1676 = vld [vmem:[%s1] sm:$0xf]
      %v1678 = vlaneseq
      %v1679 = vshrl.u32 %v1678, 7
      %v1680 = vsub.s32 0, %v1679
      %v1681 = vrot.slane %v1676, %v1680
      %v1682 = vlaneseq
      %v1683 = vshrl.u32 %v1682, 7
      %v1684 = vsub.s32 1, %v1683
      %v1685 = vrot.slane %v1676, %v1684
      %v1686 = vlaneseq
      %v1687 = vshrl.u32 %v1686, 7
      %v1688 = vsub.s32 2, %v1687
      %v1689 = vrot.slane %v1676, %v1688
      %v1690 = vlaneseq
      %v1691 = vshrl.u32 %v1690, 7
      %v1692 = vsub.s32 3, %v1691
      %v1693 = vrot.slane %v1676, %v1692
      %v1698 = vmul.f32 %v1672, %v1681
      %v1699 = vmul.f32 %v1673, %v1685
      %v1700 = vmul.f32 %v1674, %v1689
      %v1701 = vmul.f32 %v1675, %v1693
      %v1702 = vpack.c.bf16 %v1672, %v1672
      %v1703 = vpack.c.bf16 %v1673, %v1673
      %v1704 = vpack.c.bf16 %v1674, %v1674
      %v1705 = vpack.c.bf16 %v1675, %v1675
      %v1706 = vpack.c.bf16 %v1698, %v1698
      %v1707 = vpack.c.bf16 %v1699, %v1699
      %v1708 = vpack.c.bf16 %v1700, %v1700
      %v1709 = vpack.c.bf16 %v1701, %v1701
      %v1710 = vld [vmem:[%s5] sm:$0xf]
      %v1711 = vld [vmem:[%s5 + $0x4] sm:$0xf]
      %v1712 = vld [vmem:[%s6] sm:$0xff]
      %v1713 = vld [vmem:[%s6 + $0x8] sm:$0xff]
      %1715 = vset.pattern.permute.xlu0 0
      %1716 = vperm.xlu0 %1715, %v1712
      %v1717 = vpop.permute.xlu0 %1716
      %1720 = vset.pattern.permute.xlu0 0
      %1721 = vperm.xlu0 %1720, %v1713
      %v1722 = vpop.permute.xlu0 %1721
      %v1726 = vunpack.c.l.b16 %v1710
      %v1727 = vunpack.c.l.b16 %v1711
      %v1728 = vpack.c.b16 %v1727, %v1726
      %vm1729 = vcmask 15360
      %v1731 = vsel %vm1729, %v1728, 0
      %vm1733 = vcmask 1040384
      %v1735 = vsel %vm1733, %v1702, 0
      %v1738 = vsel %vm1733, %v1703, 0
      %v1741 = vsel %vm1733, %v1704, 0
      %v1744 = vsel %vm1733, %v1705, 0
      %v1747 = vsel %vm1733, %v1706, 0
      %v1750 = vsel %vm1733, %v1707, 0
      %v1753 = vsel %vm1733, %v1708, 0
      %v1756 = vsel %vm1733, %v1709, 0
      %1758 = vmatprep.subr.bf16.mxu0 %v1738
      %1759 = vmatpush1.bf16.msra.mxu0 %v1735
      %1760 = vmatprep.subr.bf16.mxu0 0
      %1761 = vmatpush1.bf16.msra.mxu0 0
      %1762 = vmatprep.subr.bf16.mxu0 0
      %1763 = vmatpush1.bf16.msra.mxu0 0
      %1764 = vmatprep.subr.bf16.mxu0 0
      %1765 = vmatpush1.bf16.msra.mxu0 0
      %1766 = vmatprep.subr.bf16.mxu0 0
      %1767 = vmatpush1.bf16.msra.mxu0 0
      %1768 = vmatprep.subr.bf16.mxu0 0
      %1769 = vmatpush1.bf16.msra.mxu0 0
      %1770 = vmatprep.subr.bf16.mxu0 0
      %1771 = vmatpush1.bf16.msra.mxu0 0
      %1772 = vmatprep.subr.bf16.mxu0 0
      %1773 = vmatpush1.bf16.msra.mxu0 0
      %1774 = vmatprep.subr.bf16.mxu0 0
      %1775 = vmatpush1.bf16.msra.mxu0 0
      %1776 = vmatprep.subr.bf16.mxu0 0
      %1777 = vmatpush1.bf16.msra.mxu0 0
      %1778 = vmatprep.subr.bf16.mxu0 0
      %1779 = vmatpush1.bf16.msra.mxu0 0
      %1780 = vmatprep.subr.bf16.mxu0 0
      %1781 = vmatpush1.bf16.msra.mxu0 0
      %1782 = vmatprep.subr.bf16.mxu0 0
      %1783 = vmatpush1.bf16.msra.mxu0 0
      %1784 = vmatprep.subr.bf16.mxu0 0
      %1785 = vmatpush1.bf16.msra.mxu0 0
      %1786 = vmatprep.subr.bf16.mxu0 0
      %1787 = vmatpush1.bf16.msra.mxu0 0
      %1788 = vmatprep.subr.bf16.mxu0 0
      %1789 = vmatpush1.bf16.msra.mxu0 0
      %1790 = vmatprep.mubr.bf16.mxu0 0
      %1791 = vmatmul.mubr.bf16.gmra.mrb[0].mxu0 %v1731
      %v1792 = vpop.f32.mrb[0].mxu0
      %v1793 = vadd.f32 %v1717, %v1792
      %v1794 = vpop.f32.mrb[0].mxu0
      %v1795 = vadd.f32 %v1717, %v1794
      %v1796 = vpop.f32.mrb[0].mxu0
      %v1797 = vadd.f32 %v1722, %v1796
      %v1798 = vpop.f32.mrb[0].mxu0
      %v1799 = vadd.f32 %v1722, %v1798
      %1800 = vdwg.mxu0
      %1801 = vmatprep.subr.bf16.mxu0 %v1744
      %1802 = vmatpush1.bf16.msra.mxu0 %v1741
      %1803 = vmatprep.subr.bf16.mxu0 0
      %1804 = vmatpush1.bf16.msra.mxu0 0
      %1805 = vmatprep.subr.bf16.mxu0 0
      %1806 = vmatpush1.bf16.msra.mxu0 0
      %1807 = vmatprep.subr.bf16.mxu0 0
      %1808 = vmatpush1.bf16.msra.mxu0 0
      %1809 = vmatprep.subr.bf16.mxu0 0
      %1810 = vmatpush1.bf16.msra.mxu0 0
      %1811 = vmatprep.subr.bf16.mxu0 0
      %1812 = vmatpush1.bf16.msra.mxu0 0
      %1813 = vmatprep.subr.bf16.mxu0 0
      %1814 = vmatpush1.bf16.msra.mxu0 0
      %1815 = vmatprep.subr.bf16.mxu0 0
      %1816 = vmatpush1.bf16.msra.mxu0 0
      %1817 = vmatprep.subr.bf16.mxu0 0
      %1818 = vmatpush1.bf16.msra.mxu0 0
      %1819 = vmatprep.subr.bf16.mxu0 0
      %1820 = vmatpush1.bf16.msra.mxu0 0
      %1821 = vmatprep.subr.bf16.mxu0 0
      %1822 = vmatpush1.bf16.msra.mxu0 0
      %1823 = vmatprep.subr.bf16.mxu0 0
      %1824 = vmatpush1.bf16.msra.mxu0 0
      %1825 = vmatprep.subr.bf16.mxu0 0
      %1826 = vmatpush1.bf16.msra.mxu0 0
      %1827 = vmatprep.subr.bf16.mxu0 0
      %1828 = vmatpush1.bf16.msra.mxu0 0
      %1829 = vmatprep.subr.bf16.mxu0 0
      %1830 = vmatpush1.bf16.msra.mxu0 0
      %1831 = vmatprep.subr.bf16.mxu0 0
      %1832 = vmatpush1.bf16.msra.mxu0 0
      %1833 = vmatprep.mubr.bf16.mxu0 0
      %1834 = vmatmul.mubr.bf16.gmra.mrb[0].mxu0 %v1731
      %v1835 = vpop.f32.mrb[0].mxu0
      %v1836 = vadd.f32 %v1717, %v1835
      %v1837 = vpop.f32.mrb[0].mxu0
      %v1838 = vadd.f32 %v1717, %v1837
      %v1839 = vpop.f32.mrb[0].mxu0
      %v1840 = vadd.f32 %v1722, %v1839
      %v1841 = vpop.f32.mrb[0].mxu0
      %v1842 = vadd.f32 %v1722, %v1841
      %1843 = vdwg.mxu0
      %1844 = vmatprep.subr.bf16.mxu0 %v1750
      %1845 = vmatpush1.bf16.msra.mxu0 %v1747
      %1846 = vmatprep.subr.bf16.mxu0 0
      %1847 = vmatpush1.bf16.msra.mxu0 0
      %1848 = vmatprep.subr.bf16.mxu0 0
      %1849 = vmatpush1.bf16.msra.mxu0 0
      %1850 = vmatprep.subr.bf16.mxu0 0
      %1851 = vmatpush1.bf16.msra.mxu0 0
      %1852 = vmatprep.subr.bf16.mxu0 0
      %1853 = vmatpush1.bf16.msra.mxu0 0
      %1854 = vmatprep.subr.bf16.mxu0 0
      %1855 = vmatpush1.bf16.msra.mxu0 0
      %1856 = vmatprep.subr.bf16.mxu0 0
      %1857 = vmatpush1.bf16.msra.mxu0 0
      %1858 = vmatprep.subr.bf16.mxu0 0
      %1859 = vmatpush1.bf16.msra.mxu0 0
      %1860 = vmatprep.subr.bf16.mxu0 0
      %1861 = vmatpush1.bf16.msra.mxu0 0
      %1862 = vmatprep.subr.bf16.mxu0 0
      %1863 = vmatpush1.bf16.msra.mxu0 0
      %1864 = vmatprep.subr.bf16.mxu0 0
      %1865 = vmatpush1.bf16.msra.mxu0 0
      %1866 = vmatprep.subr.bf16.mxu0 0
      %1867 = vmatpush1.bf16.msra.mxu0 0
      %1868 = vmatprep.subr.bf16.mxu0 0
      %1869 = vmatpush1.bf16.msra.mxu0 0
      %1870 = vmatprep.subr.bf16.mxu0 0
      %1871 = vmatpush1.bf16.msra.mxu0 0
      %1872 = vmatprep.subr.bf16.mxu0 0
      %1873 = vmatpush1.bf16.msra.mxu0 0
      %1874 = vmatprep.subr.bf16.mxu0 0
      %1875 = vmatpush1.bf16.msra.mxu0 0
      %1876 = vmatprep.mubr.bf16.mxu0 0
      %1877 = vmatmul.mubr.bf16.gmra.mrb[0].mxu0 %v1731
      %v1878 = vpop.f32.mrb[0].mxu0
      %v1879 = vadd.f32 %v1717, %v1878
      %v1880 = vpop.f32.mrb[0].mxu0
      %v1881 = vadd.f32 %v1717, %v1880
      %v1882 = vpop.f32.mrb[0].mxu0
      %v1883 = vadd.f32 %v1722, %v1882
      %v1884 = vpop.f32.mrb[0].mxu0
      %v1885 = vadd.f32 %v1722, %v1884
      %1886 = vdwg.mxu0
      %1887 = vmatprep.subr.bf16.mxu0 %v1756
      %1888 = vmatpush1.bf16.msra.mxu0 %v1753
      %1889 = vmatprep.subr.bf16.mxu0 0
      %1890 = vmatpush1.bf16.msra.mxu0 0
      %1891 = vmatprep.subr.bf16.mxu0 0
      %1892 = vmatpush1.bf16.msra.mxu0 0
      %1893 = vmatprep.subr.bf16.mxu0 0
      %1894 = vmatpush1.bf16.msra.mxu0 0
      %1895 = vmatprep.subr.bf16.mxu0 0
      %1896 = vmatpush1.bf16.msra.mxu0 0
      %1897 = vmatprep.subr.bf16.mxu0 0
      %1898 = vmatpush1.bf16.msra.mxu0 0
      %1899 = vmatprep.subr.bf16.mxu0 0
      %1900 = vmatpush1.bf16.msra.mxu0 0
      %1901 = vmatprep.subr.bf16.mxu0 0
      %1902 = vmatpush1.bf16.msra.mxu0 0
      %1903 = vmatprep.subr.bf16.mxu0 0
      %1904 = vmatpush1.bf16.msra.mxu0 0
      %1905 = vmatprep.subr.bf16.mxu0 0
      %1906 = vmatpush1.bf16.msra.mxu0 0
      %1907 = vmatprep.subr.bf16.mxu0 0
      %1908 = vmatpush1.bf16.msra.mxu0 0
      %1909 = vmatprep.subr.bf16.mxu0 0
      %1910 = vmatpush1.bf16.msra.mxu0 0
      %1911 = vmatprep.subr.bf16.mxu0 0
      %1912 = vmatpush1.bf16.msra.mxu0 0
      %1913 = vmatprep.subr.bf16.mxu0 0
      %1914 = vmatpush1.bf16.msra.mxu0 0
      %1915 = vmatprep.subr.bf16.mxu0 0
      %1916 = vmatpush1.bf16.msra.mxu0 0
      %1917 = vmatprep.subr.bf16.mxu0 0
      %1918 = vmatpush1.bf16.msra.mxu0 0
      %1919 = vmatprep.mubr.bf16.mxu0 0
      %1920 = vmatmul.mubr.bf16.gmra.mrb[0].mxu0 %v1731
      %v1921 = vpop.f32.mrb[0].mxu0
      %v1922 = vadd.f32 %v1717, %v1921
      %v1923 = vpop.f32.mrb[0].mxu0
      %v1924 = vadd.f32 %v1717, %v1923
      %v1925 = vpop.f32.mrb[0].mxu0
      %v1926 = vadd.f32 %v1722, %v1925
      %v1927 = vpop.f32.mrb[0].mxu0
      %v1928 = vadd.f32 %v1722, %v1927
      %1929 = vdwg.mxu0
      %v1930 = vmax.f32 %v1793, 0.0
      %v1931 = vmax.f32 %v1795, 0.0
      %v1932 = vmax.f32 %v1836, 0.0
      %v1933 = vmax.f32 %v1838, 0.0
      %v1934 = vmax.f32 %v1879, 0.0
      %v1935 = vmax.f32 %v1881, 0.0
      %v1936 = vmax.f32 %v1922, 0.0
      %v1937 = vmax.f32 %v1924, 0.0
      %v1938 = vmax.f32 %v1797, 0.0
      %v1939 = vmax.f32 %v1799, 0.0
      %v1940 = vmax.f32 %v1840, 0.0
      %v1941 = vmax.f32 %v1842, 0.0
      %v1942 = vmax.f32 %v1883, 0.0
      %v1943 = vmax.f32 %v1885, 0.0
      %v1944 = vmax.f32 %v1926, 0.0
      %v1945 = vmax.f32 %v1928, 0.0
      %v1946 = vld [vmem:[%s7] sm:$0xf]
      %v1947 = vld [vmem:[%s7 + $0x4] sm:$0xf]
      %v1948 = vld [vmem:[%s7 + $0x8] sm:$0xf]
      %v1949 = vld [vmem:[%s7 + $0xc] sm:$0xf]
      %v1950 = vpack.c.bf16 %v1938, %v1930
      %v1951 = vpack.c.bf16 %v1939, %v1931
      %v1952 = vpack.c.bf16 %v1940, %v1932
      %v1953 = vpack.c.bf16 %v1941, %v1933
      %v1954 = vpack.c.bf16 %v1942, %v1934
      %v1955 = vpack.c.bf16 %v1943, %v1935
      %v1956 = vpack.c.bf16 %v1944, %v1936
      %v1957 = vpack.c.bf16 %v1945, %v1937
      %v1958 = vld [vmem:[%s8] sm:$0xff]
      %v1959 = vld [vmem:[%s8 + $0x8] sm:$0xff]
      %v1960 = vld [vmem:[%s8 + $0x10] sm:$0xff]
      %v1961 = vld [vmem:[%s8 + $0x18] sm:$0xff]
      %1963 = vset.pattern.permute.xlu0 0
      %1964 = vperm.xlu0 %1963, %v1958
      %v1965 = vpop.permute.xlu0 %1964
      %1968 = vset.pattern.permute.xlu0 0
      %1969 = vperm.xlu0 %1968, %v1959
      %v1970 = vpop.permute.xlu0 %1969
      %1973 = vset.pattern.permute.xlu0 0
      %1974 = vperm.xlu0 %1973, %v1960
      %v1975 = vpop.permute.xlu0 %1974
      %1978 = vset.pattern.permute.xlu0 0
      %1979 = vperm.xlu0 %1978, %v1961
      %v1980 = vpop.permute.xlu0 %1979
      %v1986 = vunpack.c.l.b16 %v1946
      %v1987 = vunpack.c.l.b16 %v1947
      %v1988 = vunpack.c.l.b16 %v1948
      %v1989 = vunpack.c.l.b16 %v1949
      %v1990 = vpack.c.b16 %v1987, %v1986
      %v1991 = vpack.c.b16 %v1989, %v1988
      %vm1992 = vcmask 130048
      %v1994 = vsel %vm1992, %v1990, 0
      %v1997 = vsel %vm1992, %v1991, 0
      %1999 = vmatprep.subr.bf16.mxu0 %v1951
      %2000 = vmatpush1.bf16.msra.mxu0 %v1950
      %2001 = vmatprep.subr.bf16.mxu0 0
      %2002 = vmatpush1.bf16.msra.mxu0 0
      %2003 = vmatprep.subr.bf16.mxu0 0
      %2004 = vmatpush1.bf16.msra.mxu0 0
      %2005 = vmatprep.subr.bf16.mxu0 0
      %2006 = vmatpush1.bf16.msra.mxu0 0
      %2007 = vmatprep.subr.bf16.mxu0 0
      %2008 = vmatpush1.bf16.msra.mxu0 0
      %2009 = vmatprep.subr.bf16.mxu0 0
      %2010 = vmatpush1.bf16.msra.mxu0 0
      %2011 = vmatprep.subr.bf16.mxu0 0
      %2012 = vmatpush1.bf16.msra.mxu0 0
      %2013 = vmatprep.subr.bf16.mxu0 0
      %2014 = vmatpush1.bf16.msra.mxu0 0
      %2015 = vmatprep.subr.bf16.mxu0 0
      %2016 = vmatpush1.bf16.msra.mxu0 0
      %2017 = vmatprep.subr.bf16.mxu0 0
      %2018 = vmatpush1.bf16.msra.mxu0 0
      %2019 = vmatprep.subr.bf16.mxu0 0
      %2020 = vmatpush1.bf16.msra.mxu0 0
      %2021 = vmatprep.subr.bf16.mxu0 0
      %2022 = vmatpush1.bf16.msra.mxu0 0
      %2023 = vmatprep.subr.bf16.mxu0 0
      %2024 = vmatpush1.bf16.msra.mxu0 0
      %2025 = vmatprep.subr.bf16.mxu0 0
      %2026 = vmatpush1.bf16.msra.mxu0 0
      %2027 = vmatprep.subr.bf16.mxu0 0
      %2028 = vmatpush1.bf16.msra.mxu0 0
      %2029 = vmatprep.subr.bf16.mxu0 0
      %2030 = vmatpush1.bf16.msra.mxu0 0
      %2031 = vmatprep.mubr.bf16.mxu0 0
      %2032 = vmatmul.mubr.bf16.gmra.mrb[0].mxu0 %v1994
      %v2033 = vpop.f32.mrb[0].mxu0
      %v2034 = vadd.f32 %v1965, %v2033
      %v2035 = vpop.f32.mrb[0].mxu0
      %v2036 = vadd.f32 %v1965, %v2035
      %v2037 = vpop.f32.mrb[0].mxu0
      %v2038 = vadd.f32 %v1970, %v2037
      %v2039 = vpop.f32.mrb[0].mxu0
      %v2040 = vadd.f32 %v1970, %v2039
      %2041 = vmatprep.mubr.bf16.mxu0 0
      %2042 = vmatmul.mubr.bf16.gmra.mrb[0].mxu0 %v1997
      %v2043 = vpop.f32.mrb[0].mxu0
      %v2044 = vadd.f32 %v1975, %v2043
      %v2045 = vpop.f32.mrb[0].mxu0
      %v2046 = vadd.f32 %v1975, %v2045
      %v2047 = vpop.f32.mrb[0].mxu0
      %v2048 = vadd.f32 %v1980, %v2047
      %v2049 = vpop.f32.mrb[0].mxu0
      %v2050 = vadd.f32 %v1980, %v2049
      %2051 = vdwg.mxu0
      %2052 = vmatprep.subr.bf16.mxu0 %v1953
      %2053 = vmatpush1.bf16.msra.mxu0 %v1952
      %2054 = vmatprep.subr.bf16.mxu0 0
      %2055 = vmatpush1.bf16.msra.mxu0 0
      %2056 = vmatprep.subr.bf16.mxu0 0
      %2057 = vmatpush1.bf16.msra.mxu0 0
      %2058 = vmatprep.subr.bf16.mxu0 0
      %2059 = vmatpush1.bf16.msra.mxu0 0
      %2060 = vmatprep.subr.bf16.mxu0 0
      %2061 = vmatpush1.bf16.msra.mxu0 0
      %2062 = vmatprep.subr.bf16.mxu0 0
      %2063 = vmatpush1.bf16.msra.mxu0 0
      %2064 = vmatprep.subr.bf16.mxu0 0
      %2065 = vmatpush1.bf16.msra.mxu0 0
      %2066 = vmatprep.subr.bf16.mxu0 0
      %2067 = vmatpush1.bf16.msra.mxu0 0
      %2068 = vmatprep.subr.bf16.mxu0 0
      %2069 = vmatpush1.bf16.msra.mxu0 0
      %2070 = vmatprep.subr.bf16.mxu0 0
      %2071 = vmatpush1.bf16.msra.mxu0 0
      %2072 = vmatprep.subr.bf16.mxu0 0
      %2073 = vmatpush1.bf16.msra.mxu0 0
      %2074 = vmatprep.subr.bf16.mxu0 0
      %2075 = vmatpush1.bf16.msra.mxu0 0
      %2076 = vmatprep.subr.bf16.mxu0 0
      %2077 = vmatpush1.bf16.msra.mxu0 0
      %2078 = vmatprep.subr.bf16.mxu0 0
      %2079 = vmatpush1.bf16.msra.mxu0 0
      %2080 = vmatprep.subr.bf16.mxu0 0
      %2081 = vmatpush1.bf16.msra.mxu0 0
      %2082 = vmatprep.subr.bf16.mxu0 0
      %2083 = vmatpush1.bf16.msra.mxu0 0
      %2084 = vmatprep.mubr.bf16.mxu0 0
      %2085 = vmatmul.mubr.bf16.gmra.mrb[0].mxu0 %v1994
      %v2086 = vpop.f32.mrb[0].mxu0
      %v2087 = vadd.f32 %v1965, %v2086
      %v2088 = vpop.f32.mrb[0].mxu0
      %v2089 = vadd.f32 %v1965, %v2088
      %v2090 = vpop.f32.mrb[0].mxu0
      %v2091 = vadd.f32 %v1970, %v2090
      %v2092 = vpop.f32.mrb[0].mxu0
      %v2093 = vadd.f32 %v1970, %v2092
      %2094 = vmatprep.mubr.bf16.mxu0 0
      %2095 = vmatmul.mubr.bf16.gmra.mrb[0].mxu0 %v1997
      %v2096 = vpop.f32.mrb[0].mxu0
      %v2097 = vadd.f32 %v1975, %v2096
      %v2098 = vpop.f32.mrb[0].mxu0
      %v2099 = vadd.f32 %v1975, %v2098
      %v2100 = vpop.f32.mrb[0].mxu0
      %v2101 = vadd.f32 %v1980, %v2100
      %v2102 = vpop.f32.mrb[0].mxu0
      %v2103 = vadd.f32 %v1980, %v2102
      %2104 = vdwg.mxu0
      %2105 = vmatprep.subr.bf16.mxu0 %v1955
      %2106 = vmatpush1.bf16.msra.mxu0 %v1954
      %2107 = vmatprep.subr.bf16.mxu0 0
      %2108 = vmatpush1.bf16.msra.mxu0 0
      %2109 = vmatprep.subr.bf16.mxu0 0
      %2110 = vmatpush1.bf16.msra.mxu0 0
      %2111 = vmatprep.subr.bf16.mxu0 0
      %2112 = vmatpush1.bf16.msra.mxu0 0
      %2113 = vmatprep.subr.bf16.mxu0 0
      %2114 = vmatpush1.bf16.msra.mxu0 0
      %2115 = vmatprep.subr.bf16.mxu0 0
      %2116 = vmatpush1.bf16.msra.mxu0 0
      %2117 = vmatprep.subr.bf16.mxu0 0
      %2118 = vmatpush1.bf16.msra.mxu0 0
      %2119 = vmatprep.subr.bf16.mxu0 0
      %2120 = vmatpush1.bf16.msra.mxu0 0
      %2121 = vmatprep.subr.bf16.mxu0 0
      %2122 = vmatpush1.bf16.msra.mxu0 0
      %2123 = vmatprep.subr.bf16.mxu0 0
      %2124 = vmatpush1.bf16.msra.mxu0 0
      %2125 = vmatprep.subr.bf16.mxu0 0
      %2126 = vmatpush1.bf16.msra.mxu0 0
      %2127 = vmatprep.subr.bf16.mxu0 0
      %2128 = vmatpush1.bf16.msra.mxu0 0
      %2129 = vmatprep.subr.bf16.mxu0 0
      %2130 = vmatpush1.bf16.msra.mxu0 0
      %2131 = vmatprep.subr.bf16.mxu0 0
      %2132 = vmatpush1.bf16.msra.mxu0 0
      %2133 = vmatprep.subr.bf16.mxu0 0
      %2134 = vmatpush1.bf16.msra.mxu0 0
      %2135 = vmatprep.subr.bf16.mxu0 0
      %2136 = vmatpush1.bf16.msra.mxu0 0
      %2137 = vmatprep.mubr.bf16.mxu0 0
      %2138 = vmatmul.mubr.bf16.gmra.mrb[0].mxu0 %v1994
      %v2139 = vpop.f32.mrb[0].mxu0
      %v2140 = vadd.f32 %v1965, %v2139
      %v2141 = vpop.f32.mrb[0].mxu0
      %v2142 = vadd.f32 %v1965, %v2141
      %v2143 = vpop.f32.mrb[0].mxu0
      %v2144 = vadd.f32 %v1970, %v2143
      %v2145 = vpop.f32.mrb[0].mxu0
      %v2146 = vadd.f32 %v1970, %v2145
      %2147 = vmatprep.mubr.bf16.mxu0 0
      %2148 = vmatmul.mubr.bf16.gmra.mrb[0].mxu0 %v1997
      %v2149 = vpop.f32.mrb[0].mxu0
      %v2150 = vadd.f32 %v1975, %v2149
      %v2151 = vpop.f32.mrb[0].mxu0
      %v2152 = vadd.f32 %v1975, %v2151
      %v2153 = vpop.f32.mrb[0].mxu0
      %v2154 = vadd.f32 %v1980, %v2153
      %v2155 = vpop.f32.mrb[0].mxu0
      %v2156 = vadd.f32 %v1980, %v2155
      %2157 = vdwg.mxu0
      %2158 = vmatprep.subr.bf16.mxu0 %v1957
      %2159 = vmatpush1.bf16.msra.mxu0 %v1956
      %2160 = vmatprep.subr.bf16.mxu0 0
      %2161 = vmatpush1.bf16.msra.mxu0 0
      %2162 = vmatprep.subr.bf16.mxu0 0
      %2163 = vmatpush1.bf16.msra.mxu0 0
      %2164 = vmatprep.subr.bf16.mxu0 0
      %2165 = vmatpush1.bf16.msra.mxu0 0
      %2166 = vmatprep.subr.bf16.mxu0 0
      %2167 = vmatpush1.bf16.msra.mxu0 0
      %2168 = vmatprep.subr.bf16.mxu0 0
      %2169 = vmatpush1.bf16.msra.mxu0 0
      %2170 = vmatprep.subr.bf16.mxu0 0
      %2171 = vmatpush1.bf16.msra.mxu0 0
      %2172 = vmatprep.subr.bf16.mxu0 0
      %2173 = vmatpush1.bf16.msra.mxu0 0
      %2174 = vmatprep.subr.bf16.mxu0 0
      %2175 = vmatpush1.bf16.msra.mxu0 0
      %2176 = vmatprep.subr.bf16.mxu0 0
      %2177 = vmatpush1.bf16.msra.mxu0 0
      %2178 = vmatprep.subr.bf16.mxu0 0
      %2179 = vmatpush1.bf16.msra.mxu0 0
      %2180 = vmatprep.subr.bf16.mxu0 0
      %2181 = vmatpush1.bf16.msra.mxu0 0
      %2182 = vmatprep.subr.bf16.mxu0 0
      %2183 = vmatpush1.bf16.msra.mxu0 0
      %2184 = vmatprep.subr.bf16.mxu0 0
      %2185 = vmatpush1.bf16.msra.mxu0 0
      %2186 = vmatprep.subr.bf16.mxu0 0
      %2187 = vmatpush1.bf16.msra.mxu0 0
      %2188 = vmatprep.subr.bf16.mxu0 0
      %2189 = vmatpush1.bf16.msra.mxu0 0
      %2190 = vmatprep.mubr.bf16.mxu0 0
      %2191 = vmatmul.mubr.bf16.gmra.mrb[0].mxu0 %v1994
      %v2192 = vpop.f32.mrb[0].mxu0
      %v2193 = vadd.f32 %v1965, %v2192
      %v2194 = vpop.f32.mrb[0].mxu0
      %v2195 = vadd.f32 %v1965, %v2194
      %v2196 = vpop.f32.mrb[0].mxu0
      %v2197 = vadd.f32 %v1970, %v2196
      %v2198 = vpop.f32.mrb[0].mxu0
      %v2199 = vadd.f32 %v1970, %v2198
      %2200 = vmatprep.mubr.bf16.mxu0 0
      %2201 = vmatmul.mubr.bf16.gmra.mrb[0].mxu0 %v1997
      %v2202 = vpop.f32.mrb[0].mxu0
      %v2203 = vadd.f32 %v1975, %v2202
      %v2204 = vpop.f32.mrb[0].mxu0
      %v2205 = vadd.f32 %v1975, %v2204
      %v2206 = vpop.f32.mrb[0].mxu0
      %v2207 = vadd.f32 %v1980, %v2206
      %v2208 = vpop.f32.mrb[0].mxu0
      %v2209 = vadd.f32 %v1980, %v2208
      %2210 = vdwg.mxu0
      %v2211 = vmax.f32 %v2034, 0.0
      %v2212 = vmax.f32 %v2036, 0.0
      %v2213 = vmax.f32 %v2087, 0.0
      %v2214 = vmax.f32 %v2089, 0.0
      %v2215 = vmax.f32 %v2140, 0.0
      %v2216 = vmax.f32 %v2142, 0.0
      %v2217 = vmax.f32 %v2193, 0.0
      %v2218 = vmax.f32 %v2195, 0.0
      %v2219 = vmax.f32 %v2038, 0.0
      %v2220 = vmax.f32 %v2040, 0.0
      %v2221 = vmax.f32 %v2091, 0.0
      %v2222 = vmax.f32 %v2093, 0.0
      %v2223 = vmax.f32 %v2144, 0.0
      %v2224 = vmax.f32 %v2146, 0.0
      %v2225 = vmax.f32 %v2197, 0.0
      %v2226 = vmax.f32 %v2199, 0.0
      %v2227 = vmax.f32 %v2044, 0.0
      %v2228 = vmax.f32 %v2046, 0.0
      %v2229 = vmax.f32 %v2097, 0.0
      %v2230 = vmax.f32 %v2099, 0.0
      %v2231 = vmax.f32 %v2150, 0.0
      %v2232 = vmax.f32 %v2152, 0.0
      %v2233 = vmax.f32 %v2203, 0.0
      %v2234 = vmax.f32 %v2205, 0.0
      %v2235 = vmax.f32 %v2048, 0.0
      %v2236 = vmax.f32 %v2050, 0.0
      %v2237 = vmax.f32 %v2101, 0.0
      %v2238 = vmax.f32 %v2103, 0.0
      %v2239 = vmax.f32 %v2154, 0.0
      %v2240 = vmax.f32 %v2156, 0.0
      %v2241 = vmax.f32 %v2207, 0.0
      %v2242 = vmax.f32 %v2209, 0.0
      %v2243 = vadd.f32 %v2211, %v2215
      %v2244 = vadd.f32 %v2212, %v2216
      %v2245 = vadd.f32 %v2213, %v2217
      %v2246 = vadd.f32 %v2214, %v2218
      %v2247 = vadd.f32 %v2219, %v2223
      %v2248 = vadd.f32 %v2220, %v2224
      %v2249 = vadd.f32 %v2221, %v2225
      %v2250 = vadd.f32 %v2222, %v2226
      %v2251 = vadd.f32 %v2227, %v2231
      %v2252 = vadd.f32 %v2228, %v2232
      %v2253 = vadd.f32 %v2229, %v2233
      %v2254 = vadd.f32 %v2230, %v2234
      %v2255 = vadd.f32 %v2235, %v2239
      %v2256 = vadd.f32 %v2236, %v2240
      %v2257 = vadd.f32 %v2237, %v2241
      %v2258 = vadd.f32 %v2238, %v2242
      %v2259 = vld [vmem:[%s9] sm:$0xf]
      %v2260 = vld [vmem:[%s9 + $0x4] sm:$0xf]
      %v2261 = vld [vmem:[%s9 + $0x8] sm:$0xf]
      %v2262 = vld [vmem:[%s9 + $0xc] sm:$0xf]
      %v2263 = vld [vmem:[%s9 + $0x10] sm:$0xf]
      %v2264 = vld [vmem:[%s9 + $0x14] sm:$0xf]
      %v2265 = vld [vmem:[%s9 + $0x18] sm:$0xf]
      %v2266 = vld [vmem:[%s9 + $0x1c] sm:$0xf]
      %v2267 = vld [vmem:[%s9 + $0x20] sm:$0xf]
      %v2268 = vld [vmem:[%s9 + $0x24] sm:$0xf]
      %v2269 = vld [vmem:[%s9 + $0x28] sm:$0xf]
      %v2270 = vld [vmem:[%s9 + $0x2c] sm:$0xf]
      %v2271 = vld [vmem:[%s9 + $0x30] sm:$0xf]
      %v2272 = vld [vmem:[%s9 + $0x34] sm:$0xf]
      %v2273 = vld [vmem:[%s9 + $0x38] sm:$0xf]
      %v2274 = vld [vmem:[%s9 + $0x3c] sm:$0xf]
      %v2275 = vld [vmem:[%s9 + $0x40] sm:$0xf]
      %v2276 = vld [vmem:[%s9 + $0x44] sm:$0xf]
      %v2277 = vld [vmem:[%s9 + $0x48] sm:$0xf]
      %v2278 = vld [vmem:[%s9 + $0x4c] sm:$0xf]
      %v2279 = vld [vmem:[%s9 + $0x50] sm:$0xf]
      %v2280 = vld [vmem:[%s9 + $0x54] sm:$0xf]
      %v2281 = vld [vmem:[%s9 + $0x58] sm:$0xf]
      %v2282 = vld [vmem:[%s9 + $0x5c] sm:$0xf]
      %v2283 = vld [vmem:[%s9 + $0x60] sm:$0xf]
      %v2284 = vld [vmem:[%s9 + $0x64] sm:$0xf]
      %v2285 = vld [vmem:[%s9 + $0x68] sm:$0xf]
      %v2286 = vld [vmem:[%s9 + $0x6c] sm:$0xf]
      %v2287 = vld [vmem:[%s9 + $0x70] sm:$0xf]
      %v2288 = vld [vmem:[%s9 + $0x74] sm:$0xf]
      %v2289 = vld [vmem:[%s9 + $0x78] sm:$0xf]
      %v2290 = vld [vmem:[%s9 + $0x7c] sm:$0xf]
      %v2291 = vld [vmem:[%s9 + $0x80] sm:$0xf]
      %v2292 = vld [vmem:[%s9 + $0x84] sm:$0xf]
      %v2293 = vld [vmem:[%s9 + $0x88] sm:$0xf]
      %v2294 = vld [vmem:[%s9 + $0x8c] sm:$0xf]
      %v2295 = vld [vmem:[%s9 + $0x90] sm:$0xf]
      %v2296 = vld [vmem:[%s9 + $0x94] sm:$0xf]
      %v2297 = vld [vmem:[%s9 + $0x98] sm:$0xf]
      %v2298 = vld [vmem:[%s9 + $0x9c] sm:$0xf]
      %v2299 = vld [vmem:[%s9 + $0xa0] sm:$0xf]
      %v2300 = vld [vmem:[%s9 + $0xa4] sm:$0xf]
      %v2301 = vld [vmem:[%s9 + $0xa8] sm:$0xf]
      %v2302 = vld [vmem:[%s9 + $0xac] sm:$0xf]
      %v2303 = vld [vmem:[%s9 + $0xb0] sm:$0xf]
      %v2304 = vld [vmem:[%s9 + $0xb4] sm:$0xf]
      %v2305 = vld [vmem:[%s9 + $0xb8] sm:$0xf]
      %v2306 = vld [vmem:[%s9 + $0xbc] sm:$0xf]
      %v2307 = vld [vmem:[%s9 + $0xc0] sm:$0xf]
      %v2308 = vld [vmem:[%s9 + $0xc4] sm:$0xf]
      %v2309 = vld [vmem:[%s9 + $0xc8] sm:$0xf]
      %v2310 = vld [vmem:[%s9 + $0xcc] sm:$0xf]
      %v2311 = vld [vmem:[%s9 + $0xd0] sm:$0xf]
      %v2312 = vld [vmem:[%s9 + $0xd4] sm:$0xf]
      %v2313 = vld [vmem:[%s9 + $0xd8] sm:$0xf]
      %v2314 = vld [vmem:[%s9 + $0xdc] sm:$0xf]
      %v2315 = vld [vmem:[%s9 + $0xe0] sm:$0xf]
      %v2316 = vld [vmem:[%s9 + $0xe4] sm:$0xf]
      %v2317 = vld [vmem:[%s9 + $0xe8] sm:$0xf]
      %v2318 = vld [vmem:[%s9 + $0xec] sm:$0xf]
      %v2319 = vld [vmem:[%s9 + $0xf0] sm:$0xf]
      %v2320 = vld [vmem:[%s9 + $0xf4] sm:$0xf]
      %v2321 = vld [vmem:[%s9 + $0xf8] sm:$0xf]
      %v2322 = vld [vmem:[%s9 + $0xfc] sm:$0xf]
      %v2323 = vld [vmem:[%s9 + $0x100] sm:$0xf]
      %v2324 = vld [vmem:[%s9 + $0x104] sm:$0xf]
      %v2325 = vld [vmem:[%s9 + $0x108] sm:$0xf]
      %v2326 = vld [vmem:[%s9 + $0x10c] sm:$0xf]
      %v2327 = vld [vmem:[%s9 + $0x110] sm:$0xf]
      %v2328 = vld [vmem:[%s9 + $0x114] sm:$0xf]
      %v2329 = vld [vmem:[%s9 + $0x118] sm:$0xf]
      %v2330 = vld [vmem:[%s9 + $0x11c] sm:$0xf]
      %2331 = vrot.lane.b32.xlu0 %v2243, 17
      %v2332 = vpop.permute.xlu0 %2331
      %2333 = vrot.lane.b32.xlu0 %v2247, 17
      %v2334 = vpop.permute.xlu0 %2333
      %2335 = vrot.lane.b32.xlu0 %v2251, 17
      %v2336 = vpop.permute.xlu0 %2335
      %2337 = vrot.lane.b32.xlu0 %v2255, 17
      %v2338 = vpop.permute.xlu0 %2337
      %2339 = vrot.lane.b32.xlu0 %v2244, 17
      %v2340 = vpop.permute.xlu0 %2339
      %2341 = vrot.lane.b32.xlu0 %v2248, 17
      %v2342 = vpop.permute.xlu0 %2341
      %2343 = vrot.lane.b32.xlu0 %v2252, 17
      %v2344 = vpop.permute.xlu0 %2343
      %2345 = vrot.lane.b32.xlu0 %v2256, 17
      %v2346 = vpop.permute.xlu0 %2345
      %2347 = vrot.lane.b32.xlu0 %v2245, 17
      %v2348 = vpop.permute.xlu0 %2347
      %2349 = vrot.lane.b32.xlu0 %v2249, 17
      %v2350 = vpop.permute.xlu0 %2349
      %2351 = vrot.lane.b32.xlu0 %v2253, 17
      %v2352 = vpop.permute.xlu0 %2351
      %2353 = vrot.lane.b32.xlu0 %v2257, 17
      %v2354 = vpop.permute.xlu0 %2353
      %2355 = vrot.lane.b32.xlu0 %v2246, 17
      %v2356 = vpop.permute.xlu0 %2355
      %2357 = vrot.lane.b32.xlu0 %v2250, 17
      %v2358 = vpop.permute.xlu0 %2357
      %2359 = vrot.lane.b32.xlu0 %v2254, 17
      %v2360 = vpop.permute.xlu0 %2359
      %2361 = vrot.lane.b32.xlu0 %v2258, 17
      %v2362 = vpop.permute.xlu0 %2361
      %v2363 = vsel %vm471, %v2348, %v2356
      %v2364 = vsel %vm471, %v2350, %v2358
      %v2365 = vsel %vm471, %v2352, %v2360
      %v2366 = vsel %vm471, %v2354, %v2362
      %v2367 = vsel %vm471, %v2340, %v2348
      %v2368 = vsel %vm471, %v2342, %v2350
      %v2369 = vsel %vm471, %v2344, %v2352
      %v2370 = vsel %vm471, %v2346, %v2354
      %v2371 = vsel %vm471, %v2332, %v2340
      %v2372 = vsel %vm471, %v2334, %v2342
      %v2373 = vsel %vm471, %v2336, %v2344
      %v2374 = vsel %vm471, %v2338, %v2346
      %v2375 = vsel %vm471, %v2356, %v2332
      %v2376 = vsel %vm471, %v2358, %v2334
      %v2377 = vsel %vm471, %v2360, %v2336
      %v2378 = vsel %vm471, %v2362, %v2338
      %v2379 = vmul.f32 %v2375, %v479
      %v2380 = vmul.f32 %v2371, %v483
      %v2381 = vmul.f32 %v2367, %v487
      %v2382 = vmul.f32 %v2363, %v491
      %v2383 = vmul.f32 %v2376, %v479
      %v2384 = vmul.f32 %v2372, %v483
      %v2385 = vmul.f32 %v2368, %v487
      %v2386 = vmul.f32 %v2364, %v491
      %v2387 = vmul.f32 %v2377, %v479
      %v2388 = vmul.f32 %v2373, %v483
      %v2389 = vmul.f32 %v2369, %v487
      %v2390 = vmul.f32 %v2365, %v491
      %v2391 = vmul.f32 %v2378, %v479
      %v2392 = vmul.f32 %v2374, %v483
      %v2393 = vmul.f32 %v2370, %v487
      %v2394 = vmul.f32 %v2366, %v491
      %v2395 = vpack.c.bf16 %v2383, %v2379
      %v2396 = vpack.c.bf16 %v2384, %v2380
      %v2397 = vpack.c.bf16 %v2385, %v2381
      %v2398 = vpack.c.bf16 %v2386, %v2382
      %v2399 = vpack.c.bf16 %v2391, %v2387
      %v2400 = vpack.c.bf16 %v2392, %v2388
      %v2401 = vpack.c.bf16 %v2393, %v2389
      %v2402 = vpack.c.bf16 %v2394, %v2390
      %2403 = vrot.lane.b32.xlu0 %v2243, 16
      %v2404 = vpop.permute.xlu0 %2403
      %2405 = vrot.lane.b32.xlu0 %v2247, 16
      %v2406 = vpop.permute.xlu0 %2405
      %2407 = vrot.lane.b32.xlu0 %v2251, 16
      %v2408 = vpop.permute.xlu0 %2407
      %2409 = vrot.lane.b32.xlu0 %v2255, 16
      %v2410 = vpop.permute.xlu0 %2409
      %2411 = vrot.lane.b32.xlu0 %v2244, 16
      %v2412 = vpop.permute.xlu0 %2411
      %2413 = vrot.lane.b32.xlu0 %v2248, 16
      %v2414 = vpop.permute.xlu0 %2413
      %2415 = vrot.lane.b32.xlu0 %v2252, 16
      %v2416 = vpop.permute.xlu0 %2415
      %2417 = vrot.lane.b32.xlu0 %v2256, 16
      %v2418 = vpop.permute.xlu0 %2417
      %2419 = vrot.lane.b32.xlu0 %v2245, 16
      %v2420 = vpop.permute.xlu0 %2419
      %2421 = vrot.lane.b32.xlu0 %v2249, 16
      %v2422 = vpop.permute.xlu0 %2421
      %2423 = vrot.lane.b32.xlu0 %v2253, 16
      %v2424 = vpop.permute.xlu0 %2423
      %2425 = vrot.lane.b32.xlu0 %v2257, 16
      %v2426 = vpop.permute.xlu0 %2425
      %2427 = vrot.lane.b32.xlu0 %v2246, 16
      %v2428 = vpop.permute.xlu0 %2427
      %2429 = vrot.lane.b32.xlu0 %v2250, 16
      %v2430 = vpop.permute.xlu0 %2429
      %2431 = vrot.lane.b32.xlu0 %v2254, 16
      %v2432 = vpop.permute.xlu0 %2431
      %2433 = vrot.lane.b32.xlu0 %v2258, 16
      %v2434 = vpop.permute.xlu0 %2433
      %v2435 = vsel %vm508, %v2420, %v2428
      %v2436 = vsel %vm508, %v2422, %v2430
      %v2437 = vsel %vm508, %v2424, %v2432
      %v2438 = vsel %vm508, %v2426, %v2434
      %v2439 = vsel %vm508, %v2412, %v2420
      %v2440 = vsel %vm508, %v2414, %v2422
      %v2441 = vsel %vm508, %v2416, %v2424
      %v2442 = vsel %vm508, %v2418, %v2426
      %v2443 = vsel %vm508, %v2404, %v2412
      %v2444 = vsel %vm508, %v2406, %v2414
      %v2445 = vsel %vm508, %v2408, %v2416
      %v2446 = vsel %vm508, %v2410, %v2418
      %v2447 = vsel %vm508, %v2428, %v2404
      %v2448 = vsel %vm508, %v2430, %v2406
      %v2449 = vsel %vm508, %v2432, %v2408
      %v2450 = vsel %vm508, %v2434, %v2410
      %v2451 = vmul.f32 %v2447, %v516
      %v2452 = vmul.f32 %v2443, %v520
      %v2453 = vmul.f32 %v2439, %v524
      %v2454 = vmul.f32 %v2435, %v528
      %v2455 = vmul.f32 %v2448, %v516
      %v2456 = vmul.f32 %v2444, %v520
      %v2457 = vmul.f32 %v2440, %v524
      %v2458 = vmul.f32 %v2436, %v528
      %v2459 = vmul.f32 %v2449, %v516
      %v2460 = vmul.f32 %v2445, %v520
      %v2461 = vmul.f32 %v2441, %v524
      %v2462 = vmul.f32 %v2437, %v528
      %v2463 = vmul.f32 %v2450, %v516
      %v2464 = vmul.f32 %v2446, %v520
      %v2465 = vmul.f32 %v2442, %v524
      %v2466 = vmul.f32 %v2438, %v528
      %v2467 = vpack.c.bf16 %v2455, %v2451
      %v2468 = vpack.c.bf16 %v2456, %v2452
      %v2469 = vpack.c.bf16 %v2457, %v2453
      %v2470 = vpack.c.bf16 %v2458, %v2454
      %v2471 = vpack.c.bf16 %v2463, %v2459
      %v2472 = vpack.c.bf16 %v2464, %v2460
      %v2473 = vpack.c.bf16 %v2465, %v2461
      %v2474 = vpack.c.bf16 %v2466, %v2462
      %v2483 = vunpack.c.l.b16 %v2267
      %v2484 = vunpack.c.l.b16 %v2268
      %v2485 = vunpack.c.l.b16 %v2269
      %v2486 = vunpack.c.l.b16 %v2270
      %v2487 = vunpack.c.l.b16 %v2271
      %v2488 = vunpack.c.l.b16 %v2272
      %v2489 = vunpack.c.l.b16 %v2273
      %v2490 = vunpack.c.l.b16 %v2274
      %v2491 = vpack.c.b16 %v2484, %v2483
      %v2492 = vpack.c.b16 %v2486, %v2485
      %v2493 = vpack.c.b16 %v2488, %v2487
      %v2494 = vpack.c.b16 %v2490, %v2489
      %vm2495 = vcmask 261120
      %v2497 = vsel %vm2495, %v2491, 0
      %v2500 = vsel %vm2495, %v2492, 0
      %v2503 = vsel %vm2495, %v2493, 0
      %v2506 = vsel %vm2495, %v2494, 0
      %2508 = vmatprep.subr.bf16.mxu0 %v2468
      %2509 = vmatpush1.bf16.msra.mxu0 %v2467
      %2510 = vmatprep.subr.bf16.mxu0 %v2472
      %2511 = vmatpush1.bf16.msra.mxu0 %v2471
      %2512 = vmatprep.subr.bf16.mxu0 0
      %2513 = vmatpush1.bf16.msra.mxu0 0
      %2514 = vmatprep.subr.bf16.mxu0 0
      %2515 = vmatpush1.bf16.msra.mxu0 0
      %2516 = vmatprep.subr.bf16.mxu0 0
      %2517 = vmatpush1.bf16.msra.mxu0 0
      %2518 = vmatprep.subr.bf16.mxu0 0
      %2519 = vmatpush1.bf16.msra.mxu0 0
      %2520 = vmatprep.subr.bf16.mxu0 0
      %2521 = vmatpush1.bf16.msra.mxu0 0
      %2522 = vmatprep.subr.bf16.mxu0 0
      %2523 = vmatpush1.bf16.msra.mxu0 0
      %2524 = vmatprep.subr.bf16.mxu0 0
      %2525 = vmatpush1.bf16.msra.mxu0 0
      %2526 = vmatprep.subr.bf16.mxu0 0
      %2527 = vmatpush1.bf16.msra.mxu0 0
      %2528 = vmatprep.subr.bf16.mxu0 0
      %2529 = vmatpush1.bf16.msra.mxu0 0
      %2530 = vmatprep.subr.bf16.mxu0 0
      %2531 = vmatpush1.bf16.msra.mxu0 0
      %2532 = vmatprep.subr.bf16.mxu0 0
      %2533 = vmatpush1.bf16.msra.mxu0 0
      %2534 = vmatprep.subr.bf16.mxu0 0
      %2535 = vmatpush1.bf16.msra.mxu0 0
      %2536 = vmatprep.subr.bf16.mxu0 0
      %2537 = vmatpush1.bf16.msra.mxu0 0
      %2538 = vmatprep.subr.bf16.mxu0 0
      %2539 = vmatpush1.bf16.msra.mxu0 0
      %2540 = vmatprep.mubr.bf16.mxu0 0
      %2541 = vmatmul.mubr.bf16.gmra.mrb[0].mxu0 %v2497
      %v2542 = vpop.f32.mrb[0].mxu0
      %v2543 = vadd.f32 0.0, %v2542
      %v2544 = vpop.f32.mrb[0].mxu0
      %v2545 = vadd.f32 0.0, %v2544
      %v2546 = vpop.f32.mrb[0].mxu0
      %v2547 = vadd.f32 0.0, %v2546
      %v2548 = vpop.f32.mrb[0].mxu0
      %v2549 = vadd.f32 0.0, %v2548
      %2550 = vmatprep.mubr.bf16.mxu0 0
      %2551 = vmatmul.mubr.bf16.gmra.mrb[0].mxu0 %v2500
      %v2552 = vpop.f32.mrb[0].mxu0
      %v2553 = vadd.f32 0.0, %v2552
      %v2554 = vpop.f32.mrb[0].mxu0
      %v2555 = vadd.f32 0.0, %v2554
      %v2556 = vpop.f32.mrb[0].mxu0
      %v2557 = vadd.f32 0.0, %v2556
      %v2558 = vpop.f32.mrb[0].mxu0
      %v2559 = vadd.f32 0.0, %v2558
      %2560 = vmatprep.mubr.bf16.mxu0 0
      %2561 = vmatmul.mubr.bf16.gmra.mrb[0].mxu0 %v2503
      %v2562 = vpop.f32.mrb[0].mxu0
      %v2563 = vadd.f32 0.0, %v2562
      %v2564 = vpop.f32.mrb[0].mxu0
      %v2565 = vadd.f32 0.0, %v2564
      %v2566 = vpop.f32.mrb[0].mxu0
      %v2567 = vadd.f32 0.0, %v2566
      %v2568 = vpop.f32.mrb[0].mxu0
      %v2569 = vadd.f32 0.0, %v2568
      %2570 = vmatprep.mubr.bf16.mxu0 0
      %2571 = vmatmul.mubr.bf16.gmra.mrb[0].mxu0 %v2506
      %v2572 = vpop.f32.mrb[0].mxu0
      %v2573 = vadd.f32 0.0, %v2572
      %v2574 = vpop.f32.mrb[0].mxu0
      %v2575 = vadd.f32 0.0, %v2574
      %v2576 = vpop.f32.mrb[0].mxu0
      %v2577 = vadd.f32 0.0, %v2576
      %v2578 = vpop.f32.mrb[0].mxu0
      %v2579 = vadd.f32 0.0, %v2578
      %2580 = vdwg.mxu0
      %2581 = vmatprep.subr.bf16.mxu0 %v2470
      %2582 = vmatpush1.bf16.msra.mxu0 %v2469
      %2583 = vmatprep.subr.bf16.mxu0 %v2474
      %2584 = vmatpush1.bf16.msra.mxu0 %v2473
      %2585 = vmatprep.subr.bf16.mxu0 0
      %2586 = vmatpush1.bf16.msra.mxu0 0
      %2587 = vmatprep.subr.bf16.mxu0 0
      %2588 = vmatpush1.bf16.msra.mxu0 0
      %2589 = vmatprep.subr.bf16.mxu0 0
      %2590 = vmatpush1.bf16.msra.mxu0 0
      %2591 = vmatprep.subr.bf16.mxu0 0
      %2592 = vmatpush1.bf16.msra.mxu0 0
      %2593 = vmatprep.subr.bf16.mxu0 0
      %2594 = vmatpush1.bf16.msra.mxu0 0
      %2595 = vmatprep.subr.bf16.mxu0 0
      %2596 = vmatpush1.bf16.msra.mxu0 0
      %2597 = vmatprep.subr.bf16.mxu0 0
      %2598 = vmatpush1.bf16.msra.mxu0 0
      %2599 = vmatprep.subr.bf16.mxu0 0
      %2600 = vmatpush1.bf16.msra.mxu0 0
      %2601 = vmatprep.subr.bf16.mxu0 0
      %2602 = vmatpush1.bf16.msra.mxu0 0
      %2603 = vmatprep.subr.bf16.mxu0 0
      %2604 = vmatpush1.bf16.msra.mxu0 0
      %2605 = vmatprep.subr.bf16.mxu0 0
      %2606 = vmatpush1.bf16.msra.mxu0 0
      %2607 = vmatprep.subr.bf16.mxu0 0
      %2608 = vmatpush1.bf16.msra.mxu0 0
      %2609 = vmatprep.subr.bf16.mxu0 0
      %2610 = vmatpush1.bf16.msra.mxu0 0
      %2611 = vmatprep.subr.bf16.mxu0 0
      %2612 = vmatpush1.bf16.msra.mxu0 0
      %2613 = vmatprep.mubr.bf16.mxu0 0
      %2614 = vmatmul.mubr.bf16.gmra.mrb[0].mxu0 %v2497
      %v2615 = vpop.f32.mrb[0].mxu0
      %v2616 = vadd.f32 0.0, %v2615
      %v2617 = vpop.f32.mrb[0].mxu0
      %v2618 = vadd.f32 0.0, %v2617
      %v2619 = vpop.f32.mrb[0].mxu0
      %v2620 = vadd.f32 0.0, %v2619
      %v2621 = vpop.f32.mrb[0].mxu0
      %v2622 = vadd.f32 0.0, %v2621
      %2623 = vmatprep.mubr.bf16.mxu0 0
      %2624 = vmatmul.mubr.bf16.gmra.mrb[0].mxu0 %v2500
      %v2625 = vpop.f32.mrb[0].mxu0
      %v2626 = vadd.f32 0.0, %v2625
      %v2627 = vpop.f32.mrb[0].mxu0
      %v2628 = vadd.f32 0.0, %v2627
      %v2629 = vpop.f32.mrb[0].mxu0
      %v2630 = vadd.f32 0.0, %v2629
      %v2631 = vpop.f32.mrb[0].mxu0
      %v2632 = vadd.f32 0.0, %v2631
      %2633 = vmatprep.mubr.bf16.mxu0 0
      %2634 = vmatmul.mubr.bf16.gmra.mrb[0].mxu0 %v2503
      %v2635 = vpop.f32.mrb[0].mxu0
      %v2636 = vadd.f32 0.0, %v2635
      %v2637 = vpop.f32.mrb[0].mxu0
      %v2638 = vadd.f32 0.0, %v2637
      %v2639 = vpop.f32.mrb[0].mxu0
      %v2640 = vadd.f32 0.0, %v2639
      %v2641 = vpop.f32.mrb[0].mxu0
      %v2642 = vadd.f32 0.0, %v2641
      %2643 = vmatprep.mubr.bf16.mxu0 0
      %2644 = vmatmul.mubr.bf16.gmra.mrb[0].mxu0 %v2506
      %v2645 = vpop.f32.mrb[0].mxu0
      %v2646 = vadd.f32 0.0, %v2645
      %v2647 = vpop.f32.mrb[0].mxu0
      %v2648 = vadd.f32 0.0, %v2647
      %v2649 = vpop.f32.mrb[0].mxu0
      %v2650 = vadd.f32 0.0, %v2649
      %v2651 = vpop.f32.mrb[0].mxu0
      %v2652 = vadd.f32 0.0, %v2651
      %2653 = vdwg.mxu0
      %v2662 = vunpack.c.l.b16 %v2259
      %v2663 = vunpack.c.l.b16 %v2260
      %v2664 = vunpack.c.l.b16 %v2261
      %v2665 = vunpack.c.l.b16 %v2262
      %v2666 = vunpack.c.l.b16 %v2263
      %v2667 = vunpack.c.l.b16 %v2264
      %v2668 = vunpack.c.l.b16 %v2265
      %v2669 = vunpack.c.l.b16 %v2266
      %v2670 = vpack.c.b16 %v2663, %v2662
      %v2671 = vpack.c.b16 %v2665, %v2664
      %v2672 = vpack.c.b16 %v2667, %v2666
      %v2673 = vpack.c.b16 %v2669, %v2668
      %v2675 = vsel %vm2495, %v2670, 0
      %v2678 = vsel %vm2495, %v2671, 0
      %v2681 = vsel %vm2495, %v2672, 0
      %v2684 = vsel %vm2495, %v2673, 0
      %2686 = vmatprep.subr.bf16.mxu0 %v2396
      %2687 = vmatpush1.bf16.msra.mxu0 %v2395
      %2688 = vmatprep.subr.bf16.mxu0 %v2400
      %2689 = vmatpush1.bf16.msra.mxu0 %v2399
      %2690 = vmatprep.subr.bf16.mxu0 0
      %2691 = vmatpush1.bf16.msra.mxu0 0
      %2692 = vmatprep.subr.bf16.mxu0 0
      %2693 = vmatpush1.bf16.msra.mxu0 0
      %2694 = vmatprep.subr.bf16.mxu0 0
      %2695 = vmatpush1.bf16.msra.mxu0 0
      %2696 = vmatprep.subr.bf16.mxu0 0
      %2697 = vmatpush1.bf16.msra.mxu0 0
      %2698 = vmatprep.subr.bf16.mxu0 0
      %2699 = vmatpush1.bf16.msra.mxu0 0
      %2700 = vmatprep.subr.bf16.mxu0 0
      %2701 = vmatpush1.bf16.msra.mxu0 0
      %2702 = vmatprep.subr.bf16.mxu0 0
      %2703 = vmatpush1.bf16.msra.mxu0 0
      %2704 = vmatprep.subr.bf16.mxu0 0
      %2705 = vmatpush1.bf16.msra.mxu0 0
      %2706 = vmatprep.subr.bf16.mxu0 0
      %2707 = vmatpush1.bf16.msra.mxu0 0
      %2708 = vmatprep.subr.bf16.mxu0 0
      %2709 = vmatpush1.bf16.msra.mxu0 0
      %2710 = vmatprep.subr.bf16.mxu0 0
      %2711 = vmatpush1.bf16.msra.mxu0 0
      %2712 = vmatprep.subr.bf16.mxu0 0
      %2713 = vmatpush1.bf16.msra.mxu0 0
      %2714 = vmatprep.subr.bf16.mxu0 0
      %2715 = vmatpush1.bf16.msra.mxu0 0
      %2716 = vmatprep.subr.bf16.mxu0 0
      %2717 = vmatpush1.bf16.msra.mxu0 0
      %2718 = vmatprep.mubr.bf16.mxu0 0
      %2719 = vmatmul.mubr.bf16.gmra.mrb[0].mxu0 %v2675
      %v2720 = vpop.f32.mrb[0].mxu0
      %v2721 = vadd.f32 %v2543, %v2720
      %v2722 = vpop.f32.mrb[0].mxu0
      %v2723 = vadd.f32 %v2545, %v2722
      %v2724 = vpop.f32.mrb[0].mxu0
      %v2725 = vadd.f32 %v2547, %v2724
      %v2726 = vpop.f32.mrb[0].mxu0
      %v2727 = vadd.f32 %v2549, %v2726
      %2728 = vmatprep.mubr.bf16.mxu0 0
      %2729 = vmatmul.mubr.bf16.gmra.mrb[0].mxu0 %v2678
      %v2730 = vpop.f32.mrb[0].mxu0
      %v2731 = vadd.f32 %v2553, %v2730
      %v2732 = vpop.f32.mrb[0].mxu0
      %v2733 = vadd.f32 %v2555, %v2732
      %v2734 = vpop.f32.mrb[0].mxu0
      %v2735 = vadd.f32 %v2557, %v2734
      %v2736 = vpop.f32.mrb[0].mxu0
      %v2737 = vadd.f32 %v2559, %v2736
      %2738 = vmatprep.mubr.bf16.mxu0 0
      %2739 = vmatmul.mubr.bf16.gmra.mrb[0].mxu0 %v2681
      %v2740 = vpop.f32.mrb[0].mxu0
      %v2741 = vadd.f32 %v2563, %v2740
      %v2742 = vpop.f32.mrb[0].mxu0
      %v2743 = vadd.f32 %v2565, %v2742
      %v2744 = vpop.f32.mrb[0].mxu0
      %v2745 = vadd.f32 %v2567, %v2744
      %v2746 = vpop.f32.mrb[0].mxu0
      %v2747 = vadd.f32 %v2569, %v2746
      %2748 = vmatprep.mubr.bf16.mxu0 0
      %2749 = vmatmul.mubr.bf16.gmra.mrb[0].mxu0 %v2684
      %v2750 = vpop.f32.mrb[0].mxu0
      %v2751 = vadd.f32 %v2573, %v2750
      %v2752 = vpop.f32.mrb[0].mxu0
      %v2753 = vadd.f32 %v2575, %v2752
      %v2754 = vpop.f32.mrb[0].mxu0
      %v2755 = vadd.f32 %v2577, %v2754
      %v2756 = vpop.f32.mrb[0].mxu0
      %v2757 = vadd.f32 %v2579, %v2756
      %2758 = vdwg.mxu0
      %2759 = vmatprep.subr.bf16.mxu0 %v2398
      %2760 = vmatpush1.bf16.msra.mxu0 %v2397
      %2761 = vmatprep.subr.bf16.mxu0 %v2402
      %2762 = vmatpush1.bf16.msra.mxu0 %v2401
      %2763 = vmatprep.subr.bf16.mxu0 0
      %2764 = vmatpush1.bf16.msra.mxu0 0
      %2765 = vmatprep.subr.bf16.mxu0 0
      %2766 = vmatpush1.bf16.msra.mxu0 0
      %2767 = vmatprep.subr.bf16.mxu0 0
      %2768 = vmatpush1.bf16.msra.mxu0 0
      %2769 = vmatprep.subr.bf16.mxu0 0
      %2770 = vmatpush1.bf16.msra.mxu0 0
      %2771 = vmatprep.subr.bf16.mxu0 0
      %2772 = vmatpush1.bf16.msra.mxu0 0
      %2773 = vmatprep.subr.bf16.mxu0 0
      %2774 = vmatpush1.bf16.msra.mxu0 0
      %2775 = vmatprep.subr.bf16.mxu0 0
      %2776 = vmatpush1.bf16.msra.mxu0 0
      %2777 = vmatprep.subr.bf16.mxu0 0
      %2778 = vmatpush1.bf16.msra.mxu0 0
      %2779 = vmatprep.subr.bf16.mxu0 0
      %2780 = vmatpush1.bf16.msra.mxu0 0
      %2781 = vmatprep.subr.bf16.mxu0 0
      %2782 = vmatpush1.bf16.msra.mxu0 0
      %2783 = vmatprep.subr.bf16.mxu0 0
      %2784 = vmatpush1.bf16.msra.mxu0 0
      %2785 = vmatprep.subr.bf16.mxu0 0
      %2786 = vmatpush1.bf16.msra.mxu0 0
      %2787 = vmatprep.subr.bf16.mxu0 0
      %2788 = vmatpush1.bf16.msra.mxu0 0
      %2789 = vmatprep.subr.bf16.mxu0 0
      %2790 = vmatpush1.bf16.msra.mxu0 0
      %2791 = vmatprep.mubr.bf16.mxu0 0
      %2792 = vmatmul.mubr.bf16.gmra.mrb[0].mxu0 %v2675
      %v2793 = vpop.f32.mrb[0].mxu0
      %v2794 = vadd.f32 %v2616, %v2793
      %v2795 = vpop.f32.mrb[0].mxu0
      %v2796 = vadd.f32 %v2618, %v2795
      %v2797 = vpop.f32.mrb[0].mxu0
      %v2798 = vadd.f32 %v2620, %v2797
      %v2799 = vpop.f32.mrb[0].mxu0
      %v2800 = vadd.f32 %v2622, %v2799
      %2801 = vmatprep.mubr.bf16.mxu0 0
      %2802 = vmatmul.mubr.bf16.gmra.mrb[0].mxu0 %v2678
      %v2803 = vpop.f32.mrb[0].mxu0
      %v2804 = vadd.f32 %v2626, %v2803
      %v2805 = vpop.f32.mrb[0].mxu0
      %v2806 = vadd.f32 %v2628, %v2805
      %v2807 = vpop.f32.mrb[0].mxu0
      %v2808 = vadd.f32 %v2630, %v2807
      %v2809 = vpop.f32.mrb[0].mxu0
      %v2810 = vadd.f32 %v2632, %v2809
      %2811 = vmatprep.mubr.bf16.mxu0 0
      %2812 = vmatmul.mubr.bf16.gmra.mrb[0].mxu0 %v2681
      %v2813 = vpop.f32.mrb[0].mxu0
      %v2814 = vadd.f32 %v2636, %v2813
      %v2815 = vpop.f32.mrb[0].mxu0
      %v2816 = vadd.f32 %v2638, %v2815
      %v2817 = vpop.f32.mrb[0].mxu0
      %v2818 = vadd.f32 %v2640, %v2817
      %v2819 = vpop.f32.mrb[0].mxu0
      %v2820 = vadd.f32 %v2642, %v2819
      %2821 = vmatprep.mubr.bf16.mxu0 0
      %2822 = vmatmul.mubr.bf16.gmra.mrb[0].mxu0 %v2684
      %v2823 = vpop.f32.mrb[0].mxu0
      %v2824 = vadd.f32 %v2646, %v2823
      %v2825 = vpop.f32.mrb[0].mxu0
      %v2826 = vadd.f32 %v2648, %v2825
      %v2827 = vpop.f32.mrb[0].mxu0
      %v2828 = vadd.f32 %v2650, %v2827
      %v2829 = vpop.f32.mrb[0].mxu0
      %v2830 = vadd.f32 %v2652, %v2829
      %2831 = vdwg.mxu0
      %2832 = vrot.lane.b32.xlu0 %v2243, 15
      %v2833 = vpop.permute.xlu0 %2832
      %2834 = vrot.lane.b32.xlu0 %v2247, 15
      %v2835 = vpop.permute.xlu0 %2834
      %2836 = vrot.lane.b32.xlu0 %v2251, 15
      %v2837 = vpop.permute.xlu0 %2836
      %2838 = vrot.lane.b32.xlu0 %v2255, 15
      %v2839 = vpop.permute.xlu0 %2838
      %2840 = vrot.lane.b32.xlu0 %v2244, 15
      %v2841 = vpop.permute.xlu0 %2840
      %2842 = vrot.lane.b32.xlu0 %v2248, 15
      %v2843 = vpop.permute.xlu0 %2842
      %2844 = vrot.lane.b32.xlu0 %v2252, 15
      %v2845 = vpop.permute.xlu0 %2844
      %2846 = vrot.lane.b32.xlu0 %v2256, 15
      %v2847 = vpop.permute.xlu0 %2846
      %2848 = vrot.lane.b32.xlu0 %v2245, 15
      %v2849 = vpop.permute.xlu0 %2848
      %2850 = vrot.lane.b32.xlu0 %v2249, 15
      %v2851 = vpop.permute.xlu0 %2850
      %2852 = vrot.lane.b32.xlu0 %v2253, 15
      %v2853 = vpop.permute.xlu0 %2852
      %2854 = vrot.lane.b32.xlu0 %v2257, 15
      %v2855 = vpop.permute.xlu0 %2854
      %2856 = vrot.lane.b32.xlu0 %v2246, 15
      %v2857 = vpop.permute.xlu0 %2856
      %2858 = vrot.lane.b32.xlu0 %v2250, 15
      %v2859 = vpop.permute.xlu0 %2858
      %2860 = vrot.lane.b32.xlu0 %v2254, 15
      %v2861 = vpop.permute.xlu0 %2860
      %2862 = vrot.lane.b32.xlu0 %v2258, 15
      %v2863 = vpop.permute.xlu0 %2862
      %v2864 = vsel %vm741, %v2849, %v2857
      %v2865 = vsel %vm741, %v2851, %v2859
      %v2866 = vsel %vm741, %v2853, %v2861
      %v2867 = vsel %vm741, %v2855, %v2863
      %v2868 = vsel %vm741, %v2841, %v2849
      %v2869 = vsel %vm741, %v2843, %v2851
      %v2870 = vsel %vm741, %v2845, %v2853
      %v2871 = vsel %vm741, %v2847, %v2855
      %v2872 = vsel %vm741, %v2833, %v2841
      %v2873 = vsel %vm741, %v2835, %v2843
      %v2874 = vsel %vm741, %v2837, %v2845
      %v2875 = vsel %vm741, %v2839, %v2847
      %v2876 = vsel %vm741, %v2857, %v2833
      %v2877 = vsel %vm741, %v2859, %v2835
      %v2878 = vsel %vm741, %v2861, %v2837
      %v2879 = vsel %vm741, %v2863, %v2839
      %v2880 = vmul.f32 %v2876, %v749
      %v2881 = vmul.f32 %v2872, %v753
      %v2882 = vmul.f32 %v2868, %v757
      %v2883 = vmul.f32 %v2864, %v761
      %v2884 = vmul.f32 %v2877, %v749
      %v2885 = vmul.f32 %v2873, %v753
      %v2886 = vmul.f32 %v2869, %v757
      %v2887 = vmul.f32 %v2865, %v761
      %v2888 = vmul.f32 %v2878, %v749
      %v2889 = vmul.f32 %v2874, %v753
      %v2890 = vmul.f32 %v2870, %v757
      %v2891 = vmul.f32 %v2866, %v761
      %v2892 = vmul.f32 %v2879, %v749
      %v2893 = vmul.f32 %v2875, %v753
      %v2894 = vmul.f32 %v2871, %v757
      %v2895 = vmul.f32 %v2867, %v761
      %v2896 = vpack.c.bf16 %v2884, %v2880
      %v2897 = vpack.c.bf16 %v2885, %v2881
      %v2898 = vpack.c.bf16 %v2886, %v2882
      %v2899 = vpack.c.bf16 %v2887, %v2883
      %v2900 = vpack.c.bf16 %v2892, %v2888
      %v2901 = vpack.c.bf16 %v2893, %v2889
      %v2902 = vpack.c.bf16 %v2894, %v2890
      %v2903 = vpack.c.bf16 %v2895, %v2891
      %v2912 = vunpack.c.l.b16 %v2275
      %v2913 = vunpack.c.l.b16 %v2276
      %v2914 = vunpack.c.l.b16 %v2277
      %v2915 = vunpack.c.l.b16 %v2278
      %v2916 = vunpack.c.l.b16 %v2279
      %v2917 = vunpack.c.l.b16 %v2280
      %v2918 = vunpack.c.l.b16 %v2281
      %v2919 = vunpack.c.l.b16 %v2282
      %v2920 = vpack.c.b16 %v2913, %v2912
      %v2921 = vpack.c.b16 %v2915, %v2914
      %v2922 = vpack.c.b16 %v2917, %v2916
      %v2923 = vpack.c.b16 %v2919, %v2918
      %v2925 = vsel %vm2495, %v2920, 0
      %v2928 = vsel %vm2495, %v2921, 0
      %v2931 = vsel %vm2495, %v2922, 0
      %v2934 = vsel %vm2495, %v2923, 0
      %2936 = vmatprep.subr.bf16.mxu0 %v2897
      %2937 = vmatpush1.bf16.msra.mxu0 %v2896
      %2938 = vmatprep.subr.bf16.mxu0 %v2901
      %2939 = vmatpush1.bf16.msra.mxu0 %v2900
      %2940 = vmatprep.subr.bf16.mxu0 0
      %2941 = vmatpush1.bf16.msra.mxu0 0
      %2942 = vmatprep.subr.bf16.mxu0 0
      %2943 = vmatpush1.bf16.msra.mxu0 0
      %2944 = vmatprep.subr.bf16.mxu0 0
      %2945 = vmatpush1.bf16.msra.mxu0 0
      %2946 = vmatprep.subr.bf16.mxu0 0
      %2947 = vmatpush1.bf16.msra.mxu0 0
      %2948 = vmatprep.subr.bf16.mxu0 0
      %2949 = vmatpush1.bf16.msra.mxu0 0
      %2950 = vmatprep.subr.bf16.mxu0 0
      %2951 = vmatpush1.bf16.msra.mxu0 0
      %2952 = vmatprep.subr.bf16.mxu0 0
      %2953 = vmatpush1.bf16.msra.mxu0 0
      %2954 = vmatprep.subr.bf16.mxu0 0
      %2955 = vmatpush1.bf16.msra.mxu0 0
      %2956 = vmatprep.subr.bf16.mxu0 0
      %2957 = vmatpush1.bf16.msra.mxu0 0
      %2958 = vmatprep.subr.bf16.mxu0 0
      %2959 = vmatpush1.bf16.msra.mxu0 0
      %2960 = vmatprep.subr.bf16.mxu0 0
      %2961 = vmatpush1.bf16.msra.mxu0 0
      %2962 = vmatprep.subr.bf16.mxu0 0
      %2963 = vmatpush1.bf16.msra.mxu0 0
      %2964 = vmatprep.subr.bf16.mxu0 0
      %2965 = vmatpush1.bf16.msra.mxu0 0
      %2966 = vmatprep.subr.bf16.mxu0 0
      %2967 = vmatpush1.bf16.msra.mxu0 0
      %2968 = vmatprep.mubr.bf16.mxu0 0
      %2969 = vmatmul.mubr.bf16.gmra.mrb[0].mxu0 %v2925
      %v2970 = vpop.f32.mrb[0].mxu0
      %v2971 = vadd.f32 0.0, %v2970
      %v2972 = vpop.f32.mrb[0].mxu0
      %v2973 = vadd.f32 0.0, %v2972
      %v2974 = vpop.f32.mrb[0].mxu0
      %v2975 = vadd.f32 0.0, %v2974
      %v2976 = vpop.f32.mrb[0].mxu0
      %v2977 = vadd.f32 0.0, %v2976
      %2978 = vmatprep.mubr.bf16.mxu0 0
      %2979 = vmatmul.mubr.bf16.gmra.mrb[0].mxu0 %v2928
      %v2980 = vpop.f32.mrb[0].mxu0
      %v2981 = vadd.f32 0.0, %v2980
      %v2982 = vpop.f32.mrb[0].mxu0
      %v2983 = vadd.f32 0.0, %v2982
      %v2984 = vpop.f32.mrb[0].mxu0
      %v2985 = vadd.f32 0.0, %v2984
      %v2986 = vpop.f32.mrb[0].mxu0
      %v2987 = vadd.f32 0.0, %v2986
      %2988 = vmatprep.mubr.bf16.mxu0 0
      %2989 = vmatmul.mubr.bf16.gmra.mrb[0].mxu0 %v2931
      %v2990 = vpop.f32.mrb[0].mxu0
      %v2991 = vadd.f32 0.0, %v2990
      %v2992 = vpop.f32.mrb[0].mxu0
      %v2993 = vadd.f32 0.0, %v2992
      %v2994 = vpop.f32.mrb[0].mxu0
      %v2995 = vadd.f32 0.0, %v2994
      %v2996 = vpop.f32.mrb[0].mxu0
      %v2997 = vadd.f32 0.0, %v2996
      %2998 = vmatprep.mubr.bf16.mxu0 0
      %2999 = vmatmul.mubr.bf16.gmra.mrb[0].mxu0 %v2934
      %v3000 = vpop.f32.mrb[0].mxu0
      %v3001 = vadd.f32 0.0, %v3000
      %v3002 = vpop.f32.mrb[0].mxu0
      %v3003 = vadd.f32 0.0, %v3002
      %v3004 = vpop.f32.mrb[0].mxu0
      %v3005 = vadd.f32 0.0, %v3004
      %v3006 = vpop.f32.mrb[0].mxu0
      %v3007 = vadd.f32 0.0, %v3006
      %3008 = vdwg.mxu0
      %3009 = vmatprep.subr.bf16.mxu0 %v2899
      %3010 = vmatpush1.bf16.msra.mxu0 %v2898
      %3011 = vmatprep.subr.bf16.mxu0 %v2903
      %3012 = vmatpush1.bf16.msra.mxu0 %v2902
      %3013 = vmatprep.subr.bf16.mxu0 0
      %3014 = vmatpush1.bf16.msra.mxu0 0
      %3015 = vmatprep.subr.bf16.mxu0 0
      %3016 = vmatpush1.bf16.msra.mxu0 0
      %3017 = vmatprep.subr.bf16.mxu0 0
      %3018 = vmatpush1.bf16.msra.mxu0 0
      %3019 = vmatprep.subr.bf16.mxu0 0
      %3020 = vmatpush1.bf16.msra.mxu0 0
      %3021 = vmatprep.subr.bf16.mxu0 0
      %3022 = vmatpush1.bf16.msra.mxu0 0
      %3023 = vmatprep.subr.bf16.mxu0 0
      %3024 = vmatpush1.bf16.msra.mxu0 0
      %3025 = vmatprep.subr.bf16.mxu0 0
      %3026 = vmatpush1.bf16.msra.mxu0 0
      %3027 = vmatprep.subr.bf16.mxu0 0
      %3028 = vmatpush1.bf16.msra.mxu0 0
      %3029 = vmatprep.subr.bf16.mxu0 0
      %3030 = vmatpush1.bf16.msra.mxu0 0
      %3031 = vmatprep.subr.bf16.mxu0 0
      %3032 = vmatpush1.bf16.msra.mxu0 0
      %3033 = vmatprep.subr.bf16.mxu0 0
      %3034 = vmatpush1.bf16.msra.mxu0 0
      %3035 = vmatprep.subr.bf16.mxu0 0
      %3036 = vmatpush1.bf16.msra.mxu0 0
      %3037 = vmatprep.subr.bf16.mxu0 0
      %3038 = vmatpush1.bf16.msra.mxu0 0
      %3039 = vmatprep.subr.bf16.mxu0 0
      %3040 = vmatpush1.bf16.msra.mxu0 0
      %3041 = vmatprep.mubr.bf16.mxu0 0
      %3042 = vmatmul.mubr.bf16.gmra.mrb[0].mxu0 %v2925
      %v3043 = vpop.f32.mrb[0].mxu0
      %v3044 = vadd.f32 0.0, %v3043
      %v3045 = vpop.f32.mrb[0].mxu0
      %v3046 = vadd.f32 0.0, %v3045
      %v3047 = vpop.f32.mrb[0].mxu0
      %v3048 = vadd.f32 0.0, %v3047
      %v3049 = vpop.f32.mrb[0].mxu0
      %v3050 = vadd.f32 0.0, %v3049
      %3051 = vmatprep.mubr.bf16.mxu0 0
      %3052 = vmatmul.mubr.bf16.gmra.mrb[0].mxu0 %v2928
      %v3053 = vpop.f32.mrb[0].mxu0
      %v3054 = vadd.f32 0.0, %v3053
      %v3055 = vpop.f32.mrb[0].mxu0
      %v3056 = vadd.f32 0.0, %v3055
      %v3057 = vpop.f32.mrb[0].mxu0
      %v3058 = vadd.f32 0.0, %v3057
      %v3059 = vpop.f32.mrb[0].mxu0
      %v3060 = vadd.f32 0.0, %v3059
      %3061 = vmatprep.mubr.bf16.mxu0 0
      %3062 = vmatmul.mubr.bf16.gmra.mrb[0].mxu0 %v2931
      %v3063 = vpop.f32.mrb[0].mxu0
      %v3064 = vadd.f32 0.0, %v3063
      %v3065 = vpop.f32.mrb[0].mxu0
      %v3066 = vadd.f32 0.0, %v3065
      %v3067 = vpop.f32.mrb[0].mxu0
      %v3068 = vadd.f32 0.0, %v3067
      %v3069 = vpop.f32.mrb[0].mxu0
      %v3070 = vadd.f32 0.0, %v3069
      %3071 = vmatprep.mubr.bf16.mxu0 0
      %3072 = vmatmul.mubr.bf16.gmra.mrb[0].mxu0 %v2934
      %v3073 = vpop.f32.mrb[0].mxu0
      %v3074 = vadd.f32 0.0, %v3073
      %v3075 = vpop.f32.mrb[0].mxu0
      %v3076 = vadd.f32 0.0, %v3075
      %v3077 = vpop.f32.mrb[0].mxu0
      %v3078 = vadd.f32 0.0, %v3077
      %v3079 = vpop.f32.mrb[0].mxu0
      %v3080 = vadd.f32 0.0, %v3079
      %3081 = vdwg.mxu0
      %v3082 = vadd.f32 %v2721, %v2971
      %v3083 = vadd.f32 %v2723, %v2973
      %v3084 = vadd.f32 %v2794, %v3044
      %v3085 = vadd.f32 %v2796, %v3046
      %v3086 = vadd.f32 %v2725, %v2975
      %v3087 = vadd.f32 %v2727, %v2977
      %v3088 = vadd.f32 %v2798, %v3048
      %v3089 = vadd.f32 %v2800, %v3050
      %v3090 = vadd.f32 %v2731, %v2981
      %v3091 = vadd.f32 %v2733, %v2983
      %v3092 = vadd.f32 %v2804, %v3054
      %v3093 = vadd.f32 %v2806, %v3056
      %v3094 = vadd.f32 %v2735, %v2985
      %v3095 = vadd.f32 %v2737, %v2987
      %v3096 = vadd.f32 %v2808, %v3058
      %v3097 = vadd.f32 %v2810, %v3060
      %v3098 = vadd.f32 %v2741, %v2991
      %v3099 = vadd.f32 %v2743, %v2993
      %v3100 = vadd.f32 %v2814, %v3064
      %v3101 = vadd.f32 %v2816, %v3066
      %v3102 = vadd.f32 %v2745, %v2995
      %v3103 = vadd.f32 %v2747, %v2997
      %v3104 = vadd.f32 %v2818, %v3068
      %v3105 = vadd.f32 %v2820, %v3070
      %v3106 = vadd.f32 %v2751, %v3001
      %v3107 = vadd.f32 %v2753, %v3003
      %v3108 = vadd.f32 %v2824, %v3074
      %v3109 = vadd.f32 %v2826, %v3076
      %v3110 = vadd.f32 %v2755, %v3005
      %v3111 = vadd.f32 %v2757, %v3007
      %v3112 = vadd.f32 %v2828, %v3078
      %v3113 = vadd.f32 %v2830, %v3080
      %3114 = vrot.lane.b32.xlu0 %v2243, 1
      %v3115 = vpop.permute.xlu0 %3114
      %3116 = vrot.lane.b32.xlu0 %v2247, 1
      %v3117 = vpop.permute.xlu0 %3116
      %3118 = vrot.lane.b32.xlu0 %v2251, 1
      %v3119 = vpop.permute.xlu0 %3118
      %3120 = vrot.lane.b32.xlu0 %v2255, 1
      %v3121 = vpop.permute.xlu0 %3120
      %3122 = vrot.lane.b32.xlu0 %v2244, 1
      %v3123 = vpop.permute.xlu0 %3122
      %3124 = vrot.lane.b32.xlu0 %v2248, 1
      %v3125 = vpop.permute.xlu0 %3124
      %3126 = vrot.lane.b32.xlu0 %v2252, 1
      %v3127 = vpop.permute.xlu0 %3126
      %3128 = vrot.lane.b32.xlu0 %v2256, 1
      %v3129 = vpop.permute.xlu0 %3128
      %3130 = vrot.lane.b32.xlu0 %v2245, 1
      %v3131 = vpop.permute.xlu0 %3130
      %3132 = vrot.lane.b32.xlu0 %v2249, 1
      %v3133 = vpop.permute.xlu0 %3132
      %3134 = vrot.lane.b32.xlu0 %v2253, 1
      %v3135 = vpop.permute.xlu0 %3134
      %3136 = vrot.lane.b32.xlu0 %v2257, 1
      %v3137 = vpop.permute.xlu0 %3136
      %3138 = vrot.lane.b32.xlu0 %v2246, 1
      %v3139 = vpop.permute.xlu0 %3138
      %3140 = vrot.lane.b32.xlu0 %v2250, 1
      %v3141 = vpop.permute.xlu0 %3140
      %3142 = vrot.lane.b32.xlu0 %v2254, 1
      %v3143 = vpop.permute.xlu0 %3142
      %3144 = vrot.lane.b32.xlu0 %v2258, 1
      %v3145 = vpop.permute.xlu0 %3144
      %v3146 = vsel %vm879, %v3131, %v3139
      %v3147 = vsel %vm879, %v3133, %v3141
      %v3148 = vsel %vm879, %v3135, %v3143
      %v3149 = vsel %vm879, %v3137, %v3145
      %v3150 = vsel %vm879, %v3123, %v3131
      %v3151 = vsel %vm879, %v3125, %v3133
      %v3152 = vsel %vm879, %v3127, %v3135
      %v3153 = vsel %vm879, %v3129, %v3137
      %v3154 = vsel %vm879, %v3115, %v3123
      %v3155 = vsel %vm879, %v3117, %v3125
      %v3156 = vsel %vm879, %v3119, %v3127
      %v3157 = vsel %vm879, %v3121, %v3129
      %v3158 = vsel %vm879, %v3139, %v3115
      %v3159 = vsel %vm879, %v3141, %v3117
      %v3160 = vsel %vm879, %v3143, %v3119
      %v3161 = vsel %vm879, %v3145, %v3121
      %v3162 = vmul.f32 %v3158, %v887
      %v3163 = vmul.f32 %v3154, %v891
      %v3164 = vmul.f32 %v3150, %v895
      %v3165 = vmul.f32 %v3146, %v899
      %v3166 = vmul.f32 %v3159, %v887
      %v3167 = vmul.f32 %v3155, %v891
      %v3168 = vmul.f32 %v3151, %v895
      %v3169 = vmul.f32 %v3147, %v899
      %v3170 = vmul.f32 %v3160, %v887
      %v3171 = vmul.f32 %v3156, %v891
      %v3172 = vmul.f32 %v3152, %v895
      %v3173 = vmul.f32 %v3148, %v899
      %v3174 = vmul.f32 %v3161, %v887
      %v3175 = vmul.f32 %v3157, %v891
      %v3176 = vmul.f32 %v3153, %v895
      %v3177 = vmul.f32 %v3149, %v899
      %v3178 = vpack.c.bf16 %v3166, %v3162
      %v3179 = vpack.c.bf16 %v3167, %v3163
      %v3180 = vpack.c.bf16 %v3168, %v3164
      %v3181 = vpack.c.bf16 %v3169, %v3165
      %v3182 = vpack.c.bf16 %v3174, %v3170
      %v3183 = vpack.c.bf16 %v3175, %v3171
      %v3184 = vpack.c.bf16 %v3176, %v3172
      %v3185 = vpack.c.bf16 %v3177, %v3173
      %v3194 = vunpack.c.l.b16 %v2283
      %v3195 = vunpack.c.l.b16 %v2284
      %v3196 = vunpack.c.l.b16 %v2285
      %v3197 = vunpack.c.l.b16 %v2286
      %v3198 = vunpack.c.l.b16 %v2287
      %v3199 = vunpack.c.l.b16 %v2288
      %v3200 = vunpack.c.l.b16 %v2289
      %v3201 = vunpack.c.l.b16 %v2290
      %v3202 = vpack.c.b16 %v3195, %v3194
      %v3203 = vpack.c.b16 %v3197, %v3196
      %v3204 = vpack.c.b16 %v3199, %v3198
      %v3205 = vpack.c.b16 %v3201, %v3200
      %v3207 = vsel %vm2495, %v3202, 0
      %v3210 = vsel %vm2495, %v3203, 0
      %v3213 = vsel %vm2495, %v3204, 0
      %v3216 = vsel %vm2495, %v3205, 0
      %3218 = vmatprep.subr.bf16.mxu0 %v3179
      %3219 = vmatpush1.bf16.msra.mxu0 %v3178
      %3220 = vmatprep.subr.bf16.mxu0 %v3183
      %3221 = vmatpush1.bf16.msra.mxu0 %v3182
      %3222 = vmatprep.subr.bf16.mxu0 0
      %3223 = vmatpush1.bf16.msra.mxu0 0
      %3224 = vmatprep.subr.bf16.mxu0 0
      %3225 = vmatpush1.bf16.msra.mxu0 0
      %3226 = vmatprep.subr.bf16.mxu0 0
      %3227 = vmatpush1.bf16.msra.mxu0 0
      %3228 = vmatprep.subr.bf16.mxu0 0
      %3229 = vmatpush1.bf16.msra.mxu0 0
      %3230 = vmatprep.subr.bf16.mxu0 0
      %3231 = vmatpush1.bf16.msra.mxu0 0
      %3232 = vmatprep.subr.bf16.mxu0 0
      %3233 = vmatpush1.bf16.msra.mxu0 0
      %3234 = vmatprep.subr.bf16.mxu0 0
      %3235 = vmatpush1.bf16.msra.mxu0 0
      %3236 = vmatprep.subr.bf16.mxu0 0
      %3237 = vmatpush1.bf16.msra.mxu0 0
      %3238 = vmatprep.subr.bf16.mxu0 0
      %3239 = vmatpush1.bf16.msra.mxu0 0
      %3240 = vmatprep.subr.bf16.mxu0 0
      %3241 = vmatpush1.bf16.msra.mxu0 0
      %3242 = vmatprep.subr.bf16.mxu0 0
      %3243 = vmatpush1.bf16.msra.mxu0 0
      %3244 = vmatprep.subr.bf16.mxu0 0
      %3245 = vmatpush1.bf16.msra.mxu0 0
      %3246 = vmatprep.subr.bf16.mxu0 0
      %3247 = vmatpush1.bf16.msra.mxu0 0
      %3248 = vmatprep.subr.bf16.mxu0 0
      %3249 = vmatpush1.bf16.msra.mxu0 0
      %3250 = vmatprep.mubr.bf16.mxu0 0
      %3251 = vmatmul.mubr.bf16.gmra.mrb[0].mxu0 %v3207
      %v3252 = vpop.f32.mrb[0].mxu0
      %v3253 = vadd.f32 0.0, %v3252
      %v3254 = vpop.f32.mrb[0].mxu0
      %v3255 = vadd.f32 0.0, %v3254
      %v3256 = vpop.f32.mrb[0].mxu0
      %v3257 = vadd.f32 0.0, %v3256
      %v3258 = vpop.f32.mrb[0].mxu0
      %v3259 = vadd.f32 0.0, %v3258
      %3260 = vmatprep.mubr.bf16.mxu0 0
      %3261 = vmatmul.mubr.bf16.gmra.mrb[0].mxu0 %v3210
      %v3262 = vpop.f32.mrb[0].mxu0
      %v3263 = vadd.f32 0.0, %v3262
      %v3264 = vpop.f32.mrb[0].mxu0
      %v3265 = vadd.f32 0.0, %v3264
      %v3266 = vpop.f32.mrb[0].mxu0
      %v3267 = vadd.f32 0.0, %v3266
      %v3268 = vpop.f32.mrb[0].mxu0
      %v3269 = vadd.f32 0.0, %v3268
      %3270 = vmatprep.mubr.bf16.mxu0 0
      %3271 = vmatmul.mubr.bf16.gmra.mrb[0].mxu0 %v3213
      %v3272 = vpop.f32.mrb[0].mxu0
      %v3273 = vadd.f32 0.0, %v3272
      %v3274 = vpop.f32.mrb[0].mxu0
      %v3275 = vadd.f32 0.0, %v3274
      %v3276 = vpop.f32.mrb[0].mxu0
      %v3277 = vadd.f32 0.0, %v3276
      %v3278 = vpop.f32.mrb[0].mxu0
      %v3279 = vadd.f32 0.0, %v3278
      %3280 = vmatprep.mubr.bf16.mxu0 0
      %3281 = vmatmul.mubr.bf16.gmra.mrb[0].mxu0 %v3216
      %v3282 = vpop.f32.mrb[0].mxu0
      %v3283 = vadd.f32 0.0, %v3282
      %v3284 = vpop.f32.mrb[0].mxu0
      %v3285 = vadd.f32 0.0, %v3284
      %v3286 = vpop.f32.mrb[0].mxu0
      %v3287 = vadd.f32 0.0, %v3286
      %v3288 = vpop.f32.mrb[0].mxu0
      %v3289 = vadd.f32 0.0, %v3288
      %3290 = vdwg.mxu0
      %3291 = vmatprep.subr.bf16.mxu0 %v3181
      %3292 = vmatpush1.bf16.msra.mxu0 %v3180
      %3293 = vmatprep.subr.bf16.mxu0 %v3185
      %3294 = vmatpush1.bf16.msra.mxu0 %v3184
      %3295 = vmatprep.subr.bf16.mxu0 0
      %3296 = vmatpush1.bf16.msra.mxu0 0
      %3297 = vmatprep.subr.bf16.mxu0 0
      %3298 = vmatpush1.bf16.msra.mxu0 0
      %3299 = vmatprep.subr.bf16.mxu0 0
      %3300 = vmatpush1.bf16.msra.mxu0 0
      %3301 = vmatprep.subr.bf16.mxu0 0
      %3302 = vmatpush1.bf16.msra.mxu0 0
      %3303 = vmatprep.subr.bf16.mxu0 0
      %3304 = vmatpush1.bf16.msra.mxu0 0
      %3305 = vmatprep.subr.bf16.mxu0 0
      %3306 = vmatpush1.bf16.msra.mxu0 0
      %3307 = vmatprep.subr.bf16.mxu0 0
      %3308 = vmatpush1.bf16.msra.mxu0 0
      %3309 = vmatprep.subr.bf16.mxu0 0
      %3310 = vmatpush1.bf16.msra.mxu0 0
      %3311 = vmatprep.subr.bf16.mxu0 0
      %3312 = vmatpush1.bf16.msra.mxu0 0
      %3313 = vmatprep.subr.bf16.mxu0 0
      %3314 = vmatpush1.bf16.msra.mxu0 0
      %3315 = vmatprep.subr.bf16.mxu0 0
      %3316 = vmatpush1.bf16.msra.mxu0 0
      %3317 = vmatprep.subr.bf16.mxu0 0
      %3318 = vmatpush1.bf16.msra.mxu0 0
      %3319 = vmatprep.subr.bf16.mxu0 0
      %3320 = vmatpush1.bf16.msra.mxu0 0
      %3321 = vmatprep.subr.bf16.mxu0 0
      %3322 = vmatpush1.bf16.msra.mxu0 0
      %3323 = vmatprep.mubr.bf16.mxu0 0
      %3324 = vmatmul.mubr.bf16.gmra.mrb[0].mxu0 %v3207
      %v3325 = vpop.f32.mrb[0].mxu0
      %v3326 = vadd.f32 0.0, %v3325
      %v3327 = vpop.f32.mrb[0].mxu0
      %v3328 = vadd.f32 0.0, %v3327
      %v3329 = vpop.f32.mrb[0].mxu0
      %v3330 = vadd.f32 0.0, %v3329
      %v3331 = vpop.f32.mrb[0].mxu0
      %v3332 = vadd.f32 0.0, %v3331
      %3333 = vmatprep.mubr.bf16.mxu0 0
      %3334 = vmatmul.mubr.bf16.gmra.mrb[0].mxu0 %v3210
      %v3335 = vpop.f32.mrb[0].mxu0
      %v3336 = vadd.f32 0.0, %v3335
      %v3337 = vpop.f32.mrb[0].mxu0
      %v3338 = vadd.f32 0.0, %v3337
      %v3339 = vpop.f32.mrb[0].mxu0
      %v3340 = vadd.f32 0.0, %v3339
      %v3341 = vpop.f32.mrb[0].mxu0
      %v3342 = vadd.f32 0.0, %v3341
      %3343 = vmatprep.mubr.bf16.mxu0 0
      %3344 = vmatmul.mubr.bf16.gmra.mrb[0].mxu0 %v3213
      %v3345 = vpop.f32.mrb[0].mxu0
      %v3346 = vadd.f32 0.0, %v3345
      %v3347 = vpop.f32.mrb[0].mxu0
      %v3348 = vadd.f32 0.0, %v3347
      %v3349 = vpop.f32.mrb[0].mxu0
      %v3350 = vadd.f32 0.0, %v3349
      %v3351 = vpop.f32.mrb[0].mxu0
      %v3352 = vadd.f32 0.0, %v3351
      %3353 = vmatprep.mubr.bf16.mxu0 0
      %3354 = vmatmul.mubr.bf16.gmra.mrb[0].mxu0 %v3216
      %v3355 = vpop.f32.mrb[0].mxu0
      %v3356 = vadd.f32 0.0, %v3355
      %v3357 = vpop.f32.mrb[0].mxu0
      %v3358 = vadd.f32 0.0, %v3357
      %v3359 = vpop.f32.mrb[0].mxu0
      %v3360 = vadd.f32 0.0, %v3359
      %v3361 = vpop.f32.mrb[0].mxu0
      %v3362 = vadd.f32 0.0, %v3361
      %3363 = vdwg.mxu0
      %v3364 = vadd.f32 %v3082, %v3253
      %v3365 = vadd.f32 %v3083, %v3255
      %v3366 = vadd.f32 %v3084, %v3326
      %v3367 = vadd.f32 %v3085, %v3328
      %v3368 = vadd.f32 %v3086, %v3257
      %v3369 = vadd.f32 %v3087, %v3259
      %v3370 = vadd.f32 %v3088, %v3330
      %v3371 = vadd.f32 %v3089, %v3332
      %v3372 = vadd.f32 %v3090, %v3263
      %v3373 = vadd.f32 %v3091, %v3265
      %v3374 = vadd.f32 %v3092, %v3336
      %v3375 = vadd.f32 %v3093, %v3338
      %v3376 = vadd.f32 %v3094, %v3267
      %v3377 = vadd.f32 %v3095, %v3269
      %v3378 = vadd.f32 %v3096, %v3340
      %v3379 = vadd.f32 %v3097, %v3342
      %v3380 = vadd.f32 %v3098, %v3273
      %v3381 = vadd.f32 %v3099, %v3275
      %v3382 = vadd.f32 %v3100, %v3346
      %v3383 = vadd.f32 %v3101, %v3348
      %v3384 = vadd.f32 %v3102, %v3277
      %v3385 = vadd.f32 %v3103, %v3279
      %v3386 = vadd.f32 %v3104, %v3350
      %v3387 = vadd.f32 %v3105, %v3352
      %v3388 = vadd.f32 %v3106, %v3283
      %v3389 = vadd.f32 %v3107, %v3285
      %v3390 = vadd.f32 %v3108, %v3356
      %v3391 = vadd.f32 %v3109, %v3358
      %v3392 = vadd.f32 %v3110, %v3287
      %v3393 = vadd.f32 %v3111, %v3289
      %v3394 = vadd.f32 %v3112, %v3360
      %v3395 = vadd.f32 %v3113, %v3362
      %v3396 = vpack.c.bf16 %v2247, %v2243
      %v3397 = vpack.c.bf16 %v2248, %v2244
      %v3398 = vpack.c.bf16 %v2249, %v2245
      %v3399 = vpack.c.bf16 %v2250, %v2246
      %v3400 = vpack.c.bf16 %v2255, %v2251
      %v3401 = vpack.c.bf16 %v2256, %v2252
      %v3402 = vpack.c.bf16 %v2257, %v2253
      %v3403 = vpack.c.bf16 %v2258, %v2254
      %v3412 = vunpack.c.l.b16 %v2291
      %v3413 = vunpack.c.l.b16 %v2292
      %v3414 = vunpack.c.l.b16 %v2293
      %v3415 = vunpack.c.l.b16 %v2294
      %v3416 = vunpack.c.l.b16 %v2295
      %v3417 = vunpack.c.l.b16 %v2296
      %v3418 = vunpack.c.l.b16 %v2297
      %v3419 = vunpack.c.l.b16 %v2298
      %v3420 = vpack.c.b16 %v3413, %v3412
      %v3421 = vpack.c.b16 %v3415, %v3414
      %v3422 = vpack.c.b16 %v3417, %v3416
      %v3423 = vpack.c.b16 %v3419, %v3418
      %v3425 = vsel %vm2495, %v3420, 0
      %v3428 = vsel %vm2495, %v3421, 0
      %v3431 = vsel %vm2495, %v3422, 0
      %v3434 = vsel %vm2495, %v3423, 0
      %3436 = vmatprep.subr.bf16.mxu0 %v3397
      %3437 = vmatpush1.bf16.msra.mxu0 %v3396
      %3438 = vmatprep.subr.bf16.mxu0 %v3401
      %3439 = vmatpush1.bf16.msra.mxu0 %v3400
      %3440 = vmatprep.subr.bf16.mxu0 0
      %3441 = vmatpush1.bf16.msra.mxu0 0
      %3442 = vmatprep.subr.bf16.mxu0 0
      %3443 = vmatpush1.bf16.msra.mxu0 0
      %3444 = vmatprep.subr.bf16.mxu0 0
      %3445 = vmatpush1.bf16.msra.mxu0 0
      %3446 = vmatprep.subr.bf16.mxu0 0
      %3447 = vmatpush1.bf16.msra.mxu0 0
      %3448 = vmatprep.subr.bf16.mxu0 0
      %3449 = vmatpush1.bf16.msra.mxu0 0
      %3450 = vmatprep.subr.bf16.mxu0 0
      %3451 = vmatpush1.bf16.msra.mxu0 0
      %3452 = vmatprep.subr.bf16.mxu0 0
      %3453 = vmatpush1.bf16.msra.mxu0 0
      %3454 = vmatprep.subr.bf16.mxu0 0
      %3455 = vmatpush1.bf16.msra.mxu0 0
      %3456 = vmatprep.subr.bf16.mxu0 0
      %3457 = vmatpush1.bf16.msra.mxu0 0
      %3458 = vmatprep.subr.bf16.mxu0 0
      %3459 = vmatpush1.bf16.msra.mxu0 0
      %3460 = vmatprep.subr.bf16.mxu0 0
      %3461 = vmatpush1.bf16.msra.mxu0 0
      %3462 = vmatprep.subr.bf16.mxu0 0
      %3463 = vmatpush1.bf16.msra.mxu0 0
      %3464 = vmatprep.subr.bf16.mxu0 0
      %3465 = vmatpush1.bf16.msra.mxu0 0
      %3466 = vmatprep.subr.bf16.mxu0 0
      %3467 = vmatpush1.bf16.msra.mxu0 0
      %3468 = vmatprep.mubr.bf16.mxu0 0
      %3469 = vmatmul.mubr.bf16.gmra.mrb[0].mxu0 %v3425
      %v3470 = vpop.f32.mrb[0].mxu0
      %v3471 = vadd.f32 0.0, %v3470
      %v3472 = vpop.f32.mrb[0].mxu0
      %v3473 = vadd.f32 0.0, %v3472
      %v3474 = vpop.f32.mrb[0].mxu0
      %v3475 = vadd.f32 0.0, %v3474
      %v3476 = vpop.f32.mrb[0].mxu0
      %v3477 = vadd.f32 0.0, %v3476
      %3478 = vmatprep.mubr.bf16.mxu0 0
      %3479 = vmatmul.mubr.bf16.gmra.mrb[0].mxu0 %v3428
      %v3480 = vpop.f32.mrb[0].mxu0
      %v3481 = vadd.f32 0.0, %v3480
      %v3482 = vpop.f32.mrb[0].mxu0
      %v3483 = vadd.f32 0.0, %v3482
      %v3484 = vpop.f32.mrb[0].mxu0
      %v3485 = vadd.f32 0.0, %v3484
      %v3486 = vpop.f32.mrb[0].mxu0
      %v3487 = vadd.f32 0.0, %v3486
      %3488 = vmatprep.mubr.bf16.mxu0 0
      %3489 = vmatmul.mubr.bf16.gmra.mrb[0].mxu0 %v3431
      %v3490 = vpop.f32.mrb[0].mxu0
      %v3491 = vadd.f32 0.0, %v3490
      %v3492 = vpop.f32.mrb[0].mxu0
      %v3493 = vadd.f32 0.0, %v3492
      %v3494 = vpop.f32.mrb[0].mxu0
      %v3495 = vadd.f32 0.0, %v3494
      %v3496 = vpop.f32.mrb[0].mxu0
      %v3497 = vadd.f32 0.0, %v3496
      %3498 = vmatprep.mubr.bf16.mxu0 0
      %3499 = vmatmul.mubr.bf16.gmra.mrb[0].mxu0 %v3434
      %v3500 = vpop.f32.mrb[0].mxu0
      %v3501 = vadd.f32 0.0, %v3500
      %v3502 = vpop.f32.mrb[0].mxu0
      %v3503 = vadd.f32 0.0, %v3502
      %v3504 = vpop.f32.mrb[0].mxu0
      %v3505 = vadd.f32 0.0, %v3504
      %v3506 = vpop.f32.mrb[0].mxu0
      %v3507 = vadd.f32 0.0, %v3506
      %3508 = vdwg.mxu0
      %3509 = vmatprep.subr.bf16.mxu0 %v3399
      %3510 = vmatpush1.bf16.msra.mxu0 %v3398
      %3511 = vmatprep.subr.bf16.mxu0 %v3403
      %3512 = vmatpush1.bf16.msra.mxu0 %v3402
      %3513 = vmatprep.subr.bf16.mxu0 0
      %3514 = vmatpush1.bf16.msra.mxu0 0
      %3515 = vmatprep.subr.bf16.mxu0 0
      %3516 = vmatpush1.bf16.msra.mxu0 0
      %3517 = vmatprep.subr.bf16.mxu0 0
      %3518 = vmatpush1.bf16.msra.mxu0 0
      %3519 = vmatprep.subr.bf16.mxu0 0
      %3520 = vmatpush1.bf16.msra.mxu0 0
      %3521 = vmatprep.subr.bf16.mxu0 0
      %3522 = vmatpush1.bf16.msra.mxu0 0
      %3523 = vmatprep.subr.bf16.mxu0 0
      %3524 = vmatpush1.bf16.msra.mxu0 0
      %3525 = vmatprep.subr.bf16.mxu0 0
      %3526 = vmatpush1.bf16.msra.mxu0 0
      %3527 = vmatprep.subr.bf16.mxu0 0
      %3528 = vmatpush1.bf16.msra.mxu0 0
      %3529 = vmatprep.subr.bf16.mxu0 0
      %3530 = vmatpush1.bf16.msra.mxu0 0
      %3531 = vmatprep.subr.bf16.mxu0 0
      %3532 = vmatpush1.bf16.msra.mxu0 0
      %3533 = vmatprep.subr.bf16.mxu0 0
      %3534 = vmatpush1.bf16.msra.mxu0 0
      %3535 = vmatprep.subr.bf16.mxu0 0
      %3536 = vmatpush1.bf16.msra.mxu0 0
      %3537 = vmatprep.subr.bf16.mxu0 0
      %3538 = vmatpush1.bf16.msra.mxu0 0
      %3539 = vmatprep.subr.bf16.mxu0 0
      %3540 = vmatpush1.bf16.msra.mxu0 0
      %3541 = vmatprep.mubr.bf16.mxu0 0
      %3542 = vmatmul.mubr.bf16.gmra.mrb[0].mxu0 %v3425
      %v3543 = vpop.f32.mrb[0].mxu0
      %v3544 = vadd.f32 0.0, %v3543
      %v3545 = vpop.f32.mrb[0].mxu0
      %v3546 = vadd.f32 0.0, %v3545
      %v3547 = vpop.f32.mrb[0].mxu0
      %v3548 = vadd.f32 0.0, %v3547
      %v3549 = vpop.f32.mrb[0].mxu0
      %v3550 = vadd.f32 0.0, %v3549
      %3551 = vmatprep.mubr.bf16.mxu0 0
      %3552 = vmatmul.mubr.bf16.gmra.mrb[0].mxu0 %v3428
      %v3553 = vpop.f32.mrb[0].mxu0
      %v3554 = vadd.f32 0.0, %v3553
      %v3555 = vpop.f32.mrb[0].mxu0
      %v3556 = vadd.f32 0.0, %v3555
      %v3557 = vpop.f32.mrb[0].mxu0
      %v3558 = vadd.f32 0.0, %v3557
      %v3559 = vpop.f32.mrb[0].mxu0
      %v3560 = vadd.f32 0.0, %v3559
      %3561 = vmatprep.mubr.bf16.mxu0 0
      %3562 = vmatmul.mubr.bf16.gmra.mrb[0].mxu0 %v3431
      %v3563 = vpop.f32.mrb[0].mxu0
      %v3564 = vadd.f32 0.0, %v3563
      %v3565 = vpop.f32.mrb[0].mxu0
      %v3566 = vadd.f32 0.0, %v3565
      %v3567 = vpop.f32.mrb[0].mxu0
      %v3568 = vadd.f32 0.0, %v3567
      %v3569 = vpop.f32.mrb[0].mxu0
      %v3570 = vadd.f32 0.0, %v3569
      %3571 = vmatprep.mubr.bf16.mxu0 0
      %3572 = vmatmul.mubr.bf16.gmra.mrb[0].mxu0 %v3434
      %v3573 = vpop.f32.mrb[0].mxu0
      %v3574 = vadd.f32 0.0, %v3573
      %v3575 = vpop.f32.mrb[0].mxu0
      %v3576 = vadd.f32 0.0, %v3575
      %v3577 = vpop.f32.mrb[0].mxu0
      %v3578 = vadd.f32 0.0, %v3577
      %v3579 = vpop.f32.mrb[0].mxu0
      %v3580 = vadd.f32 0.0, %v3579
      %3581 = vdwg.mxu0
      %v3582 = vadd.f32 %v3364, %v3471
      %v3583 = vadd.f32 %v3365, %v3473
      %v3584 = vadd.f32 %v3366, %v3544
      %v3585 = vadd.f32 %v3367, %v3546
      %v3586 = vadd.f32 %v3368, %v3475
      %v3587 = vadd.f32 %v3369, %v3477
      %v3588 = vadd.f32 %v3370, %v3548
      %v3589 = vadd.f32 %v3371, %v3550
      %v3590 = vadd.f32 %v3372, %v3481
      %v3591 = vadd.f32 %v3373, %v3483
      %v3592 = vadd.f32 %v3374, %v3554
      %v3593 = vadd.f32 %v3375, %v3556
      %v3594 = vadd.f32 %v3376, %v3485
      %v3595 = vadd.f32 %v3377, %v3487
      %v3596 = vadd.f32 %v3378, %v3558
      %v3597 = vadd.f32 %v3379, %v3560
      %v3598 = vadd.f32 %v3380, %v3491
      %v3599 = vadd.f32 %v3381, %v3493
      %v3600 = vadd.f32 %v3382, %v3564
      %v3601 = vadd.f32 %v3383, %v3566
      %v3602 = vadd.f32 %v3384, %v3495
      %v3603 = vadd.f32 %v3385, %v3497
      %v3604 = vadd.f32 %v3386, %v3568
      %v3605 = vadd.f32 %v3387, %v3570
      %v3606 = vadd.f32 %v3388, %v3501
      %v3607 = vadd.f32 %v3389, %v3503
      %v3608 = vadd.f32 %v3390, %v3574
      %v3609 = vadd.f32 %v3391, %v3576
      %v3610 = vadd.f32 %v3392, %v3505
      %v3611 = vadd.f32 %v3393, %v3507
      %v3612 = vadd.f32 %v3394, %v3578
      %v3613 = vadd.f32 %v3395, %v3580
      %3614 = vrot.lane.b32.xlu0 %v2243, 127
      %v3615 = vpop.permute.xlu0 %3614
      %3616 = vrot.lane.b32.xlu0 %v2247, 127
      %v3617 = vpop.permute.xlu0 %3616
      %3618 = vrot.lane.b32.xlu0 %v2251, 127
      %v3619 = vpop.permute.xlu0 %3618
      %3620 = vrot.lane.b32.xlu0 %v2255, 127
      %v3621 = vpop.permute.xlu0 %3620
      %3622 = vrot.lane.b32.xlu0 %v2244, 127
      %v3623 = vpop.permute.xlu0 %3622
      %3624 = vrot.lane.b32.xlu0 %v2248, 127
      %v3625 = vpop.permute.xlu0 %3624
      %3626 = vrot.lane.b32.xlu0 %v2252, 127
      %v3627 = vpop.permute.xlu0 %3626
      %3628 = vrot.lane.b32.xlu0 %v2256, 127
      %v3629 = vpop.permute.xlu0 %3628
      %3630 = vrot.lane.b32.xlu0 %v2245, 127
      %v3631 = vpop.permute.xlu0 %3630
      %3632 = vrot.lane.b32.xlu0 %v2249, 127
      %v3633 = vpop.permute.xlu0 %3632
      %3634 = vrot.lane.b32.xlu0 %v2253, 127
      %v3635 = vpop.permute.xlu0 %3634
      %3636 = vrot.lane.b32.xlu0 %v2257, 127
      %v3637 = vpop.permute.xlu0 %3636
      %3638 = vrot.lane.b32.xlu0 %v2246, 127
      %v3639 = vpop.permute.xlu0 %3638
      %3640 = vrot.lane.b32.xlu0 %v2250, 127
      %v3641 = vpop.permute.xlu0 %3640
      %3642 = vrot.lane.b32.xlu0 %v2254, 127
      %v3643 = vpop.permute.xlu0 %3642
      %3644 = vrot.lane.b32.xlu0 %v2258, 127
      %v3645 = vpop.permute.xlu0 %3644
      %v3646 = vsel %vm1122, %v3631, %v3639
      %v3647 = vsel %vm1122, %v3633, %v3641
      %v3648 = vsel %vm1122, %v3635, %v3643
      %v3649 = vsel %vm1122, %v3637, %v3645
      %v3650 = vsel %vm1122, %v3623, %v3631
      %v3651 = vsel %vm1122, %v3625, %v3633
      %v3652 = vsel %vm1122, %v3627, %v3635
      %v3653 = vsel %vm1122, %v3629, %v3637
      %v3654 = vsel %vm1122, %v3615, %v3623
      %v3655 = vsel %vm1122, %v3617, %v3625
      %v3656 = vsel %vm1122, %v3619, %v3627
      %v3657 = vsel %vm1122, %v3621, %v3629
      %v3658 = vsel %vm1122, %v3639, %v3615
      %v3659 = vsel %vm1122, %v3641, %v3617
      %v3660 = vsel %vm1122, %v3643, %v3619
      %v3661 = vsel %vm1122, %v3645, %v3621
      %v3662 = vmul.f32 %v3654, %v1130
      %v3663 = vmul.f32 %v3650, %v1134
      %v3664 = vmul.f32 %v3646, %v1138
      %v3665 = vmul.f32 %v3658, %v1142
      %v3666 = vmul.f32 %v3655, %v1130
      %v3667 = vmul.f32 %v3651, %v1134
      %v3668 = vmul.f32 %v3647, %v1138
      %v3669 = vmul.f32 %v3659, %v1142
      %v3670 = vmul.f32 %v3656, %v1130
      %v3671 = vmul.f32 %v3652, %v1134
      %v3672 = vmul.f32 %v3648, %v1138
      %v3673 = vmul.f32 %v3660, %v1142
      %v3674 = vmul.f32 %v3657, %v1130
      %v3675 = vmul.f32 %v3653, %v1134
      %v3676 = vmul.f32 %v3649, %v1138
      %v3677 = vmul.f32 %v3661, %v1142
      %v3678 = vpack.c.bf16 %v3666, %v3662
      %v3679 = vpack.c.bf16 %v3667, %v3663
      %v3680 = vpack.c.bf16 %v3668, %v3664
      %v3681 = vpack.c.bf16 %v3669, %v3665
      %v3682 = vpack.c.bf16 %v3674, %v3670
      %v3683 = vpack.c.bf16 %v3675, %v3671
      %v3684 = vpack.c.bf16 %v3676, %v3672
      %v3685 = vpack.c.bf16 %v3677, %v3673
      %v3694 = vunpack.c.l.b16 %v2299
      %v3695 = vunpack.c.l.b16 %v2300
      %v3696 = vunpack.c.l.b16 %v2301
      %v3697 = vunpack.c.l.b16 %v2302
      %v3698 = vunpack.c.l.b16 %v2303
      %v3699 = vunpack.c.l.b16 %v2304
      %v3700 = vunpack.c.l.b16 %v2305
      %v3701 = vunpack.c.l.b16 %v2306
      %v3702 = vpack.c.b16 %v3695, %v3694
      %v3703 = vpack.c.b16 %v3697, %v3696
      %v3704 = vpack.c.b16 %v3699, %v3698
      %v3705 = vpack.c.b16 %v3701, %v3700
      %v3707 = vsel %vm2495, %v3702, 0
      %v3710 = vsel %vm2495, %v3703, 0
      %v3713 = vsel %vm2495, %v3704, 0
      %v3716 = vsel %vm2495, %v3705, 0
      %3718 = vmatprep.subr.bf16.mxu0 %v3679
      %3719 = vmatpush1.bf16.msra.mxu0 %v3678
      %3720 = vmatprep.subr.bf16.mxu0 %v3683
      %3721 = vmatpush1.bf16.msra.mxu0 %v3682
      %3722 = vmatprep.subr.bf16.mxu0 0
      %3723 = vmatpush1.bf16.msra.mxu0 0
      %3724 = vmatprep.subr.bf16.mxu0 0
      %3725 = vmatpush1.bf16.msra.mxu0 0
      %3726 = vmatprep.subr.bf16.mxu0 0
      %3727 = vmatpush1.bf16.msra.mxu0 0
      %3728 = vmatprep.subr.bf16.mxu0 0
      %3729 = vmatpush1.bf16.msra.mxu0 0
      %3730 = vmatprep.subr.bf16.mxu0 0
      %3731 = vmatpush1.bf16.msra.mxu0 0
      %3732 = vmatprep.subr.bf16.mxu0 0
      %3733 = vmatpush1.bf16.msra.mxu0 0
      %3734 = vmatprep.subr.bf16.mxu0 0
      %3735 = vmatpush1.bf16.msra.mxu0 0
      %3736 = vmatprep.subr.bf16.mxu0 0
      %3737 = vmatpush1.bf16.msra.mxu0 0
      %3738 = vmatprep.subr.bf16.mxu0 0
      %3739 = vmatpush1.bf16.msra.mxu0 0
      %3740 = vmatprep.subr.bf16.mxu0 0
      %3741 = vmatpush1.bf16.msra.mxu0 0
      %3742 = vmatprep.subr.bf16.mxu0 0
      %3743 = vmatpush1.bf16.msra.mxu0 0
      %3744 = vmatprep.subr.bf16.mxu0 0
      %3745 = vmatpush1.bf16.msra.mxu0 0
      %3746 = vmatprep.subr.bf16.mxu0 0
      %3747 = vmatpush1.bf16.msra.mxu0 0
      %3748 = vmatprep.subr.bf16.mxu0 0
      %3749 = vmatpush1.bf16.msra.mxu0 0
      %3750 = vmatprep.mubr.bf16.mxu0 0
      %3751 = vmatmul.mubr.bf16.gmra.mrb[0].mxu0 %v3707
      %v3752 = vpop.f32.mrb[0].mxu0
      %v3753 = vadd.f32 0.0, %v3752
      %v3754 = vpop.f32.mrb[0].mxu0
      %v3755 = vadd.f32 0.0, %v3754
      %v3756 = vpop.f32.mrb[0].mxu0
      %v3757 = vadd.f32 0.0, %v3756
      %v3758 = vpop.f32.mrb[0].mxu0
      %v3759 = vadd.f32 0.0, %v3758
      %3760 = vmatprep.mubr.bf16.mxu0 0
      %3761 = vmatmul.mubr.bf16.gmra.mrb[0].mxu0 %v3710
      %v3762 = vpop.f32.mrb[0].mxu0
      %v3763 = vadd.f32 0.0, %v3762
      %v3764 = vpop.f32.mrb[0].mxu0
      %v3765 = vadd.f32 0.0, %v3764
      %v3766 = vpop.f32.mrb[0].mxu0
      %v3767 = vadd.f32 0.0, %v3766
      %v3768 = vpop.f32.mrb[0].mxu0
      %v3769 = vadd.f32 0.0, %v3768
      %3770 = vmatprep.mubr.bf16.mxu0 0
      %3771 = vmatmul.mubr.bf16.gmra.mrb[0].mxu0 %v3713
      %v3772 = vpop.f32.mrb[0].mxu0
      %v3773 = vadd.f32 0.0, %v3772
      %v3774 = vpop.f32.mrb[0].mxu0
      %v3775 = vadd.f32 0.0, %v3774
      %v3776 = vpop.f32.mrb[0].mxu0
      %v3777 = vadd.f32 0.0, %v3776
      %v3778 = vpop.f32.mrb[0].mxu0
      %v3779 = vadd.f32 0.0, %v3778
      %3780 = vmatprep.mubr.bf16.mxu0 0
      %3781 = vmatmul.mubr.bf16.gmra.mrb[0].mxu0 %v3716
      %v3782 = vpop.f32.mrb[0].mxu0
      %v3783 = vadd.f32 0.0, %v3782
      %v3784 = vpop.f32.mrb[0].mxu0
      %v3785 = vadd.f32 0.0, %v3784
      %v3786 = vpop.f32.mrb[0].mxu0
      %v3787 = vadd.f32 0.0, %v3786
      %v3788 = vpop.f32.mrb[0].mxu0
      %v3789 = vadd.f32 0.0, %v3788
      %3790 = vdwg.mxu0
      %3791 = vmatprep.subr.bf16.mxu0 %v3681
      %3792 = vmatpush1.bf16.msra.mxu0 %v3680
      %3793 = vmatprep.subr.bf16.mxu0 %v3685
      %3794 = vmatpush1.bf16.msra.mxu0 %v3684
      %3795 = vmatprep.subr.bf16.mxu0 0
      %3796 = vmatpush1.bf16.msra.mxu0 0
      %3797 = vmatprep.subr.bf16.mxu0 0
      %3798 = vmatpush1.bf16.msra.mxu0 0
      %3799 = vmatprep.subr.bf16.mxu0 0
      %3800 = vmatpush1.bf16.msra.mxu0 0
      %3801 = vmatprep.subr.bf16.mxu0 0
      %3802 = vmatpush1.bf16.msra.mxu0 0
      %3803 = vmatprep.subr.bf16.mxu0 0
      %3804 = vmatpush1.bf16.msra.mxu0 0
      %3805 = vmatprep.subr.bf16.mxu0 0
      %3806 = vmatpush1.bf16.msra.mxu0 0
      %3807 = vmatprep.subr.bf16.mxu0 0
      %3808 = vmatpush1.bf16.msra.mxu0 0
      %3809 = vmatprep.subr.bf16.mxu0 0
      %3810 = vmatpush1.bf16.msra.mxu0 0
      %3811 = vmatprep.subr.bf16.mxu0 0
      %3812 = vmatpush1.bf16.msra.mxu0 0
      %3813 = vmatprep.subr.bf16.mxu0 0
      %3814 = vmatpush1.bf16.msra.mxu0 0
      %3815 = vmatprep.subr.bf16.mxu0 0
      %3816 = vmatpush1.bf16.msra.mxu0 0
      %3817 = vmatprep.subr.bf16.mxu0 0
      %3818 = vmatpush1.bf16.msra.mxu0 0
      %3819 = vmatprep.subr.bf16.mxu0 0
      %3820 = vmatpush1.bf16.msra.mxu0 0
      %3821 = vmatprep.subr.bf16.mxu0 0
      %3822 = vmatpush1.bf16.msra.mxu0 0
      %3823 = vmatprep.mubr.bf16.mxu0 0
      %3824 = vmatmul.mubr.bf16.gmra.mrb[0].mxu0 %v3707
      %v3825 = vpop.f32.mrb[0].mxu0
      %v3826 = vadd.f32 0.0, %v3825
      %v3827 = vpop.f32.mrb[0].mxu0
      %v3828 = vadd.f32 0.0, %v3827
      %v3829 = vpop.f32.mrb[0].mxu0
      %v3830 = vadd.f32 0.0, %v3829
      %v3831 = vpop.f32.mrb[0].mxu0
      %v3832 = vadd.f32 0.0, %v3831
      %3833 = vmatprep.mubr.bf16.mxu0 0
      %3834 = vmatmul.mubr.bf16.gmra.mrb[0].mxu0 %v3710
      %v3835 = vpop.f32.mrb[0].mxu0
      %v3836 = vadd.f32 0.0, %v3835
      %v3837 = vpop.f32.mrb[0].mxu0
      %v3838 = vadd.f32 0.0, %v3837
      %v3839 = vpop.f32.mrb[0].mxu0
      %v3840 = vadd.f32 0.0, %v3839
      %v3841 = vpop.f32.mrb[0].mxu0
      %v3842 = vadd.f32 0.0, %v3841
      %3843 = vmatprep.mubr.bf16.mxu0 0
      %3844 = vmatmul.mubr.bf16.gmra.mrb[0].mxu0 %v3713
      %v3845 = vpop.f32.mrb[0].mxu0
      %v3846 = vadd.f32 0.0, %v3845
      %v3847 = vpop.f32.mrb[0].mxu0
      %v3848 = vadd.f32 0.0, %v3847
      %v3849 = vpop.f32.mrb[0].mxu0
      %v3850 = vadd.f32 0.0, %v3849
      %v3851 = vpop.f32.mrb[0].mxu0
      %v3852 = vadd.f32 0.0, %v3851
      %3853 = vmatprep.mubr.bf16.mxu0 0
      %3854 = vmatmul.mubr.bf16.gmra.mrb[0].mxu0 %v3716
      %v3855 = vpop.f32.mrb[0].mxu0
      %v3856 = vadd.f32 0.0, %v3855
      %v3857 = vpop.f32.mrb[0].mxu0
      %v3858 = vadd.f32 0.0, %v3857
      %v3859 = vpop.f32.mrb[0].mxu0
      %v3860 = vadd.f32 0.0, %v3859
      %v3861 = vpop.f32.mrb[0].mxu0
      %v3862 = vadd.f32 0.0, %v3861
      %3863 = vdwg.mxu0
      %v3864 = vadd.f32 %v3582, %v3753
      %v3865 = vadd.f32 %v3583, %v3755
      %v3866 = vadd.f32 %v3584, %v3826
      %v3867 = vadd.f32 %v3585, %v3828
      %v3868 = vadd.f32 %v3586, %v3757
      %v3869 = vadd.f32 %v3587, %v3759
      %v3870 = vadd.f32 %v3588, %v3830
      %v3871 = vadd.f32 %v3589, %v3832
      %v3872 = vadd.f32 %v3590, %v3763
      %v3873 = vadd.f32 %v3591, %v3765
      %v3874 = vadd.f32 %v3592, %v3836
      %v3875 = vadd.f32 %v3593, %v3838
      %v3876 = vadd.f32 %v3594, %v3767
      %v3877 = vadd.f32 %v3595, %v3769
      %v3878 = vadd.f32 %v3596, %v3840
      %v3879 = vadd.f32 %v3597, %v3842
      %v3880 = vadd.f32 %v3598, %v3773
      %v3881 = vadd.f32 %v3599, %v3775
      %v3882 = vadd.f32 %v3600, %v3846
      %v3883 = vadd.f32 %v3601, %v3848
      %v3884 = vadd.f32 %v3602, %v3777
      %v3885 = vadd.f32 %v3603, %v3779
      %v3886 = vadd.f32 %v3604, %v3850
      %v3887 = vadd.f32 %v3605, %v3852
      %v3888 = vadd.f32 %v3606, %v3783
      %v3889 = vadd.f32 %v3607, %v3785
      %v3890 = vadd.f32 %v3608, %v3856
      %v3891 = vadd.f32 %v3609, %v3858
      %v3892 = vadd.f32 %v3610, %v3787
      %v3893 = vadd.f32 %v3611, %v3789
      %v3894 = vadd.f32 %v3612, %v3860
      %v3895 = vadd.f32 %v3613, %v3862
      %3896 = vrot.lane.b32.xlu0 %v2243, 113
      %v3897 = vpop.permute.xlu0 %3896
      %3898 = vrot.lane.b32.xlu0 %v2247, 113
      %v3899 = vpop.permute.xlu0 %3898
      %3900 = vrot.lane.b32.xlu0 %v2251, 113
      %v3901 = vpop.permute.xlu0 %3900
      %3902 = vrot.lane.b32.xlu0 %v2255, 113
      %v3903 = vpop.permute.xlu0 %3902
      %3904 = vrot.lane.b32.xlu0 %v2244, 113
      %v3905 = vpop.permute.xlu0 %3904
      %3906 = vrot.lane.b32.xlu0 %v2248, 113
      %v3907 = vpop.permute.xlu0 %3906
      %3908 = vrot.lane.b32.xlu0 %v2252, 113
      %v3909 = vpop.permute.xlu0 %3908
      %3910 = vrot.lane.b32.xlu0 %v2256, 113
      %v3911 = vpop.permute.xlu0 %3910
      %3912 = vrot.lane.b32.xlu0 %v2245, 113
      %v3913 = vpop.permute.xlu0 %3912
      %3914 = vrot.lane.b32.xlu0 %v2249, 113
      %v3915 = vpop.permute.xlu0 %3914
      %3916 = vrot.lane.b32.xlu0 %v2253, 113
      %v3917 = vpop.permute.xlu0 %3916
      %3918 = vrot.lane.b32.xlu0 %v2257, 113
      %v3919 = vpop.permute.xlu0 %3918
      %3920 = vrot.lane.b32.xlu0 %v2246, 113
      %v3921 = vpop.permute.xlu0 %3920
      %3922 = vrot.lane.b32.xlu0 %v2250, 113
      %v3923 = vpop.permute.xlu0 %3922
      %3924 = vrot.lane.b32.xlu0 %v2254, 113
      %v3925 = vpop.permute.xlu0 %3924
      %3926 = vrot.lane.b32.xlu0 %v2258, 113
      %v3927 = vpop.permute.xlu0 %3926
      %v3928 = vsel %vm1260, %v3913, %v3921
      %v3929 = vsel %vm1260, %v3915, %v3923
      %v3930 = vsel %vm1260, %v3917, %v3925
      %v3931 = vsel %vm1260, %v3919, %v3927
      %v3932 = vsel %vm1260, %v3905, %v3913
      %v3933 = vsel %vm1260, %v3907, %v3915
      %v3934 = vsel %vm1260, %v3909, %v3917
      %v3935 = vsel %vm1260, %v3911, %v3919
      %v3936 = vsel %vm1260, %v3897, %v3905
      %v3937 = vsel %vm1260, %v3899, %v3907
      %v3938 = vsel %vm1260, %v3901, %v3909
      %v3939 = vsel %vm1260, %v3903, %v3911
      %v3940 = vsel %vm1260, %v3921, %v3897
      %v3941 = vsel %vm1260, %v3923, %v3899
      %v3942 = vsel %vm1260, %v3925, %v3901
      %v3943 = vsel %vm1260, %v3927, %v3903
      %v3944 = vmul.f32 %v3936, %v1268
      %v3945 = vmul.f32 %v3932, %v1272
      %v3946 = vmul.f32 %v3928, %v1276
      %v3947 = vmul.f32 %v3940, %v1280
      %v3948 = vmul.f32 %v3937, %v1268
      %v3949 = vmul.f32 %v3933, %v1272
      %v3950 = vmul.f32 %v3929, %v1276
      %v3951 = vmul.f32 %v3941, %v1280
      %v3952 = vmul.f32 %v3938, %v1268
      %v3953 = vmul.f32 %v3934, %v1272
      %v3954 = vmul.f32 %v3930, %v1276
      %v3955 = vmul.f32 %v3942, %v1280
      %v3956 = vmul.f32 %v3939, %v1268
      %v3957 = vmul.f32 %v3935, %v1272
      %v3958 = vmul.f32 %v3931, %v1276
      %v3959 = vmul.f32 %v3943, %v1280
      %v3960 = vpack.c.bf16 %v3948, %v3944
      %v3961 = vpack.c.bf16 %v3949, %v3945
      %v3962 = vpack.c.bf16 %v3950, %v3946
      %v3963 = vpack.c.bf16 %v3951, %v3947
      %v3964 = vpack.c.bf16 %v3956, %v3952
      %v3965 = vpack.c.bf16 %v3957, %v3953
      %v3966 = vpack.c.bf16 %v3958, %v3954
      %v3967 = vpack.c.bf16 %v3959, %v3955
      %v3976 = vunpack.c.l.b16 %v2307
      %v3977 = vunpack.c.l.b16 %v2308
      %v3978 = vunpack.c.l.b16 %v2309
      %v3979 = vunpack.c.l.b16 %v2310
      %v3980 = vunpack.c.l.b16 %v2311
      %v3981 = vunpack.c.l.b16 %v2312
      %v3982 = vunpack.c.l.b16 %v2313
      %v3983 = vunpack.c.l.b16 %v2314
      %v3984 = vpack.c.b16 %v3977, %v3976
      %v3985 = vpack.c.b16 %v3979, %v3978
      %v3986 = vpack.c.b16 %v3981, %v3980
      %v3987 = vpack.c.b16 %v3983, %v3982
      %v3989 = vsel %vm2495, %v3984, 0
      %v3992 = vsel %vm2495, %v3985, 0
      %v3995 = vsel %vm2495, %v3986, 0
      %v3998 = vsel %vm2495, %v3987, 0
      %4000 = vmatprep.subr.bf16.mxu0 %v3961
      %4001 = vmatpush1.bf16.msra.mxu0 %v3960
      %4002 = vmatprep.subr.bf16.mxu0 %v3965
      %4003 = vmatpush1.bf16.msra.mxu0 %v3964
      %4004 = vmatprep.subr.bf16.mxu0 0
      %4005 = vmatpush1.bf16.msra.mxu0 0
      %4006 = vmatprep.subr.bf16.mxu0 0
      %4007 = vmatpush1.bf16.msra.mxu0 0
      %4008 = vmatprep.subr.bf16.mxu0 0
      %4009 = vmatpush1.bf16.msra.mxu0 0
      %4010 = vmatprep.subr.bf16.mxu0 0
      %4011 = vmatpush1.bf16.msra.mxu0 0
      %4012 = vmatprep.subr.bf16.mxu0 0
      %4013 = vmatpush1.bf16.msra.mxu0 0
      %4014 = vmatprep.subr.bf16.mxu0 0
      %4015 = vmatpush1.bf16.msra.mxu0 0
      %4016 = vmatprep.subr.bf16.mxu0 0
      %4017 = vmatpush1.bf16.msra.mxu0 0
      %4018 = vmatprep.subr.bf16.mxu0 0
      %4019 = vmatpush1.bf16.msra.mxu0 0
      %4020 = vmatprep.subr.bf16.mxu0 0
      %4021 = vmatpush1.bf16.msra.mxu0 0
      %4022 = vmatprep.subr.bf16.mxu0 0
      %4023 = vmatpush1.bf16.msra.mxu0 0
      %4024 = vmatprep.subr.bf16.mxu0 0
      %4025 = vmatpush1.bf16.msra.mxu0 0
      %4026 = vmatprep.subr.bf16.mxu0 0
      %4027 = vmatpush1.bf16.msra.mxu0 0
      %4028 = vmatprep.subr.bf16.mxu0 0
      %4029 = vmatpush1.bf16.msra.mxu0 0
      %4030 = vmatprep.subr.bf16.mxu0 0
      %4031 = vmatpush1.bf16.msra.mxu0 0
      %4032 = vmatprep.mubr.bf16.mxu0 0
      %4033 = vmatmul.mubr.bf16.gmra.mrb[0].mxu0 %v3989
      %v4034 = vpop.f32.mrb[0].mxu0
      %v4035 = vadd.f32 0.0, %v4034
      %v4036 = vpop.f32.mrb[0].mxu0
      %v4037 = vadd.f32 0.0, %v4036
      %v4038 = vpop.f32.mrb[0].mxu0
      %v4039 = vadd.f32 0.0, %v4038
      %v4040 = vpop.f32.mrb[0].mxu0
      %v4041 = vadd.f32 0.0, %v4040
      %4042 = vmatprep.mubr.bf16.mxu0 0
      %4043 = vmatmul.mubr.bf16.gmra.mrb[0].mxu0 %v3992
      %v4044 = vpop.f32.mrb[0].mxu0
      %v4045 = vadd.f32 0.0, %v4044
      %v4046 = vpop.f32.mrb[0].mxu0
      %v4047 = vadd.f32 0.0, %v4046
      %v4048 = vpop.f32.mrb[0].mxu0
      %v4049 = vadd.f32 0.0, %v4048
      %v4050 = vpop.f32.mrb[0].mxu0
      %v4051 = vadd.f32 0.0, %v4050
      %4052 = vmatprep.mubr.bf16.mxu0 0
      %4053 = vmatmul.mubr.bf16.gmra.mrb[0].mxu0 %v3995
      %v4054 = vpop.f32.mrb[0].mxu0
      %v4055 = vadd.f32 0.0, %v4054
      %v4056 = vpop.f32.mrb[0].mxu0
      %v4057 = vadd.f32 0.0, %v4056
      %v4058 = vpop.f32.mrb[0].mxu0
      %v4059 = vadd.f32 0.0, %v4058
      %v4060 = vpop.f32.mrb[0].mxu0
      %v4061 = vadd.f32 0.0, %v4060
      %4062 = vmatprep.mubr.bf16.mxu0 0
      %4063 = vmatmul.mubr.bf16.gmra.mrb[0].mxu0 %v3998
      %v4064 = vpop.f32.mrb[0].mxu0
      %v4065 = vadd.f32 0.0, %v4064
      %v4066 = vpop.f32.mrb[0].mxu0
      %v4067 = vadd.f32 0.0, %v4066
      %v4068 = vpop.f32.mrb[0].mxu0
      %v4069 = vadd.f32 0.0, %v4068
      %v4070 = vpop.f32.mrb[0].mxu0
      %v4071 = vadd.f32 0.0, %v4070
      %4072 = vdwg.mxu0
      %4073 = vmatprep.subr.bf16.mxu0 %v3963
      %4074 = vmatpush1.bf16.msra.mxu0 %v3962
      %4075 = vmatprep.subr.bf16.mxu0 %v3967
      %4076 = vmatpush1.bf16.msra.mxu0 %v3966
      %4077 = vmatprep.subr.bf16.mxu0 0
      %4078 = vmatpush1.bf16.msra.mxu0 0
      %4079 = vmatprep.subr.bf16.mxu0 0
      %4080 = vmatpush1.bf16.msra.mxu0 0
      %4081 = vmatprep.subr.bf16.mxu0 0
      %4082 = vmatpush1.bf16.msra.mxu0 0
      %4083 = vmatprep.subr.bf16.mxu0 0
      %4084 = vmatpush1.bf16.msra.mxu0 0
      %4085 = vmatprep.subr.bf16.mxu0 0
      %4086 = vmatpush1.bf16.msra.mxu0 0
      %4087 = vmatprep.subr.bf16.mxu0 0
      %4088 = vmatpush1.bf16.msra.mxu0 0
      %4089 = vmatprep.subr.bf16.mxu0 0
      %4090 = vmatpush1.bf16.msra.mxu0 0
      %4091 = vmatprep.subr.bf16.mxu0 0
      %4092 = vmatpush1.bf16.msra.mxu0 0
      %4093 = vmatprep.subr.bf16.mxu0 0
      %4094 = vmatpush1.bf16.msra.mxu0 0
      %4095 = vmatprep.subr.bf16.mxu0 0
      %4096 = vmatpush1.bf16.msra.mxu0 0
      %4097 = vmatprep.subr.bf16.mxu0 0
      %4098 = vmatpush1.bf16.msra.mxu0 0
      %4099 = vmatprep.subr.bf16.mxu0 0
      %4100 = vmatpush1.bf16.msra.mxu0 0
      %4101 = vmatprep.subr.bf16.mxu0 0
      %4102 = vmatpush1.bf16.msra.mxu0 0
      %4103 = vmatprep.subr.bf16.mxu0 0
      %4104 = vmatpush1.bf16.msra.mxu0 0
      %4105 = vmatprep.mubr.bf16.mxu0 0
      %4106 = vmatmul.mubr.bf16.gmra.mrb[0].mxu0 %v3989
      %v4107 = vpop.f32.mrb[0].mxu0
      %v4108 = vadd.f32 0.0, %v4107
      %v4109 = vpop.f32.mrb[0].mxu0
      %v4110 = vadd.f32 0.0, %v4109
      %v4111 = vpop.f32.mrb[0].mxu0
      %v4112 = vadd.f32 0.0, %v4111
      %v4113 = vpop.f32.mrb[0].mxu0
      %v4114 = vadd.f32 0.0, %v4113
      %4115 = vmatprep.mubr.bf16.mxu0 0
      %4116 = vmatmul.mubr.bf16.gmra.mrb[0].mxu0 %v3992
      %v4117 = vpop.f32.mrb[0].mxu0
      %v4118 = vadd.f32 0.0, %v4117
      %v4119 = vpop.f32.mrb[0].mxu0
      %v4120 = vadd.f32 0.0, %v4119
      %v4121 = vpop.f32.mrb[0].mxu0
      %v4122 = vadd.f32 0.0, %v4121
      %v4123 = vpop.f32.mrb[0].mxu0
      %v4124 = vadd.f32 0.0, %v4123
      %4125 = vmatprep.mubr.bf16.mxu0 0
      %4126 = vmatmul.mubr.bf16.gmra.mrb[0].mxu0 %v3995
      %v4127 = vpop.f32.mrb[0].mxu0
      %v4128 = vadd.f32 0.0, %v4127
      %v4129 = vpop.f32.mrb[0].mxu0
      %v4130 = vadd.f32 0.0, %v4129
      %v4131 = vpop.f32.mrb[0].mxu0
      %v4132 = vadd.f32 0.0, %v4131
      %v4133 = vpop.f32.mrb[0].mxu0
      %v4134 = vadd.f32 0.0, %v4133
      %4135 = vmatprep.mubr.bf16.mxu0 0
      %4136 = vmatmul.mubr.bf16.gmra.mrb[0].mxu0 %v3998
      %v4137 = vpop.f32.mrb[0].mxu0
      %v4138 = vadd.f32 0.0, %v4137
      %v4139 = vpop.f32.mrb[0].mxu0
      %v4140 = vadd.f32 0.0, %v4139
      %v4141 = vpop.f32.mrb[0].mxu0
      %v4142 = vadd.f32 0.0, %v4141
      %v4143 = vpop.f32.mrb[0].mxu0
      %v4144 = vadd.f32 0.0, %v4143
      %4145 = vdwg.mxu0
      %v4146 = vadd.f32 %v3864, %v4035
      %v4147 = vadd.f32 %v3865, %v4037
      %v4148 = vadd.f32 %v3866, %v4108
      %v4149 = vadd.f32 %v3867, %v4110
      %v4150 = vadd.f32 %v3868, %v4039
      %v4151 = vadd.f32 %v3869, %v4041
      %v4152 = vadd.f32 %v3870, %v4112
      %v4153 = vadd.f32 %v3871, %v4114
      %v4154 = vadd.f32 %v3872, %v4045
      %v4155 = vadd.f32 %v3873, %v4047
      %v4156 = vadd.f32 %v3874, %v4118
      %v4157 = vadd.f32 %v3875, %v4120
      %v4158 = vadd.f32 %v3876, %v4049
      %v4159 = vadd.f32 %v3877, %v4051
      %v4160 = vadd.f32 %v3878, %v4122
      %v4161 = vadd.f32 %v3879, %v4124
      %v4162 = vadd.f32 %v3880, %v4055
      %v4163 = vadd.f32 %v3881, %v4057
      %v4164 = vadd.f32 %v3882, %v4128
      %v4165 = vadd.f32 %v3883, %v4130
      %v4166 = vadd.f32 %v3884, %v4059
      %v4167 = vadd.f32 %v3885, %v4061
      %v4168 = vadd.f32 %v3886, %v4132
      %v4169 = vadd.f32 %v3887, %v4134
      %v4170 = vadd.f32 %v3888, %v4065
      %v4171 = vadd.f32 %v3889, %v4067
      %v4172 = vadd.f32 %v3890, %v4138
      %v4173 = vadd.f32 %v3891, %v4140
      %v4174 = vadd.f32 %v3892, %v4069
      %v4175 = vadd.f32 %v3893, %v4071
      %v4176 = vadd.f32 %v3894, %v4142
      %v4177 = vadd.f32 %v3895, %v4144
      %4178 = vrot.lane.b32.xlu0 %v2243, 112
      %v4179 = vpop.permute.xlu0 %4178
      %4180 = vrot.lane.b32.xlu0 %v2247, 112
      %v4181 = vpop.permute.xlu0 %4180
      %4182 = vrot.lane.b32.xlu0 %v2251, 112
      %v4183 = vpop.permute.xlu0 %4182
      %4184 = vrot.lane.b32.xlu0 %v2255, 112
      %v4185 = vpop.permute.xlu0 %4184
      %4186 = vrot.lane.b32.xlu0 %v2244, 112
      %v4187 = vpop.permute.xlu0 %4186
      %4188 = vrot.lane.b32.xlu0 %v2248, 112
      %v4189 = vpop.permute.xlu0 %4188
      %4190 = vrot.lane.b32.xlu0 %v2252, 112
      %v4191 = vpop.permute.xlu0 %4190
      %4192 = vrot.lane.b32.xlu0 %v2256, 112
      %v4193 = vpop.permute.xlu0 %4192
      %4194 = vrot.lane.b32.xlu0 %v2245, 112
      %v4195 = vpop.permute.xlu0 %4194
      %4196 = vrot.lane.b32.xlu0 %v2249, 112
      %v4197 = vpop.permute.xlu0 %4196
      %4198 = vrot.lane.b32.xlu0 %v2253, 112
      %v4199 = vpop.permute.xlu0 %4198
      %4200 = vrot.lane.b32.xlu0 %v2257, 112
      %v4201 = vpop.permute.xlu0 %4200
      %4202 = vrot.lane.b32.xlu0 %v2246, 112
      %v4203 = vpop.permute.xlu0 %4202
      %4204 = vrot.lane.b32.xlu0 %v2250, 112
      %v4205 = vpop.permute.xlu0 %4204
      %4206 = vrot.lane.b32.xlu0 %v2254, 112
      %v4207 = vpop.permute.xlu0 %4206
      %4208 = vrot.lane.b32.xlu0 %v2258, 112
      %v4209 = vpop.permute.xlu0 %4208
      %v4210 = vsel %vm1398, %v4195, %v4203
      %v4211 = vsel %vm1398, %v4197, %v4205
      %v4212 = vsel %vm1398, %v4199, %v4207
      %v4213 = vsel %vm1398, %v4201, %v4209
      %v4214 = vsel %vm1398, %v4187, %v4195
      %v4215 = vsel %vm1398, %v4189, %v4197
      %v4216 = vsel %vm1398, %v4191, %v4199
      %v4217 = vsel %vm1398, %v4193, %v4201
      %v4218 = vsel %vm1398, %v4179, %v4187
      %v4219 = vsel %vm1398, %v4181, %v4189
      %v4220 = vsel %vm1398, %v4183, %v4191
      %v4221 = vsel %vm1398, %v4185, %v4193
      %v4222 = vsel %vm1398, %v4203, %v4179
      %v4223 = vsel %vm1398, %v4205, %v4181
      %v4224 = vsel %vm1398, %v4207, %v4183
      %v4225 = vsel %vm1398, %v4209, %v4185
      %v4226 = vmul.f32 %v4218, %v1406
      %v4227 = vmul.f32 %v4214, %v1410
      %v4228 = vmul.f32 %v4210, %v1414
      %v4229 = vmul.f32 %v4222, %v1418
      %v4230 = vmul.f32 %v4219, %v1406
      %v4231 = vmul.f32 %v4215, %v1410
      %v4232 = vmul.f32 %v4211, %v1414
      %v4233 = vmul.f32 %v4223, %v1418
      %v4234 = vmul.f32 %v4220, %v1406
      %v4235 = vmul.f32 %v4216, %v1410
      %v4236 = vmul.f32 %v4212, %v1414
      %v4237 = vmul.f32 %v4224, %v1418
      %v4238 = vmul.f32 %v4221, %v1406
      %v4239 = vmul.f32 %v4217, %v1410
      %v4240 = vmul.f32 %v4213, %v1414
      %v4241 = vmul.f32 %v4225, %v1418
      %v4242 = vpack.c.bf16 %v4230, %v4226
      %v4243 = vpack.c.bf16 %v4231, %v4227
      %v4244 = vpack.c.bf16 %v4232, %v4228
      %v4245 = vpack.c.bf16 %v4233, %v4229
      %v4246 = vpack.c.bf16 %v4238, %v4234
      %v4247 = vpack.c.bf16 %v4239, %v4235
      %v4248 = vpack.c.bf16 %v4240, %v4236
      %v4249 = vpack.c.bf16 %v4241, %v4237
      %v4258 = vunpack.c.l.b16 %v2315
      %v4259 = vunpack.c.l.b16 %v2316
      %v4260 = vunpack.c.l.b16 %v2317
      %v4261 = vunpack.c.l.b16 %v2318
      %v4262 = vunpack.c.l.b16 %v2319
      %v4263 = vunpack.c.l.b16 %v2320
      %v4264 = vunpack.c.l.b16 %v2321
      %v4265 = vunpack.c.l.b16 %v2322
      %v4266 = vpack.c.b16 %v4259, %v4258
      %v4267 = vpack.c.b16 %v4261, %v4260
      %v4268 = vpack.c.b16 %v4263, %v4262
      %v4269 = vpack.c.b16 %v4265, %v4264
      %v4271 = vsel %vm2495, %v4266, 0
      %v4274 = vsel %vm2495, %v4267, 0
      %v4277 = vsel %vm2495, %v4268, 0
      %v4280 = vsel %vm2495, %v4269, 0
      %4282 = vmatprep.subr.bf16.mxu0 %v4243
      %4283 = vmatpush1.bf16.msra.mxu0 %v4242
      %4284 = vmatprep.subr.bf16.mxu0 %v4247
      %4285 = vmatpush1.bf16.msra.mxu0 %v4246
      %4286 = vmatprep.subr.bf16.mxu0 0
      %4287 = vmatpush1.bf16.msra.mxu0 0
      %4288 = vmatprep.subr.bf16.mxu0 0
      %4289 = vmatpush1.bf16.msra.mxu0 0
      %4290 = vmatprep.subr.bf16.mxu0 0
      %4291 = vmatpush1.bf16.msra.mxu0 0
      %4292 = vmatprep.subr.bf16.mxu0 0
      %4293 = vmatpush1.bf16.msra.mxu0 0
      %4294 = vmatprep.subr.bf16.mxu0 0
      %4295 = vmatpush1.bf16.msra.mxu0 0
      %4296 = vmatprep.subr.bf16.mxu0 0
      %4297 = vmatpush1.bf16.msra.mxu0 0
      %4298 = vmatprep.subr.bf16.mxu0 0
      %4299 = vmatpush1.bf16.msra.mxu0 0
      %4300 = vmatprep.subr.bf16.mxu0 0
      %4301 = vmatpush1.bf16.msra.mxu0 0
      %4302 = vmatprep.subr.bf16.mxu0 0
      %4303 = vmatpush1.bf16.msra.mxu0 0
      %4304 = vmatprep.subr.bf16.mxu0 0
      %4305 = vmatpush1.bf16.msra.mxu0 0
      %4306 = vmatprep.subr.bf16.mxu0 0
      %4307 = vmatpush1.bf16.msra.mxu0 0
      %4308 = vmatprep.subr.bf16.mxu0 0
      %4309 = vmatpush1.bf16.msra.mxu0 0
      %4310 = vmatprep.subr.bf16.mxu0 0
      %4311 = vmatpush1.bf16.msra.mxu0 0
      %4312 = vmatprep.subr.bf16.mxu0 0
      %4313 = vmatpush1.bf16.msra.mxu0 0
      %4314 = vmatprep.mubr.bf16.mxu0 0
      %4315 = vmatmul.mubr.bf16.gmra.mrb[0].mxu0 %v4271
      %v4316 = vpop.f32.mrb[0].mxu0
      %v4317 = vadd.f32 0.0, %v4316
      %v4318 = vpop.f32.mrb[0].mxu0
      %v4319 = vadd.f32 0.0, %v4318
      %v4320 = vpop.f32.mrb[0].mxu0
      %v4321 = vadd.f32 0.0, %v4320
      %v4322 = vpop.f32.mrb[0].mxu0
      %v4323 = vadd.f32 0.0, %v4322
      %4324 = vmatprep.mubr.bf16.mxu0 0
      %4325 = vmatmul.mubr.bf16.gmra.mrb[0].mxu0 %v4274
      %v4326 = vpop.f32.mrb[0].mxu0
      %v4327 = vadd.f32 0.0, %v4326
      %v4328 = vpop.f32.mrb[0].mxu0
      %v4329 = vadd.f32 0.0, %v4328
      %v4330 = vpop.f32.mrb[0].mxu0
      %v4331 = vadd.f32 0.0, %v4330
      %v4332 = vpop.f32.mrb[0].mxu0
      %v4333 = vadd.f32 0.0, %v4332
      %4334 = vmatprep.mubr.bf16.mxu0 0
      %4335 = vmatmul.mubr.bf16.gmra.mrb[0].mxu0 %v4277
      %v4336 = vpop.f32.mrb[0].mxu0
      %v4337 = vadd.f32 0.0, %v4336
      %v4338 = vpop.f32.mrb[0].mxu0
      %v4339 = vadd.f32 0.0, %v4338
      %v4340 = vpop.f32.mrb[0].mxu0
      %v4341 = vadd.f32 0.0, %v4340
      %v4342 = vpop.f32.mrb[0].mxu0
      %v4343 = vadd.f32 0.0, %v4342
      %4344 = vmatprep.mubr.bf16.mxu0 0
      %4345 = vmatmul.mubr.bf16.gmra.mrb[0].mxu0 %v4280
      %v4346 = vpop.f32.mrb[0].mxu0
      %v4347 = vadd.f32 0.0, %v4346
      %v4348 = vpop.f32.mrb[0].mxu0
      %v4349 = vadd.f32 0.0, %v4348
      %v4350 = vpop.f32.mrb[0].mxu0
      %v4351 = vadd.f32 0.0, %v4350
      %v4352 = vpop.f32.mrb[0].mxu0
      %v4353 = vadd.f32 0.0, %v4352
      %4354 = vdwg.mxu0
      %4355 = vmatprep.subr.bf16.mxu0 %v4245
      %4356 = vmatpush1.bf16.msra.mxu0 %v4244
      %4357 = vmatprep.subr.bf16.mxu0 %v4249
      %4358 = vmatpush1.bf16.msra.mxu0 %v4248
      %4359 = vmatprep.subr.bf16.mxu0 0
      %4360 = vmatpush1.bf16.msra.mxu0 0
      %4361 = vmatprep.subr.bf16.mxu0 0
      %4362 = vmatpush1.bf16.msra.mxu0 0
      %4363 = vmatprep.subr.bf16.mxu0 0
      %4364 = vmatpush1.bf16.msra.mxu0 0
      %4365 = vmatprep.subr.bf16.mxu0 0
      %4366 = vmatpush1.bf16.msra.mxu0 0
      %4367 = vmatprep.subr.bf16.mxu0 0
      %4368 = vmatpush1.bf16.msra.mxu0 0
      %4369 = vmatprep.subr.bf16.mxu0 0
      %4370 = vmatpush1.bf16.msra.mxu0 0
      %4371 = vmatprep.subr.bf16.mxu0 0
      %4372 = vmatpush1.bf16.msra.mxu0 0
      %4373 = vmatprep.subr.bf16.mxu0 0
      %4374 = vmatpush1.bf16.msra.mxu0 0
      %4375 = vmatprep.subr.bf16.mxu0 0
      %4376 = vmatpush1.bf16.msra.mxu0 0
      %4377 = vmatprep.subr.bf16.mxu0 0
      %4378 = vmatpush1.bf16.msra.mxu0 0
      %4379 = vmatprep.subr.bf16.mxu0 0
      %4380 = vmatpush1.bf16.msra.mxu0 0
      %4381 = vmatprep.subr.bf16.mxu0 0
      %4382 = vmatpush1.bf16.msra.mxu0 0
      %4383 = vmatprep.subr.bf16.mxu0 0
      %4384 = vmatpush1.bf16.msra.mxu0 0
      %4385 = vmatprep.subr.bf16.mxu0 0
      %4386 = vmatpush1.bf16.msra.mxu0 0
      %4387 = vmatprep.mubr.bf16.mxu0 0
      %4388 = vmatmul.mubr.bf16.gmra.mrb[0].mxu0 %v4271
      %v4389 = vpop.f32.mrb[0].mxu0
      %v4390 = vadd.f32 0.0, %v4389
      %v4391 = vpop.f32.mrb[0].mxu0
      %v4392 = vadd.f32 0.0, %v4391
      %v4393 = vpop.f32.mrb[0].mxu0
      %v4394 = vadd.f32 0.0, %v4393
      %v4395 = vpop.f32.mrb[0].mxu0
      %v4396 = vadd.f32 0.0, %v4395
      %4397 = vmatprep.mubr.bf16.mxu0 0
      %4398 = vmatmul.mubr.bf16.gmra.mrb[0].mxu0 %v4274
      %v4399 = vpop.f32.mrb[0].mxu0
      %v4400 = vadd.f32 0.0, %v4399
      %v4401 = vpop.f32.mrb[0].mxu0
      %v4402 = vadd.f32 0.0, %v4401
      %v4403 = vpop.f32.mrb[0].mxu0
      %v4404 = vadd.f32 0.0, %v4403
      %v4405 = vpop.f32.mrb[0].mxu0
      %v4406 = vadd.f32 0.0, %v4405
      %4407 = vmatprep.mubr.bf16.mxu0 0
      %4408 = vmatmul.mubr.bf16.gmra.mrb[0].mxu0 %v4277
      %v4409 = vpop.f32.mrb[0].mxu0
      %v4410 = vadd.f32 0.0, %v4409
      %v4411 = vpop.f32.mrb[0].mxu0
      %v4412 = vadd.f32 0.0, %v4411
      %v4413 = vpop.f32.mrb[0].mxu0
      %v4414 = vadd.f32 0.0, %v4413
      %v4415 = vpop.f32.mrb[0].mxu0
      %v4416 = vadd.f32 0.0, %v4415
      %4417 = vmatprep.mubr.bf16.mxu0 0
      %4418 = vmatmul.mubr.bf16.gmra.mrb[0].mxu0 %v4280
      %v4419 = vpop.f32.mrb[0].mxu0
      %v4420 = vadd.f32 0.0, %v4419
      %v4421 = vpop.f32.mrb[0].mxu0
      %v4422 = vadd.f32 0.0, %v4421
      %v4423 = vpop.f32.mrb[0].mxu0
      %v4424 = vadd.f32 0.0, %v4423
      %v4425 = vpop.f32.mrb[0].mxu0
      %v4426 = vadd.f32 0.0, %v4425
      %4427 = vdwg.mxu0
      %v4428 = vadd.f32 %v4146, %v4317
      %v4429 = vadd.f32 %v4147, %v4319
      %v4430 = vadd.f32 %v4148, %v4390
      %v4431 = vadd.f32 %v4149, %v4392
      %v4432 = vadd.f32 %v4150, %v4321
      %v4433 = vadd.f32 %v4151, %v4323
      %v4434 = vadd.f32 %v4152, %v4394
      %v4435 = vadd.f32 %v4153, %v4396
      %v4436 = vadd.f32 %v4154, %v4327
      %v4437 = vadd.f32 %v4155, %v4329
      %v4438 = vadd.f32 %v4156, %v4400
      %v4439 = vadd.f32 %v4157, %v4402
      %v4440 = vadd.f32 %v4158, %v4331
      %v4441 = vadd.f32 %v4159, %v4333
      %v4442 = vadd.f32 %v4160, %v4404
      %v4443 = vadd.f32 %v4161, %v4406
      %v4444 = vadd.f32 %v4162, %v4337
      %v4445 = vadd.f32 %v4163, %v4339
      %v4446 = vadd.f32 %v4164, %v4410
      %v4447 = vadd.f32 %v4165, %v4412
      %v4448 = vadd.f32 %v4166, %v4341
      %v4449 = vadd.f32 %v4167, %v4343
      %v4450 = vadd.f32 %v4168, %v4414
      %v4451 = vadd.f32 %v4169, %v4416
      %v4452 = vadd.f32 %v4170, %v4347
      %v4453 = vadd.f32 %v4171, %v4349
      %v4454 = vadd.f32 %v4172, %v4420
      %v4455 = vadd.f32 %v4173, %v4422
      %v4456 = vadd.f32 %v4174, %v4351
      %v4457 = vadd.f32 %v4175, %v4353
      %v4458 = vadd.f32 %v4176, %v4424
      %v4459 = vadd.f32 %v4177, %v4426
      %4460 = vrot.lane.b32.xlu0 %v2243, 111
      %v4461 = vpop.permute.xlu0 %4460
      %4462 = vrot.lane.b32.xlu0 %v2247, 111
      %v4463 = vpop.permute.xlu0 %4462
      %4464 = vrot.lane.b32.xlu0 %v2251, 111
      %v4465 = vpop.permute.xlu0 %4464
      %4466 = vrot.lane.b32.xlu0 %v2255, 111
      %v4467 = vpop.permute.xlu0 %4466
      %4468 = vrot.lane.b32.xlu0 %v2244, 111
      %v4469 = vpop.permute.xlu0 %4468
      %4470 = vrot.lane.b32.xlu0 %v2248, 111
      %v4471 = vpop.permute.xlu0 %4470
      %4472 = vrot.lane.b32.xlu0 %v2252, 111
      %v4473 = vpop.permute.xlu0 %4472
      %4474 = vrot.lane.b32.xlu0 %v2256, 111
      %v4475 = vpop.permute.xlu0 %4474
      %4476 = vrot.lane.b32.xlu0 %v2245, 111
      %v4477 = vpop.permute.xlu0 %4476
      %4478 = vrot.lane.b32.xlu0 %v2249, 111
      %v4479 = vpop.permute.xlu0 %4478
      %4480 = vrot.lane.b32.xlu0 %v2253, 111
      %v4481 = vpop.permute.xlu0 %4480
      %4482 = vrot.lane.b32.xlu0 %v2257, 111
      %v4483 = vpop.permute.xlu0 %4482
      %4484 = vrot.lane.b32.xlu0 %v2246, 111
      %v4485 = vpop.permute.xlu0 %4484
      %4486 = vrot.lane.b32.xlu0 %v2250, 111
      %v4487 = vpop.permute.xlu0 %4486
      %4488 = vrot.lane.b32.xlu0 %v2254, 111
      %v4489 = vpop.permute.xlu0 %4488
      %4490 = vrot.lane.b32.xlu0 %v2258, 111
      %v4491 = vpop.permute.xlu0 %4490
      %v4492 = vsel %vm1536, %v4477, %v4485
      %v4493 = vsel %vm1536, %v4479, %v4487
      %v4494 = vsel %vm1536, %v4481, %v4489
      %v4495 = vsel %vm1536, %v4483, %v4491
      %v4496 = vsel %vm1536, %v4469, %v4477
      %v4497 = vsel %vm1536, %v4471, %v4479
      %v4498 = vsel %vm1536, %v4473, %v4481
      %v4499 = vsel %vm1536, %v4475, %v4483
      %v4500 = vsel %vm1536, %v4461, %v4469
      %v4501 = vsel %vm1536, %v4463, %v4471
      %v4502 = vsel %vm1536, %v4465, %v4473
      %v4503 = vsel %vm1536, %v4467, %v4475
      %v4504 = vsel %vm1536, %v4485, %v4461
      %v4505 = vsel %vm1536, %v4487, %v4463
      %v4506 = vsel %vm1536, %v4489, %v4465
      %v4507 = vsel %vm1536, %v4491, %v4467
      %v4508 = vmul.f32 %v4500, %v1544
      %v4509 = vmul.f32 %v4496, %v1548
      %v4510 = vmul.f32 %v4492, %v1552
      %v4511 = vmul.f32 %v4504, %v1556
      %v4512 = vmul.f32 %v4501, %v1544
      %v4513 = vmul.f32 %v4497, %v1548
      %v4514 = vmul.f32 %v4493, %v1552
      %v4515 = vmul.f32 %v4505, %v1556
      %v4516 = vmul.f32 %v4502, %v1544
      %v4517 = vmul.f32 %v4498, %v1548
      %v4518 = vmul.f32 %v4494, %v1552
      %v4519 = vmul.f32 %v4506, %v1556
      %v4520 = vmul.f32 %v4503, %v1544
      %v4521 = vmul.f32 %v4499, %v1548
      %v4522 = vmul.f32 %v4495, %v1552
      %v4523 = vmul.f32 %v4507, %v1556
      %v4524 = vpack.c.bf16 %v4512, %v4508
      %v4525 = vpack.c.bf16 %v4513, %v4509
      %v4526 = vpack.c.bf16 %v4514, %v4510
      %v4527 = vpack.c.bf16 %v4515, %v4511
      %v4528 = vpack.c.bf16 %v4520, %v4516
      %v4529 = vpack.c.bf16 %v4521, %v4517
      %v4530 = vpack.c.bf16 %v4522, %v4518
      %v4531 = vpack.c.bf16 %v4523, %v4519
      %v4540 = vunpack.c.l.b16 %v2323
      %v4541 = vunpack.c.l.b16 %v2324
      %v4542 = vunpack.c.l.b16 %v2325
      %v4543 = vunpack.c.l.b16 %v2326
      %v4544 = vunpack.c.l.b16 %v2327
      %v4545 = vunpack.c.l.b16 %v2328
      %v4546 = vunpack.c.l.b16 %v2329
      %v4547 = vunpack.c.l.b16 %v2330
      %v4548 = vpack.c.b16 %v4541, %v4540
      %v4549 = vpack.c.b16 %v4543, %v4542
      %v4550 = vpack.c.b16 %v4545, %v4544
      %v4551 = vpack.c.b16 %v4547, %v4546
      %v4553 = vsel %vm2495, %v4548, 0
      %v4556 = vsel %vm2495, %v4549, 0
      %v4559 = vsel %vm2495, %v4550, 0
      %v4562 = vsel %vm2495, %v4551, 0
      %4564 = vmatprep.subr.bf16.mxu0 %v4525
      %4565 = vmatpush1.bf16.msra.mxu0 %v4524
      %4566 = vmatprep.subr.bf16.mxu0 %v4529
      %4567 = vmatpush1.bf16.msra.mxu0 %v4528
      %4568 = vmatprep.subr.bf16.mxu0 0
      %4569 = vmatpush1.bf16.msra.mxu0 0
      %4570 = vmatprep.subr.bf16.mxu0 0
      %4571 = vmatpush1.bf16.msra.mxu0 0
      %4572 = vmatprep.subr.bf16.mxu0 0
      %4573 = vmatpush1.bf16.msra.mxu0 0
      %4574 = vmatprep.subr.bf16.mxu0 0
      %4575 = vmatpush1.bf16.msra.mxu0 0
      %4576 = vmatprep.subr.bf16.mxu0 0
      %4577 = vmatpush1.bf16.msra.mxu0 0
      %4578 = vmatprep.subr.bf16.mxu0 0
      %4579 = vmatpush1.bf16.msra.mxu0 0
      %4580 = vmatprep.subr.bf16.mxu0 0
      %4581 = vmatpush1.bf16.msra.mxu0 0
      %4582 = vmatprep.subr.bf16.mxu0 0
      %4583 = vmatpush1.bf16.msra.mxu0 0
      %4584 = vmatprep.subr.bf16.mxu0 0
      %4585 = vmatpush1.bf16.msra.mxu0 0
      %4586 = vmatprep.subr.bf16.mxu0 0
      %4587 = vmatpush1.bf16.msra.mxu0 0
      %4588 = vmatprep.subr.bf16.mxu0 0
      %4589 = vmatpush1.bf16.msra.mxu0 0
      %4590 = vmatprep.subr.bf16.mxu0 0
      %4591 = vmatpush1.bf16.msra.mxu0 0
      %4592 = vmatprep.subr.bf16.mxu0 0
      %4593 = vmatpush1.bf16.msra.mxu0 0
      %4594 = vmatprep.subr.bf16.mxu0 0
      %4595 = vmatpush1.bf16.msra.mxu0 0
      %4596 = vmatprep.mubr.bf16.mxu0 0
      %4597 = vmatmul.mubr.bf16.gmra.mrb[0].mxu0 %v4553
      %v4598 = vpop.f32.mrb[0].mxu0
      %v4599 = vadd.f32 0.0, %v4598
      %v4600 = vpop.f32.mrb[0].mxu0
      %v4601 = vadd.f32 0.0, %v4600
      %v4602 = vpop.f32.mrb[0].mxu0
      %v4603 = vadd.f32 0.0, %v4602
      %v4604 = vpop.f32.mrb[0].mxu0
      %v4605 = vadd.f32 0.0, %v4604
      %4606 = vmatprep.mubr.bf16.mxu0 0
      %4607 = vmatmul.mubr.bf16.gmra.mrb[0].mxu0 %v4556
      %v4608 = vpop.f32.mrb[0].mxu0
      %v4609 = vadd.f32 0.0, %v4608
      %v4610 = vpop.f32.mrb[0].mxu0
      %v4611 = vadd.f32 0.0, %v4610
      %v4612 = vpop.f32.mrb[0].mxu0
      %v4613 = vadd.f32 0.0, %v4612
      %v4614 = vpop.f32.mrb[0].mxu0
      %v4615 = vadd.f32 0.0, %v4614
      %4616 = vmatprep.mubr.bf16.mxu0 0
      %4617 = vmatmul.mubr.bf16.gmra.mrb[0].mxu0 %v4559
      %v4618 = vpop.f32.mrb[0].mxu0
      %v4619 = vadd.f32 0.0, %v4618
      %v4620 = vpop.f32.mrb[0].mxu0
      %v4621 = vadd.f32 0.0, %v4620
      %v4622 = vpop.f32.mrb[0].mxu0
      %v4623 = vadd.f32 0.0, %v4622
      %v4624 = vpop.f32.mrb[0].mxu0
      %v4625 = vadd.f32 0.0, %v4624
      %4626 = vmatprep.mubr.bf16.mxu0 0
      %4627 = vmatmul.mubr.bf16.gmra.mrb[0].mxu0 %v4562
      %v4628 = vpop.f32.mrb[0].mxu0
      %v4629 = vadd.f32 0.0, %v4628
      %v4630 = vpop.f32.mrb[0].mxu0
      %v4631 = vadd.f32 0.0, %v4630
      %v4632 = vpop.f32.mrb[0].mxu0
      %v4633 = vadd.f32 0.0, %v4632
      %v4634 = vpop.f32.mrb[0].mxu0
      %v4635 = vadd.f32 0.0, %v4634
      %4636 = vdwg.mxu0
      %4637 = vmatprep.subr.bf16.mxu0 %v4527
      %4638 = vmatpush1.bf16.msra.mxu0 %v4526
      %4639 = vmatprep.subr.bf16.mxu0 %v4531
      %4640 = vmatpush1.bf16.msra.mxu0 %v4530
      %4641 = vmatprep.subr.bf16.mxu0 0
      %4642 = vmatpush1.bf16.msra.mxu0 0
      %4643 = vmatprep.subr.bf16.mxu0 0
      %4644 = vmatpush1.bf16.msra.mxu0 0
      %4645 = vmatprep.subr.bf16.mxu0 0
      %4646 = vmatpush1.bf16.msra.mxu0 0
      %4647 = vmatprep.subr.bf16.mxu0 0
      %4648 = vmatpush1.bf16.msra.mxu0 0
      %4649 = vmatprep.subr.bf16.mxu0 0
      %4650 = vmatpush1.bf16.msra.mxu0 0
      %4651 = vmatprep.subr.bf16.mxu0 0
      %4652 = vmatpush1.bf16.msra.mxu0 0
      %4653 = vmatprep.subr.bf16.mxu0 0
      %4654 = vmatpush1.bf16.msra.mxu0 0
      %4655 = vmatprep.subr.bf16.mxu0 0
      %4656 = vmatpush1.bf16.msra.mxu0 0
      %4657 = vmatprep.subr.bf16.mxu0 0
      %4658 = vmatpush1.bf16.msra.mxu0 0
      %4659 = vmatprep.subr.bf16.mxu0 0
      %4660 = vmatpush1.bf16.msra.mxu0 0
      %4661 = vmatprep.subr.bf16.mxu0 0
      %4662 = vmatpush1.bf16.msra.mxu0 0
      %4663 = vmatprep.subr.bf16.mxu0 0
      %4664 = vmatpush1.bf16.msra.mxu0 0
      %4665 = vmatprep.subr.bf16.mxu0 0
      %4666 = vmatpush1.bf16.msra.mxu0 0
      %4667 = vmatprep.subr.bf16.mxu0 0
      %4668 = vmatpush1.bf16.msra.mxu0 0
      %4669 = vmatprep.mubr.bf16.mxu0 0
      %4670 = vmatmul.mubr.bf16.gmra.mrb[0].mxu0 %v4553
      %v4671 = vpop.f32.mrb[0].mxu0
      %v4672 = vadd.f32 0.0, %v4671
      %v4673 = vpop.f32.mrb[0].mxu0
      %v4674 = vadd.f32 0.0, %v4673
      %v4675 = vpop.f32.mrb[0].mxu0
      %v4676 = vadd.f32 0.0, %v4675
      %v4677 = vpop.f32.mrb[0].mxu0
      %v4678 = vadd.f32 0.0, %v4677
      %4679 = vmatprep.mubr.bf16.mxu0 0
      %4680 = vmatmul.mubr.bf16.gmra.mrb[0].mxu0 %v4556
      %v4681 = vpop.f32.mrb[0].mxu0
      %v4682 = vadd.f32 0.0, %v4681
      %v4683 = vpop.f32.mrb[0].mxu0
      %v4684 = vadd.f32 0.0, %v4683
      %v4685 = vpop.f32.mrb[0].mxu0
      %v4686 = vadd.f32 0.0, %v4685
      %v4687 = vpop.f32.mrb[0].mxu0
      %v4688 = vadd.f32 0.0, %v4687
      %4689 = vmatprep.mubr.bf16.mxu0 0
      %4690 = vmatmul.mubr.bf16.gmra.mrb[0].mxu0 %v4559
      %v4691 = vpop.f32.mrb[0].mxu0
      %v4692 = vadd.f32 0.0, %v4691
      %v4693 = vpop.f32.mrb[0].mxu0
      %v4694 = vadd.f32 0.0, %v4693
      %v4695 = vpop.f32.mrb[0].mxu0
      %v4696 = vadd.f32 0.0, %v4695
      %v4697 = vpop.f32.mrb[0].mxu0
      %v4698 = vadd.f32 0.0, %v4697
      %4699 = vmatprep.mubr.bf16.mxu0 0
      %4700 = vmatmul.mubr.bf16.gmra.mrb[0].mxu0 %v4562
      %v4701 = vpop.f32.mrb[0].mxu0
      %v4702 = vadd.f32 0.0, %v4701
      %v4703 = vpop.f32.mrb[0].mxu0
      %v4704 = vadd.f32 0.0, %v4703
      %v4705 = vpop.f32.mrb[0].mxu0
      %v4706 = vadd.f32 0.0, %v4705
      %v4707 = vpop.f32.mrb[0].mxu0
      %v4708 = vadd.f32 0.0, %v4707
      %4709 = vdwg.mxu0
      %v4710 = vadd.f32 %v4428, %v4599
      %v4711 = vadd.f32 %v4429, %v4601
      %v4712 = vadd.f32 %v4430, %v4672
      %v4713 = vadd.f32 %v4431, %v4674
      %v4714 = vadd.f32 %v4432, %v4603
      %v4715 = vadd.f32 %v4433, %v4605
      %v4716 = vadd.f32 %v4434, %v4676
      %v4717 = vadd.f32 %v4435, %v4678
      %v4718 = vadd.f32 %v4436, %v4609
      %v4719 = vadd.f32 %v4437, %v4611
      %v4720 = vadd.f32 %v4438, %v4682
      %v4721 = vadd.f32 %v4439, %v4684
      %v4722 = vadd.f32 %v4440, %v4613
      %v4723 = vadd.f32 %v4441, %v4615
      %v4724 = vadd.f32 %v4442, %v4686
      %v4725 = vadd.f32 %v4443, %v4688
      %v4726 = vadd.f32 %v4444, %v4619
      %v4727 = vadd.f32 %v4445, %v4621
      %v4728 = vadd.f32 %v4446, %v4692
      %v4729 = vadd.f32 %v4447, %v4694
      %v4730 = vadd.f32 %v4448, %v4623
      %v4731 = vadd.f32 %v4449, %v4625
      %v4732 = vadd.f32 %v4450, %v4696
      %v4733 = vadd.f32 %v4451, %v4698
      %v4734 = vadd.f32 %v4452, %v4629
      %v4735 = vadd.f32 %v4453, %v4631
      %v4736 = vadd.f32 %v4454, %v4702
      %v4737 = vadd.f32 %v4455, %v4704
      %v4738 = vadd.f32 %v4456, %v4633
      %v4739 = vadd.f32 %v4457, %v4635
      %v4740 = vadd.f32 %v4458, %v4706
      %v4741 = vadd.f32 %v4459, %v4708
      %v4742 = vld [vmem:[%s10] sm:$0xff]
      %v4743 = vld [vmem:[%s10 + $0x8] sm:$0xff]
      %v4744 = vld [vmem:[%s10 + $0x10] sm:$0xff]
      %v4745 = vld [vmem:[%s10 + $0x18] sm:$0xff]
      %v4746 = vld [vmem:[%s10 + $0x20] sm:$0xff]
      %v4747 = vld [vmem:[%s10 + $0x28] sm:$0xff]
      %v4748 = vld [vmem:[%s10 + $0x30] sm:$0xff]
      %v4749 = vld [vmem:[%s10 + $0x38] sm:$0xff]
      %4751 = vset.pattern.permute.xlu0 0
      %4752 = vperm.xlu0 %4751, %v4742
      %v4753 = vpop.permute.xlu0 %4752
      %4756 = vset.pattern.permute.xlu0 0
      %4757 = vperm.xlu0 %4756, %v4743
      %v4758 = vpop.permute.xlu0 %4757
      %4761 = vset.pattern.permute.xlu0 0
      %4762 = vperm.xlu0 %4761, %v4744
      %v4763 = vpop.permute.xlu0 %4762
      %4766 = vset.pattern.permute.xlu0 0
      %4767 = vperm.xlu0 %4766, %v4745
      %v4768 = vpop.permute.xlu0 %4767
      %4771 = vset.pattern.permute.xlu0 0
      %4772 = vperm.xlu0 %4771, %v4746
      %v4773 = vpop.permute.xlu0 %4772
      %4776 = vset.pattern.permute.xlu0 0
      %4777 = vperm.xlu0 %4776, %v4747
      %v4778 = vpop.permute.xlu0 %4777
      %4781 = vset.pattern.permute.xlu0 0
      %4782 = vperm.xlu0 %4781, %v4748
      %v4783 = vpop.permute.xlu0 %4782
      %4786 = vset.pattern.permute.xlu0 0
      %4787 = vperm.xlu0 %4786, %v4749
      %v4788 = vpop.permute.xlu0 %4787
      %v4790 = vadd.f32 %v4710, %v4753
      %v4791 = vadd.f32 %v4711, %v4753
      %v4792 = vadd.f32 %v4712, %v4753
      %v4793 = vadd.f32 %v4713, %v4753
      %v4794 = vadd.f32 %v4714, %v4758
      %v4795 = vadd.f32 %v4715, %v4758
      %v4796 = vadd.f32 %v4716, %v4758
      %v4797 = vadd.f32 %v4717, %v4758
      %v4798 = vadd.f32 %v4718, %v4763
      %v4799 = vadd.f32 %v4719, %v4763
      %v4800 = vadd.f32 %v4720, %v4763
      %v4801 = vadd.f32 %v4721, %v4763
      %v4802 = vadd.f32 %v4722, %v4768
      %v4803 = vadd.f32 %v4723, %v4768
      %v4804 = vadd.f32 %v4724, %v4768
      %v4805 = vadd.f32 %v4725, %v4768
      %v4806 = vadd.f32 %v4726, %v4773
      %v4807 = vadd.f32 %v4727, %v4773
      %v4808 = vadd.f32 %v4728, %v4773
      %v4809 = vadd.f32 %v4729, %v4773
      %v4810 = vadd.f32 %v4730, %v4778
      %v4811 = vadd.f32 %v4731, %v4778
      %v4812 = vadd.f32 %v4732, %v4778
      %v4813 = vadd.f32 %v4733, %v4778
      %v4814 = vadd.f32 %v4734, %v4783
      %v4815 = vadd.f32 %v4735, %v4783
      %v4816 = vadd.f32 %v4736, %v4783
      %v4817 = vadd.f32 %v4737, %v4783
      %v4818 = vadd.f32 %v4738, %v4788
      %v4819 = vadd.f32 %v4739, %v4788
      %v4820 = vadd.f32 %v4740, %v4788
      %v4821 = vadd.f32 %v4741, %v4788
      %v4822 = vmax.f32 %v4790, 0.0
      %v4823 = vmax.f32 %v4791, 0.0
      %v4824 = vmax.f32 %v4792, 0.0
      %v4825 = vmax.f32 %v4793, 0.0
      %v4826 = vmax.f32 %v4794, 0.0
      %v4827 = vmax.f32 %v4795, 0.0
      %v4828 = vmax.f32 %v4796, 0.0
      %v4829 = vmax.f32 %v4797, 0.0
      %v4830 = vmax.f32 %v4798, 0.0
      %v4831 = vmax.f32 %v4799, 0.0
      %v4832 = vmax.f32 %v4800, 0.0
      %v4833 = vmax.f32 %v4801, 0.0
      %v4834 = vmax.f32 %v4802, 0.0
      %v4835 = vmax.f32 %v4803, 0.0
      %v4836 = vmax.f32 %v4804, 0.0
      %v4837 = vmax.f32 %v4805, 0.0
      %v4838 = vmax.f32 %v4806, 0.0
      %v4839 = vmax.f32 %v4807, 0.0
      %v4840 = vmax.f32 %v4808, 0.0
      %v4841 = vmax.f32 %v4809, 0.0
      %v4842 = vmax.f32 %v4810, 0.0
      %v4843 = vmax.f32 %v4811, 0.0
      %v4844 = vmax.f32 %v4812, 0.0
      %v4845 = vmax.f32 %v4813, 0.0
      %v4846 = vmax.f32 %v4814, 0.0
      %v4847 = vmax.f32 %v4815, 0.0
      %v4848 = vmax.f32 %v4816, 0.0
      %v4849 = vmax.f32 %v4817, 0.0
      %v4850 = vmax.f32 %v4818, 0.0
      %v4851 = vmax.f32 %v4819, 0.0
      %v4852 = vmax.f32 %v4820, 0.0
      %v4853 = vmax.f32 %v4821, 0.0
      %v4854 = vadd.f32 %v4822, %v4823
      %4855 = vadd.xlane.f32.xlu0 %v4854
      %v4856 = vpop.xlane.xlu0 %4855
      %v4857 = vadd.f32 %v4826, %v4827
      %4858 = vadd.xlane.f32.xlu0 %v4857
      %v4859 = vpop.xlane.xlu0 %4858
      %v4860 = vadd.f32 %v4830, %v4831
      %4861 = vadd.xlane.f32.xlu0 %v4860
      %v4862 = vpop.xlane.xlu0 %4861
      %v4863 = vadd.f32 %v4834, %v4835
      %4864 = vadd.xlane.f32.xlu0 %v4863
      %v4865 = vpop.xlane.xlu0 %4864
      %v4866 = vadd.f32 %v4838, %v4839
      %4867 = vadd.xlane.f32.xlu0 %v4866
      %v4868 = vpop.xlane.xlu0 %4867
      %v4869 = vadd.f32 %v4842, %v4843
      %4870 = vadd.xlane.f32.xlu0 %v4869
      %v4871 = vpop.xlane.xlu0 %4870
      %v4872 = vadd.f32 %v4846, %v4847
      %4873 = vadd.xlane.f32.xlu0 %v4872
      %v4874 = vpop.xlane.xlu0 %4873
      %v4875 = vadd.f32 %v4850, %v4851
      %4876 = vadd.xlane.f32.xlu0 %v4875
      %v4877 = vpop.xlane.xlu0 %4876
      %v4878 = vrcp.pop 256.0
      %v4879 = vmul.f32 %v4856, %v4878
      %v4880 = vmul.f32 %v4859, %v4878
      %v4881 = vmul.f32 %v4862, %v4878
      %v4882 = vmul.f32 %v4865, %v4878
      %v4883 = vmul.f32 %v4868, %v4878
      %v4884 = vmul.f32 %v4871, %v4878
      %v4885 = vmul.f32 %v4874, %v4878
      %v4886 = vmul.f32 %v4877, %v4878
      %v4887 = vadd.f32 %v4824, %v4825
      %4888 = vadd.xlane.f32.xlu0 %v4887
      %v4889 = vpop.xlane.xlu0 %4888
      %v4890 = vadd.f32 %v4828, %v4829
      %4891 = vadd.xlane.f32.xlu0 %v4890
      %v4892 = vpop.xlane.xlu0 %4891
      %v4893 = vadd.f32 %v4832, %v4833
      %4894 = vadd.xlane.f32.xlu0 %v4893
      %v4895 = vpop.xlane.xlu0 %4894
      %v4896 = vadd.f32 %v4836, %v4837
      %4897 = vadd.xlane.f32.xlu0 %v4896
      %v4898 = vpop.xlane.xlu0 %4897
      %v4899 = vadd.f32 %v4840, %v4841
      %4900 = vadd.xlane.f32.xlu0 %v4899
      %v4901 = vpop.xlane.xlu0 %4900
      %v4902 = vadd.f32 %v4844, %v4845
      %4903 = vadd.xlane.f32.xlu0 %v4902
      %v4904 = vpop.xlane.xlu0 %4903
      %v4905 = vadd.f32 %v4848, %v4849
      %4906 = vadd.xlane.f32.xlu0 %v4905
      %v4907 = vpop.xlane.xlu0 %4906
      %v4908 = vadd.f32 %v4852, %v4853
      %4909 = vadd.xlane.f32.xlu0 %v4908
      %v4910 = vpop.xlane.xlu0 %4909
      %v4911 = vmul.f32 %v4889, %v4878
      %v4912 = vmul.f32 %v4892, %v4878
      %v4913 = vmul.f32 %v4895, %v4878
      %v4914 = vmul.f32 %v4898, %v4878
      %v4915 = vmul.f32 %v4901, %v4878
      %v4916 = vmul.f32 %v4904, %v4878
      %v4917 = vmul.f32 %v4907, %v4878
      %v4918 = vmul.f32 %v4910, %v4878
      %vm4919 = vcmask 7168
      %v4920 = vsel %vm4919, %v4879, %v4911
      %v4921 = vsel %vm4919, %v4880, %v4912
      %v4922 = vsel %vm4919, %v4881, %v4913
      %v4923 = vsel %vm4919, %v4882, %v4914
      %v4924 = vsel %vm4919, %v4883, %v4915
      %v4925 = vsel %vm4919, %v4884, %v4916
      %v4926 = vsel %vm4919, %v4885, %v4917
      %v4927 = vsel %vm4919, %v4886, %v4918
      %v4928 = vsel %vm1729, %v4920, 0.0
      %v4929 = vsel %vm1729, %v4921, 0.0
      %v4930 = vsel %vm1729, %v4922, 0.0
      %v4931 = vsel %vm1729, %v4923, 0.0
      %v4932 = vsel %vm1729, %v4924, 0.0
      %v4933 = vsel %vm1729, %v4925, 0.0
      %v4934 = vsel %vm1729, %v4926, 0.0
      %v4935 = vsel %vm1729, %v4927, 0.0
      %4936 = vxpose.xlu0.b32.start [1/16] %v4928, 128
      %4937 = vxpose.xlu0.b32.cont [2/16] %v4929, 128
      %4938 = vxpose.xlu0.b32.cont [3/16] %v4930, 128
      %4939 = vxpose.xlu0.b32.cont [4/16] %v4931, 128
      %4940 = vxpose.xlu0.b32.cont [5/16] %v4932, 128
      %4941 = vxpose.xlu0.b32.cont [6/16] %v4933, 128
      %4942 = vxpose.xlu0.b32.cont [7/16] %v4934, 128
      %4943 = vxpose.xlu0.b32.cont [8/16] %v4935, 128
      %4944 = vxpose.xlu0.b32.cont [9/16] 0.0, 128
      %4945 = vxpose.xlu0.b32.cont [10/16] 0.0, 128
      %4946 = vxpose.xlu0.b32.cont [11/16] 0.0, 128
      %4947 = vxpose.xlu0.b32.cont [12/16] 0.0, 128
      %4948 = vxpose.xlu0.b32.cont [13/16] 0.0, 128
      %4949 = vxpose.xlu0.b32.cont [14/16] 0.0, 128
      %4950 = vxpose.xlu0.b32.cont [15/16] 0.0, 128
      %4951 = vxpose.xlu0.b32.end [16/16] 0.0, 128
      %v4952 = vpop.trf.xlu0
      %v4953 = vpop.trf.xlu0
      %v4954 = vpop.trf.xlu0
      %v4955 = vpop.trf.xlu0
      %v4956 = vpop.trf.xlu0
      %v4957 = vpop.trf.xlu0
      %v4958 = vpop.trf.xlu0
      %v4959 = vpop.trf.xlu0
      %v4960 = vpop.trf.xlu0
      %v4961 = vpop.trf.xlu0
      %v4962 = vpop.trf.xlu0
      %v4963 = vpop.trf.xlu0
      %v4964 = vpop.trf.xlu0
      %v4965 = vpop.trf.xlu0
      %v4966 = vpop.trf.xlu0
      %v4967 = vpop.trf.xlu0
      %v4968 = vld [vmem:[%s11] sm:$0xff]
      %v4969 = vld [vmem:[%s11 + $0x8] sm:$0xff]
      %v4970 = vld [vmem:[%s11 + $0x10] sm:$0xff]
      %v4971 = vld [vmem:[%s11 + $0x18] sm:$0xff]
      %v4972 = vld [vmem:[%s11 + $0x20] sm:$0xff]
      %v4973 = vld [vmem:[%s11 + $0x28] sm:$0xff]
      %v4974 = vld [vmem:[%s11 + $0x30] sm:$0xff]
      %v4975 = vld [vmem:[%s11 + $0x38] sm:$0xff]
      %v4976 = vld [vmem:[%s12] sm:$0x1]
      %v4978 = vlaneseq
      %v4979 = vshrl.u32 %v4978, 7
      %v4980 = vsub.s32 0, %v4979
      %v4981 = vrot.slane %v4976, %v4980
      %vm4983 = vcmask 523264
      %v4985 = vsel %vm4983, %v4952, 0
      %4987 = vmatprep.subr.mxu0 0.0
      %4988 = vmatpush1.msra.mxu0 %v4968
      %4989 = vmatprep.subr.mxu0 0.0
      %4990 = vmatpush1.msra.mxu0 %v4969
      %4991 = vmatprep.subr.mxu0 0.0
      %4992 = vmatpush1.msra.mxu0 %v4970
      %4993 = vmatprep.subr.mxu0 0.0
      %4994 = vmatpush1.msra.mxu0 %v4971
      %4995 = vmatprep.subr.mxu0 0.0
      %4996 = vmatpush1.msra.mxu0 %v4972
      %4997 = vmatprep.subr.mxu0 0.0
      %4998 = vmatpush1.msra.mxu0 %v4973
      %4999 = vmatprep.subr.mxu0 0.0
      %5000 = vmatpush1.msra.mxu0 %v4974
      %5001 = vmatprep.subr.mxu0 0.0
      %5002 = vmatpush1.msra.mxu0 %v4975
      %5003 = vmatprep.subr.mxu0 0.0
      %5004 = vmatpush1.msra.mxu0 0.0
      %5005 = vmatprep.subr.mxu0 0.0
      %5006 = vmatpush1.msra.mxu0 0.0
      %5007 = vmatprep.subr.mxu0 0.0
      %5008 = vmatpush1.msra.mxu0 0.0
      %5009 = vmatprep.subr.mxu0 0.0
      %5010 = vmatpush1.msra.mxu0 0.0
      %5011 = vmatprep.subr.mxu0 0.0
      %5012 = vmatpush1.msra.mxu0 0.0
      %5013 = vmatprep.subr.mxu0 0.0
      %5014 = vmatpush1.msra.mxu0 0.0
      %5015 = vmatprep.subr.mxu0 0.0
      %5016 = vmatpush1.msra.mxu0 0.0
      %5017 = vmatprep.subr.mxu0 0.0
      %5018 = vmatpush1.msra.mxu0 0.0
      %5019 = vmatprep.subr.mxu0 0.0
      %5020 = vmatpush1.msra.mxu0 0.0
      %5021 = vmatprep.subr.mxu0 0.0
      %5022 = vmatpush1.msra.mxu0 0.0
      %5023 = vmatprep.subr.mxu0 0.0
      %5024 = vmatpush1.msra.mxu0 0.0
      %5025 = vmatprep.subr.mxu0 0.0
      %5026 = vmatpush1.msra.mxu0 0.0
      %5027 = vmatprep.subr.mxu0 0.0
      %5028 = vmatpush1.msra.mxu0 0.0
      %5029 = vmatprep.subr.mxu0 0.0
      %5030 = vmatpush1.msra.mxu0 0.0
      %5031 = vmatprep.subr.mxu0 0.0
      %5032 = vmatpush1.msra.mxu0 0.0
      %5033 = vmatprep.subr.mxu0 0.0
      %5034 = vmatpush1.msra.mxu0 0.0
      %5035 = vmatprep.subr.mxu0 0.0
      %5036 = vmatpush1.msra.mxu0 0.0
      %5037 = vmatprep.subr.mxu0 0.0
      %5038 = vmatpush1.msra.mxu0 0.0
      %5039 = vmatprep.subr.mxu0 0.0
      %5040 = vmatpush1.msra.mxu0 0.0
      %5041 = vmatprep.subr.mxu0 0.0
      %5042 = vmatpush1.msra.mxu0 0.0
      %5043 = vmatprep.subr.mxu0 0.0
      %5044 = vmatpush1.msra.mxu0 0.0
      %5045 = vmatprep.subr.mxu0 0.0
      %5046 = vmatpush1.msra.mxu0 0.0
      %5047 = vmatprep.subr.mxu0 0.0
      %5048 = vmatpush1.msra.mxu0 0.0
      %5049 = vmatprep.subr.mxu0 0.0
      %5050 = vmatpush1.msra.mxu0 0.0
      %5051 = vmatprep.mubr.f32.mxu0 0.0
      %5052 = vmatmul.mubr.f32.gmra.mrb[0].mxu0 %v4985
      %v5053 = vpop.f32.mrb[0].mxu0
      %v5054 = vadd.f32 %v4981, %v5053
      %v5055 = vpop.f32.mrb[0].mxu0
      %5056 = vdwg.mxu0
      %5057 = vst [vmem:[%s438] sm:$0xff] %v5054
      %p5058 = scmp.lt.s32.totalorder %s24, 1
      %s5059 = scalar_select %p5058, %s24, 1
      %s5060 = smul.addr %s5059, 8
      %s5061 = scalar_lea.vmem %s13, %s5060
      // Predicated region
      $region73: #{vonet_forward.1} parent=71 // pred_check
        %p5062 = pneg %p320
      $region74: #{vonet_forward.1} parent=71 // pred_check_branch
        %5064 = sbr.rel (%p5062) target = $region76
      $region75: #{vonet_forward.1} parent=71 // pred_region
        _
      $region76: #{vonet_forward.1} parent=71 // pred_fallthru
        _
    $region72: #{vonet_forward.1} parent=5 // pred_fallthru
      _
    %p5065 = scmp.le.s32.totalorder 2, %s19
    // Predicated region
    $region77: #{vonet_forward.1} parent=5 // pred_check
      %p5066 = pneg %p5065
    $region78: #{vonet_forward.1} parent=5 // pred_check_branch
      %5068 = sbr.rel (%p5066) target = $region80
    $region79: #{vonet_forward.1} parent=5 // pred_region
      %s5069 = ssub.s32 %s19, 2
      // Predicated region
      $region81: #{vonet_forward.1} parent=79 // pred_check
        %p5070 = pneg %p326
      $region82: #{vonet_forward.1} parent=79 // pred_check_branch
        %5072 = sbr.rel (%p5070) target = $region84
      $region83: #{vonet_forward.1} parent=79 // pred_region
        %p5073 = scmp.lt.s32.totalorder %s25, 1
        %s5074 = scalar_select %p5073, %s25, 1
        %s5075 = smul.addr %s5074, 8
        %s5076 = scalar_lea.vmem %s13, %s5075
      $region84: #{vonet_forward.1} parent=79 // pred_fallthru
        _
    $region80: #{vonet_forward.1} parent=5 // pred_fallthru
      _
  $region6: #{vonet_forward.1} parent=0 // loop_footer
    %s23 = sadd.s32 1, %s19
  $region7: #{vonet_forward.1} parent=0 // loop_footer_branch
    %18 = sbr.rel target = $region3
  $region8: #{vonet_forward.1} parent=0 // loop_exit
    _

</llo_original>
